<compile_context>
chip_gen: v7x
topology: tpu7x:2x2x1
jax: 0.10.0
libtpu: 0.0.40
codegen_flags: <defaults>
</compile_context>

<pallas_src>
import jax
import jax.numpy as jnp
from jax.experimental import pallas as pl
from jax.experimental.pallas import tpu as pltpu

VOCAB = 50257          # GPT-2 vocab size, matches nn.Linear(50257, num_classes)
NUM_CLASSES = 2
HIDDEN = 32            # small synthetic hidden size for the transformer stub
VOCAB_TILE = 6400      # vocab tile, multiple of 128 (8 tiles cover 50257 with 1.9% pad)


def sentiment_head_kernel(hs_ref, wt_ref, b_ref, out_ref, acc_ref):
    """One (batch row, vocab tile) grid step.

    hs_ref : (1, S, TV) bf16  vocab tile of one batch row's token logits
    wt_ref : (TV, C)    bf16  matching tile of the classifier weight (pre-transposed)
    b_ref  : (1, C)     f32   classifier bias
    out_ref: (1, 1, C)  f32   final logits for this batch row
    acc_ref: (S, C)     f32   per-token partial-dot accumulator (VMEM scratch)
    """
    k = pl.program_id(1)

    @pl.when(k == 0)
    def _init():
        acc_ref[...] = jnp.zeros_like(acc_ref)

    # MXU contraction over this vocab tile: (S, TV) @ (TV, C) -> (S, C), f32 accumulate.
    acc_ref[...] += jnp.dot(hs_ref[0], wt_ref[...],
                            preferred_element_type=jnp.float32)

    @pl.when(k == pl.num_programs(1) - 1)
    def _finalize():
        # Tiny sublane mean over the sequence + bias add, all in f32 on the VPU.
        pooled = jnp.mean(acc_ref[...], axis=0, keepdims=True)      # (1, C)
        out_ref[...] = (pooled + b_ref[...])[None]                  # (1, 1, C)


def sentiment_head(hidden_states, clf_w, clf_b, *, tv=VOCAB_TILE):
    """mean(dim=1) + Linear(V, C) over [B, S, V] logits as one pipelined Pallas kernel."""
    B, S, V = hidden_states.shape
    C = clf_w.shape[0]
    n_v = pl.cdiv(V, tv)
    v_pad = n_v * tv
    pad = v_pad - V

    # bf16 on the DMA/MXU path halves HBM bytes of the (B, S, V) stream; zero-pad vocab.
    hs = jnp.pad(hidden_states.astype(jnp.bfloat16), ((0, 0), (0, 0), (0, pad)))
    wt = jnp.pad(clf_w.astype(jnp.bfloat16).T, ((0, pad), (0, 0)))   # (V_pad, C)
    bias = clf_b.reshape(1, C).astype(jnp.float32)

    out = pl.pallas_call(
        sentiment_head_kernel,
        out_shape=jax.ShapeDtypeStruct((B, 1, C), jnp.float32),
        grid_spec=pltpu.PrefetchScalarGridSpec(
            num_scalar_prefetch=0,
            grid=(B, n_v),                                   # batch parallel, vocab reduction
            in_specs=[
                pl.BlockSpec((1, S, tv), lambda b, k: (b, 0, k)),
                pl.BlockSpec((tv, C), lambda b, k: (k, 0)),
                pl.BlockSpec((1, C), lambda b, k: (0, 0)),
            ],
            out_specs=pl.BlockSpec((1, 1, C), lambda b, k: (b, 0, 0)),
            scratch_shapes=[pltpu.VMEM((S, C), jnp.float32)],
        ),
        compiler_params=pltpu.CompilerParams(
            dimension_semantics=("parallel", "arbitrary")),
    )(hs, wt, bias)
    return out.reshape(B, C)


def toy_transformer(wte, input_ids):
    # TODO(synk): the external GPT-2 `transformer` module is supplied to
    # SentimentClassifier.__init__ and is not defined in the reference; a deterministic
    # embedding + tied LM head stands in so the head kernel sees [B, S, VOCAB] per-token
    # logits as GPT2LMHeadModel would emit.  (In production one would fold the tied LM
    # head into the classifier, W_comb = clf_w @ wte, and never materialize [B, S, 50257].)
    h = wte[input_ids]                  # (B, S, H)
    return h @ wte.T                    # (B, S, VOCAB)


if __name__ == "__main__":
    key = jax.random.PRNGKey(0)
    k1, k2, k3, k4 = jax.random.split(key, 4)

    B, S = 2, 8
    input_ids = jax.random.randint(k1, (B, S), 0, VOCAB, dtype=jnp.int32)
    # attention_mask is a forward() argument but is never used there; kept for parity.
    attention_mask = jnp.ones((B, S), dtype=jnp.int32)

    # Deterministic synthetic parameters (shapes from the module's __init__).
    wte = jax.random.normal(k2, (VOCAB, HIDDEN), dtype=jnp.float32) * 0.02
    clf_w = jax.random.normal(k3, (NUM_CLASSES, VOCAB), dtype=jnp.float32) * 0.01
    clf_b = jax.random.normal(k4, (NUM_CLASSES,), dtype=jnp.float32) * 0.01

    # "transformer(input_ids)" -> [B, S, VOCAB]
    outputs = toy_transformer(wte, input_ids)

    # Pallas kernel: mean over seq + linear classifier.
    logits = sentiment_head(outputs, clf_w, clf_b)
    logits = jax.block_until_ready(logits)

    # Plain-JAX reference using the same bf16-quantized inputs, math in f32.
    hs_q = outputs.astype(jnp.bfloat16).astype(jnp.float32)
    w_q = clf_w.astype(jnp.bfloat16).astype(jnp.float32)
    ref = hs_q.mean(axis=1) @ w_q.T + clf_b

    assert logits.shape == (B, NUM_CLASSES)
    assert jnp.allclose(logits, ref, atol=1e-3, rtol=1e-3), (logits, ref)

    print("KERNEL_OK")
</pallas_src>

<mosaic_0001>
module attributes {stable_mosaic.version = 11 : i64} {
  func.func @sentiment_head_kernel(%arg0: i32, %arg1: i32, %arg2: memref<1x8x6400xbf16, #tpu.memory_space<vmem>>, %arg3: memref<6400x2xbf16, #tpu.memory_space<vmem>>, %arg4: memref<1x2xf32, #tpu.memory_space<vmem>>, %arg5: memref<1x1x2xf32, #tpu.memory_space<vmem>>, %arg6: memref<8x2xf32, #tpu.memory_space<vmem>>) attributes {dimension_semantics = [#tpu.dimension_semantics<parallel>, #tpu.dimension_semantics<arbitrary>], iteration_bounds = array<i64: 2, 8>, scalar_prefetch = 0 : i64, scratch_operands = 1 : i64, tpu.core_type = #tpu.core_type<tc>, window_params = [{transform_indices = @transform_0, window_bounds = array<i64: 1, 8, 6400>}, {transform_indices = @transform_1, window_bounds = array<i64: 6400, 2>}, {pipeline_mode = #tpu.pipeline_mode<synchronous>, transform_indices = @transform_2, window_bounds = array<i64: 1, 2>}, {transform_indices = @transform_3, window_bounds = array<i64: 1, 1, 2>}]} {
    %c0_i32 = arith.constant 0 : i32
    %0 = arith.cmpi eq, %arg1, %c0_i32 : i32
    %1 = arith.extui %0 : i1 to i32
    %c0_i32_0 = arith.constant 0 : i32
    %2 = arith.cmpi ne, %1, %c0_i32_0 : i32
    scf.if %2 {
      %cst_10 = arith.constant 0.000000e+00 : f32
      %13 = vector.broadcast %cst_10 : f32 to vector<8x2xf32>
      %c0_11 = arith.constant 0 : index
      %c0_12 = arith.constant 0 : index
      %14 = vector.load %arg6[%c0_11, %c0_12] : memref<8x2xf32, #tpu.memory_space<vmem>>, vector<8x2xf32>
      tpu.vector_store %arg6[%c0_11, %c0_12], %13 {strides = array<i32>} : memref<8x2xf32, #tpu.memory_space<vmem>>, vector<8x2xf32>,
    } else {
    }
    %c0 = arith.constant 0 : index
    %c0_1 = arith.constant 0 : index
    %3 = vector.load %arg6[%c0, %c0_1] : memref<8x2xf32, #tpu.memory_space<vmem>>, vector<8x2xf32>
    %c0_2 = arith.constant 0 : index
    %c0_3 = arith.constant 0 : index
    %c0_4 = arith.constant 0 : index
    %4 = vector.load %arg2[%c0_2, %c0_3, %c0_4] : memref<1x8x6400xbf16, #tpu.memory_space<vmem>>, vector<1x8x6400xbf16>
    %5 = vector.shape_cast %4 : vector<1x8x6400xbf16> to vector<8x6400xbf16>
    %c0_5 = arith.constant 0 : index
    %c0_6 = arith.constant 0 : index
    %6 = vector.load %arg3[%c0_5, %c0_6] : memref<6400x2xbf16, #tpu.memory_space<vmem>>, vector<6400x2xbf16>
    %cst = arith.constant dense<0.000000e+00> : vector<8x2xf32>
    %7 = tpu.matmul %5, %6, %cst {dimension_numbers = #tpu.dot_dimension_numbers<[1], [0], [0], [1], [0, 0, 1, 1], [], []>} : vector<8x6400xbf16>, vector<6400x2xbf16>, vector<8x2xf32> -> vector<8x2xf32>
    %8 = arith.addf %3, %7 : vector<8x2xf32>
    %c0_7 = arith.constant 0 : index
    %c0_8 = arith.constant 0 : index
    %9 = vector.load %arg6[%c0_7, %c0_8] : memref<8x2xf32, #tpu.memory_space<vmem>>, vector<8x2xf32>
    tpu.vector_store %arg6[%c0_7, %c0_8], %8 {strides = array<i32>} : memref<8x2xf32, #tpu.memory_space<vmem>>, vector<8x2xf32>,
    %c7_i32 = arith.constant 7 : i32
    %10 = arith.cmpi eq, %arg1, %c7_i32 : i32
    %11 = arith.extui %10 : i1 to i32
    %c0_i32_9 = arith.constant 0 : i32
    %12 = arith.cmpi ne, %11, %c0_i32_9 : i32
    scf.if %12 {
      %c0_10 = arith.constant 0 : index
      %c0_11 = arith.constant 0 : index
      %13 = vector.load %arg6[%c0_10, %c0_11] : memref<8x2xf32, #tpu.memory_space<vmem>>, vector<8x2xf32>
      %cst_12 = arith.constant dense<0.000000e+00> : vector<2xf32>
      %14 = vector.multi_reduction <add>, %13, %cst_12 [0] : vector<8x2xf32> to vector<2xf32>
      %15 = vector.shape_cast %14 : vector<2xf32> to vector<1x2xf32>
      %cst_13 = arith.constant 8.000000e+00 : f32
      %16 = vector.broadcast %cst_13 : f32 to vector<1x2xf32>
      %17 = arith.divf %15, %16 : vector<1x2xf32>
      %c0_14 = arith.constant 0 : index
      %c0_15 = arith.constant 0 : index
      %18 = vector.load %arg4[%c0_14, %c0_15] : memref<1x2xf32, #tpu.memory_space<vmem>>, vector<1x2xf32>
      %19 = arith.addf %17, %18 : vector<1x2xf32>
      %20 = vector.shape_cast %19 : vector<1x2xf32> to vector<1x1x2xf32>
      %c0_16 = arith.constant 0 : index
      %c0_17 = arith.constant 0 : index
      %c0_18 = arith.constant 0 : index
      %21 = vector.load %arg5[%c0_16, %c0_17, %c0_18] : memref<1x1x2xf32, #tpu.memory_space<vmem>>, vector<1x1x2xf32>
      tpu.vector_store %arg5[%c0_16, %c0_17, %c0_18], %20 {strides = array<i32>} : memref<1x1x2xf32, #tpu.memory_space<vmem>>, vector<1x1x2xf32>,
    } else {
    }
    return
  }
  func.func @transform_0(%arg0: i32, %arg1: i32) -> (i32, i32, i32) {
    %c0_i32 = arith.constant 0 : i32
    %c0_i32_0 = arith.constant 0 : i32
    return %arg0, %c0_i32, %arg1 : i32, i32, i32
  }
  func.func @transform_1(%arg0: i32, %arg1: i32) -> (i32, i32) {
    %c0_i32 = arith.constant 0 : i32
    %c0_i32_0 = arith.constant 0 : i32
    return %arg1, %c0_i32 : i32, i32
  }
  func.func @transform_2(%arg0: i32, %arg1: i32) -> (i32, i32) {
    %c0_i32 = arith.constant 0 : i32
    %c0_i32_0 = arith.constant 0 : i32
    %c0_i32_1 = arith.constant 0 : i32
    return %c0_i32, %c0_i32_0 : i32, i32
  }
  func.func @transform_3(%arg0: i32, %arg1: i32) -> (i32, i32, i32) {
    %c0_i32 = arith.constant 0 : i32
    %c0_i32_0 = arith.constant 0 : i32
    %c0_i32_1 = arith.constant 0 : i32
    return %arg0, %c0_i32, %c0_i32_0 : i32, i32, i32
  }
}

</mosaic_0001>

<llo_original>
// kernel: tpu_custom_call.1
$region0: #{tpu_custom_call.1}
  #allocation0 [shape = 'u32[]', space=smem, size = 0x4, offset = 0x4, fixed_abs, tag = 'smem constant byte address 0x4 - core index']
  #allocation1 [shape = 'u32[144,128]{1,0:T(1,128)}', space=vmem, size = 0x12000, scoped, tag = 'internal scratch']
  #allocation2 [shape = 'f32[8,2]{1,0:T(8,128)}', space=vmem, size = 0x1000, scoped, tag = 'scratch operand']
  %s0 = inlined_call_operand.vmem [shape: bf16[2,8,51200], index: 0, kind: input, shape index: {}]
  %s1 = inlined_call_operand.vmem [shape: bf16[51200,2], index: 1, kind: input, shape index: {}]
  %s2 = inlined_call_operand.vmem [shape: f32[1,2], index: 2, kind: input, shape index: {}]
  %s3 = inlined_call_operand.hbm [shape: f32[2,1,2], index: 3, kind: output, shape index: {}]
  %s4 = sld [smem:[#allocation0]]
  $region53: #{tpu_custom_call.1} parent=0
    _
  %s6 = ssub.s32 1, %s4
  %s7 = scalar_select 0, %s6, %s4
  $region1: #{tpu_custom_call.1} parent=0
    #allocation3 [shape = 'u8[1024]{0}', space=vmem, size = 0x400, scoped, tag = 'output window, operand 0']
    #allocation4 [shape = 's32[2]{0}', space=sflag, size = 0x8, scoped, tag = 'scoped memory for tpu_custom_call.1']
    %8 = vsyncpa [#allocation4], 0
    %s9 = scalar_lea.sflag [#allocation4], 1
    %10 = vsyncpa %s9, 0
    loop: start=0, step=1, limit=18
    $region2: #{tpu_custom_call.1} parent=1 // loop_pre_header
      _
    $region3: #{tpu_custom_call.1} parent=1 // loop_header
      %s12 = sphi 0, %s16
      %p13 = scmp.ge.s32.totalorder %s12, 18
      %s19 = sphi 0, %s31
      %s20 = sphi 0, %s27
      %s21 = sphi 0, %s19
      %s22 = sphi 0, %s20
      %s23 = sphi 0, %s21
      %s24 = sphi 0, %s22
      %s36 = sphi 0, %s38
      %s39 = sphi 0, %s36
      %s40 = sphi 0, %s39
      %s56 = sphi 0, %s40
      %s62 = sphi 0, %s64
      %s65 = sphi 0, %s62
      %s66 = sphi 0, %s65
      %s82 = sphi 0, %s66
      %s86 = sphi 0, %s86
      %s88 = sphi 0, %s86
      %s89 = sphi 0, %s88
      %s103 = sphi 0, %s89
      %s109 = sphi 0, %s111
      %s112 = sphi 0, %s109
      %s113 = sphi 0, %s112
      %s129 = sphi 0, %s113
    $region4: #{tpu_custom_call.1} parent=1 // loop_header_branch
      %15 = sbr.rel (%p13) target = $region8
    $region5: #{tpu_custom_call.1} parent=1 // loop_body
      %s17 = ssub.s32 %s12, 1
      %s18 = ssub.s32 %s12, 2
      %s25 = sadd.s32 1, %s20
      %p26 = scmp.ge.s32.totalorder %s25, 8
      %s27 = scalar_select %p26, 0, %s25
      %s28 = sadd.s32 1, %s19
      %s29 = scalar_select %p26, %s28, %s19
      %p30 = scmp.ge.s32.totalorder %s29, 2
      %s31 = scalar_select %p30, 0, %s29
      %s32 = ssub.s32 %s19, %s31
      %s33 = ssub.s32 %s20, %s27
      %s34 = sor.u32 %s32, %s33
      %p35 = scmp.eq.s32.totalorder %s34, 0
      %s37 = sadd.s32 %s36, 1
      %s38 = scalar_select %p35, %s36, %s37
      %p41 = pneg %p35
      %p42 = scmp.eq.s32.totalorder %s12, 15
      %p43 = por %p41, %p42
      %p44 = scmp.ne.s32.totalorder %s36, %s39
      %p45 = scmp.eq.s32.totalorder %s12, 0
      %p46 = por %p44, %p45
      %p47 = scmp.ne.s32.totalorder %s36, %s39
      %p48 = scmp.eq.s32.totalorder %s17, 15
      %p49 = por %p47, %p48
      %p50 = scmp.ne.s32.totalorder %s39, %s40
      %p51 = scmp.eq.s32.totalorder %s17, 0
      %p52 = por %p50, %p51
      %p53 = scmp.ne.s32.totalorder %s39, %s40
      %p54 = scmp.eq.s32.totalorder %s18, 15
      %p55 = por %p53, %p54
      %p57 = scmp.ne.s32.totalorder %s40, %s56
      %p58 = scmp.eq.s32.totalorder %s18, 0
      %p59 = por %p57, %p58
      %s60 = ssub.s32 %s20, %s27
      %p61 = scmp.eq.s32.totalorder %s60, 0
      %s63 = sadd.s32 %s62, 1
      %s64 = scalar_select %p61, %s62, %s63
      %p67 = pneg %p61
      %p68 = scmp.eq.s32.totalorder %s12, 15
      %p69 = por %p67, %p68
      %p70 = scmp.ne.s32.totalorder %s62, %s65
      %p71 = scmp.eq.s32.totalorder %s12, 0
      %p72 = por %p70, %p71
      %p73 = scmp.ne.s32.totalorder %s62, %s65
      %p74 = scmp.eq.s32.totalorder %s17, 15
      %p75 = por %p73, %p74
      %p76 = scmp.ne.s32.totalorder %s65, %s66
      %p77 = scmp.eq.s32.totalorder %s17, 0
      %p78 = por %p76, %p77
      %p79 = scmp.ne.s32.totalorder %s65, %s66
      %p80 = scmp.eq.s32.totalorder %s18, 15
      %p81 = por %p79, %p80
      %p83 = scmp.ne.s32.totalorder %s66, %s82
      %p84 = scmp.eq.s32.totalorder %s18, 0
      %p85 = por %p83, %p84
      %s87 = sadd.s32 %s86, 1
      %p90 = scmp.eq.s32.totalorder %s12, 15
      %p91 = scmp.ne.s32.totalorder %s86, %s88
      %p92 = scmp.eq.s32.totalorder %s12, 0
      %p93 = por %p91, %p92
      %p94 = scmp.ne.s32.totalorder %s86, %s88
      %p95 = scmp.eq.s32.totalorder %s17, 15
      %p96 = por %p94, %p95
      %p97 = scmp.ne.s32.totalorder %s88, %s89
      %p98 = scmp.eq.s32.totalorder %s17, 0
      %p99 = por %p97, %p98
      %p100 = scmp.ne.s32.totalorder %s88, %s89
      %p101 = scmp.eq.s32.totalorder %s18, 15
      %p102 = por %p100, %p101
      %p104 = scmp.ne.s32.totalorder %s89, %s103
      %p105 = scmp.eq.s32.totalorder %s18, 0
      %p106 = por %p104, %p105
      %s107 = ssub.s32 %s19, %s31
      %p108 = scmp.eq.s32.totalorder %s107, 0
      %s110 = sadd.s32 %s109, 1
      %s111 = scalar_select %p108, %s109, %s110
      %p114 = pneg %p108
      %p115 = scmp.eq.s32.totalorder %s12, 15
      %p116 = por %p114, %p115
      %p117 = scmp.ne.s32.totalorder %s109, %s112
      %p118 = scmp.eq.s32.totalorder %s12, 0
      %p119 = por %p117, %p118
      %p120 = scmp.ne.s32.totalorder %s109, %s112
      %p121 = scmp.eq.s32.totalorder %s17, 15
      %p122 = por %p120, %p121
      %p123 = scmp.ne.s32.totalorder %s112, %s113
      %p124 = scmp.eq.s32.totalorder %s17, 0
      %p125 = por %p123, %p124
      %p126 = scmp.ne.s32.totalorder %s112, %s113
      %p127 = scmp.eq.s32.totalorder %s18, 15
      %p128 = por %p126, %p127
      %p130 = scmp.ne.s32.totalorder %s113, %s129
      %p131 = scmp.eq.s32.totalorder %s18, 0
      %p132 = por %p130, %p131
      %p133 = scmp.le.s32.totalorder 1, %s12
      %p134 = scmp.lt.s32.totalorder %s12, 17
      %p135 = pnand %p133, %p134
      %p136 = pneg %p135
      // Predicated region
      $region9: #{tpu_custom_call.1} parent=5 // pred_check
        _
      $region10: #{tpu_custom_call.1} parent=5 // pred_check_branch
        %138 = sbr.rel (%p135) target = $region12
      $region11: #{tpu_custom_call.1} parent=5 // pred_region
        %s139 = ssub.s32 %s12, 1
        // Predicated region
        $region13: #{tpu_custom_call.1} parent=11 // pred_check
          %p140 = pneg %p99
        $region14: #{tpu_custom_call.1} parent=11 // pred_check_branch
          %142 = sbr.rel (%p140) target = $region16
        $region15: #{tpu_custom_call.1} parent=11 // pred_region
          _
        $region16: #{tpu_custom_call.1} parent=11 // pred_fallthru
          _
      $region12: #{tpu_custom_call.1} parent=5 // pred_fallthru
        _
      %p143 = scmp.lt.s32.totalorder %s12, 16
      // Predicated region
      $region17: #{tpu_custom_call.1} parent=5 // pred_check
        %p144 = pneg %p143
      $region18: #{tpu_custom_call.1} parent=5 // pred_check_branch
        %146 = sbr.rel (%p144) target = $region20
      $region19: #{tpu_custom_call.1} parent=5 // pred_region
        // Predicated region
        $region21: #{tpu_custom_call.1} parent=19 // pred_check
          %p147 = pneg %p46
        $region22: #{tpu_custom_call.1} parent=19 // pred_check_branch
          %149 = sbr.rel (%p147) target = $region24
        $region23: #{tpu_custom_call.1} parent=19 // pred_region
          %s150 = smul.u32 50, %s20
          %p151 = scmp.lt.s32.totalorder %s19, 1
          %s152 = scalar_select %p151, %s19, 1
          %p153 = scmp.lt.s32.totalorder %s150, 399
          %s154 = scalar_select %p153, %s150, 399
          %s155 = smul.addr %s152, 400
          %s156 = sadd.s32 %s154, %s155
          %s157 = smul.addr %s156, 4
          %s158 = scalar_lea.vmem %s0, %s157
          %s159 = smul.u32 50, %s20
        $region24: #{tpu_custom_call.1} parent=19 // pred_fallthru
          _
        // Predicated region
        $region25: #{tpu_custom_call.1} parent=19 // pred_check
          %p160 = pneg %p72
        $region26: #{tpu_custom_call.1} parent=19 // pred_check_branch
          %162 = sbr.rel (%p160) target = $region28
        $region27: #{tpu_custom_call.1} parent=19 // pred_region
          %s163 = smul.u32 800, %s20
          %p164 = scmp.lt.s32.totalorder %s163, 6399
          %s165 = scalar_select %p164, %s163, 6399
          %s166 = smul.addr %s165, 4
          %s167 = scalar_lea.vmem %s1, %s166
          %s168 = smul.u32 800, %s20
        $region28: #{tpu_custom_call.1} parent=19 // pred_fallthru
          _
      $region20: #{tpu_custom_call.1} parent=5 // pred_fallthru
        _
      %p169 = scmp.le.s32.totalorder 1, %s12
      %p170 = scmp.lt.s32.totalorder %s12, 17
      %p171 = pnand %p169, %p170
      %p172 = pneg %p171
      // Predicated region
      $region29: #{tpu_custom_call.1} parent=5 // pred_check
        _
      $region30: #{tpu_custom_call.1} parent=5 // pred_check_branch
        %174 = sbr.rel (%p171) target = $region32
      $region31: #{tpu_custom_call.1} parent=5 // pred_region
        %s175 = ssub.s32 %s12, 1
        %s176 = smul.u32 50, %s22
        %p177 = scmp.lt.s32.totalorder %s21, 1
        %s178 = scalar_select %p177, %s21, 1
        %p179 = scmp.lt.s32.totalorder %s176, 399
        %s180 = scalar_select %p179, %s176, 399
        %s181 = smul.addr %s178, 400
        %s182 = sadd.s32 %s180, %s181
        %s183 = smul.addr %s182, 4
        %s184 = scalar_lea.vmem %s0, %s183
        %p185 = pneg %p52
        %p186 = pneg %p49
        %s187 = smul.u32 800, %s22
        %p188 = scmp.lt.s32.totalorder %s187, 6399
        %s189 = scalar_select %p188, %s187, 6399
        %s190 = smul.addr %s189, 4
        %s191 = scalar_lea.vmem %s1, %s190
        %p192 = pneg %p78
        %p193 = pneg %p75
        %p194 = pneg %p99
        %p195 = pneg %p96
        %p196 = pneg %p125
        %p197 = pneg %p122
        %s198 = sand.u32 %s112, 1
        %s199 = scalar_lea.sflag [#allocation4], %s198
        %s200 = sand.u32 %s112, 1
        %s201 = scalar_lea.vmem [#allocation3], %s200
        %s202 = smul.u32 50, %s22
        %p203 = scmp.lt.s32.totalorder %s21, 1
        %s204 = scalar_select %p203, %s21, 1
        %p205 = scmp.lt.s32.totalorder %s202, 399
        %s206 = scalar_select %p205, %s202, 399
        %s207 = smul.addr %s204, 400
        %s208 = sadd.s32 %s206, %s207
        %s209 = smul.addr %s208, 4
        %s210 = scalar_lea.vmem %s0, %s209
        %s211 = smul.u32 50, %s22
        %s212 = smul.u32 800, %s22
        %p213 = scmp.lt.s32.totalorder %s212, 6399
        %s214 = scalar_select %p213, %s212, 6399
        %s215 = smul.addr %s214, 4
        %s216 = scalar_lea.vmem %s1, %s215
        %s217 = smul.u32 800, %s22
        %p219 = scmp.eq.s32.totalorder %s22, 0
        // Predicated region
        $region33: #{tpu_custom_call.1} parent=31 // pred_check
          %p220 = pneg %p219
        $region34: #{tpu_custom_call.1} parent=31 // pred_check_branch
          %222 = sbr.rel (%p220) target = $region36
        $region35: #{tpu_custom_call.1} parent=31 // pred_region
          %vm223 = vcmask 15360
          %224 = vst.msk [vmem:[#allocation2] sm:$0xff] %vm223, 0.0
        $region36: #{tpu_custom_call.1} parent=31 // pred_fallthru
          _
        %v225 = vld [vmem:[#allocation2] sm:$0xff]
        %v226 = vld [vmem:[%s210] sm:$0xff]
        %v227 = vld [vmem:[%s210 + $0x8] sm:$0xff]
        %v228 = vld [vmem:[%s210 + $0x10] sm:$0xff]
        %v229 = vld [vmem:[%s210 + $0x18] sm:$0xff]
        %v230 = vld [vmem:[%s210 + $0x20] sm:$0xff]
        %v231 = vld [vmem:[%s210 + $0x28] sm:$0xff]
        %v232 = vld [vmem:[%s210 + $0x30] sm:$0xff]
        %v233 = vld [vmem:[%s210 + $0x38] sm:$0xff]
        %v234 = vld [vmem:[%s210 + $0x40] sm:$0xff]
        %v235 = vld [vmem:[%s210 + $0x48] sm:$0xff]
        %v236 = vld [vmem:[%s210 + $0x50] sm:$0xff]
        %v237 = vld [vmem:[%s210 + $0x58] sm:$0xff]
        %v238 = vld [vmem:[%s210 + $0x60] sm:$0xff]
        %v239 = vld [vmem:[%s210 + $0x68] sm:$0xff]
        %v240 = vld [vmem:[%s210 + $0x70] sm:$0xff]
        %v241 = vld [vmem:[%s210 + $0x78] sm:$0xff]
        %v242 = vld [vmem:[%s210 + $0x80] sm:$0xff]
        %v243 = vld [vmem:[%s210 + $0x88] sm:$0xff]
        %v244 = vld [vmem:[%s210 + $0x90] sm:$0xff]
        %v245 = vld [vmem:[%s210 + $0x98] sm:$0xff]
        %v246 = vld [vmem:[%s210 + $0xa0] sm:$0xff]
        %v247 = vld [vmem:[%s210 + $0xa8] sm:$0xff]
        %v248 = vld [vmem:[%s210 + $0xb0] sm:$0xff]
        %v249 = vld [vmem:[%s210 + $0xb8] sm:$0xff]
        %v250 = vld [vmem:[%s210 + $0xc0] sm:$0xff]
        %v251 = vld [vmem:[%s216] sm:$0xf]
        %v252 = vld [vmem:[%s216 + $0x4] sm:$0xf]
        %v253 = vld [vmem:[%s216 + $0x8] sm:$0xf]
        %v254 = vld [vmem:[%s216 + $0xc] sm:$0xf]
        %v255 = vld [vmem:[%s216 + $0x10] sm:$0xf]
        %v256 = vld [vmem:[%s216 + $0x14] sm:$0xf]
        %v257 = vld [vmem:[%s216 + $0x18] sm:$0xf]
        %v258 = vld [vmem:[%s216 + $0x1c] sm:$0xf]
        %v259 = vld [vmem:[%s216 + $0x20] sm:$0xf]
        %v260 = vld [vmem:[%s216 + $0x24] sm:$0xf]
        %v261 = vld [vmem:[%s216 + $0x28] sm:$0xf]
        %v262 = vld [vmem:[%s216 + $0x2c] sm:$0xf]
        %v263 = vld [vmem:[%s216 + $0x30] sm:$0xf]
        %v264 = vld [vmem:[%s216 + $0x34] sm:$0xf]
        %v265 = vld [vmem:[%s216 + $0x38] sm:$0xf]
        %v266 = vld [vmem:[%s216 + $0x3c] sm:$0xf]
        %v267 = vld [vmem:[%s216 + $0x40] sm:$0xf]
        %v268 = vld [vmem:[%s216 + $0x44] sm:$0xf]
        %v269 = vld [vmem:[%s216 + $0x48] sm:$0xf]
        %v270 = vld [vmem:[%s216 + $0x4c] sm:$0xf]
        %v271 = vld [vmem:[%s216 + $0x50] sm:$0xf]
        %v272 = vld [vmem:[%s216 + $0x54] sm:$0xf]
        %v273 = vld [vmem:[%s216 + $0x58] sm:$0xf]
        %v274 = vld [vmem:[%s216 + $0x5c] sm:$0xf]
        %v275 = vld [vmem:[%s216 + $0x60] sm:$0xf]
        %v276 = vld [vmem:[%s216 + $0x64] sm:$0xf]
        %v277 = vld [vmem:[%s216 + $0x68] sm:$0xf]
        %v278 = vld [vmem:[%s216 + $0x6c] sm:$0xf]
        %v279 = vld [vmem:[%s216 + $0x70] sm:$0xf]
        %v280 = vld [vmem:[%s216 + $0x74] sm:$0xf]
        %v281 = vld [vmem:[%s216 + $0x78] sm:$0xf]
        %v282 = vld [vmem:[%s216 + $0x7c] sm:$0xf]
        %v283 = vld [vmem:[%s216 + $0x80] sm:$0xf]
        %v284 = vld [vmem:[%s216 + $0x84] sm:$0xf]
        %v285 = vld [vmem:[%s216 + $0x88] sm:$0xf]
        %v286 = vld [vmem:[%s216 + $0x8c] sm:$0xf]
        %v287 = vld [vmem:[%s216 + $0x90] sm:$0xf]
        %v288 = vld [vmem:[%s216 + $0x94] sm:$0xf]
        %v289 = vld [vmem:[%s216 + $0x98] sm:$0xf]
        %v290 = vld [vmem:[%s216 + $0x9c] sm:$0xf]
        %v291 = vld [vmem:[%s216 + $0xa0] sm:$0xf]
        %v292 = vld [vmem:[%s216 + $0xa4] sm:$0xf]
        %v293 = vld [vmem:[%s216 + $0xa8] sm:$0xf]
        %v294 = vld [vmem:[%s216 + $0xac] sm:$0xf]
        %v295 = vld [vmem:[%s216 + $0xb0] sm:$0xf]
        %v296 = vld [vmem:[%s216 + $0xb4] sm:$0xf]
        %v297 = vld [vmem:[%s216 + $0xb8] sm:$0xf]
        %v298 = vld [vmem:[%s216 + $0xbc] sm:$0xf]
        %v299 = vld [vmem:[%s216 + $0xc0] sm:$0xf]
        %v300 = vld [vmem:[%s216 + $0xc4] sm:$0xf]
        %v301 = vld [vmem:[%s216 + $0xc8] sm:$0xf]
        %v302 = vld [vmem:[%s216 + $0xcc] sm:$0xf]
        %v303 = vld [vmem:[%s216 + $0xd0] sm:$0xf]
        %v304 = vld [vmem:[%s216 + $0xd4] sm:$0xf]
        %v305 = vld [vmem:[%s216 + $0xd8] sm:$0xf]
        %v306 = vld [vmem:[%s216 + $0xdc] sm:$0xf]
        %v307 = vld [vmem:[%s216 + $0xe0] sm:$0xf]
        %v308 = vld [vmem:[%s216 + $0xe4] sm:$0xf]
        %v309 = vld [vmem:[%s216 + $0xe8] sm:$0xf]
        %v310 = vld [vmem:[%s216 + $0xec] sm:$0xf]
        %v311 = vld [vmem:[%s216 + $0xf0] sm:$0xf]
        %v312 = vld [vmem:[%s216 + $0xf4] sm:$0xf]
        %v313 = vld [vmem:[%s216 + $0xf8] sm:$0xf]
        %v314 = vld [vmem:[%s216 + $0xfc] sm:$0xf]
        %v315 = vld [vmem:[%s216 + $0x100] sm:$0xf]
        %v316 = vld [vmem:[%s216 + $0x104] sm:$0xf]
        %v317 = vld [vmem:[%s216 + $0x108] sm:$0xf]
        %v318 = vld [vmem:[%s216 + $0x10c] sm:$0xf]
        %v319 = vld [vmem:[%s216 + $0x110] sm:$0xf]
        %v320 = vld [vmem:[%s216 + $0x114] sm:$0xf]
        %v321 = vld [vmem:[%s216 + $0x118] sm:$0xf]
        %v322 = vld [vmem:[%s216 + $0x11c] sm:$0xf]
        %v323 = vld [vmem:[%s216 + $0x120] sm:$0xf]
        %v324 = vld [vmem:[%s216 + $0x124] sm:$0xf]
        %v325 = vld [vmem:[%s216 + $0x128] sm:$0xf]
        %v326 = vld [vmem:[%s216 + $0x12c] sm:$0xf]
        %v327 = vld [vmem:[%s216 + $0x130] sm:$0xf]
        %v328 = vld [vmem:[%s216 + $0x134] sm:$0xf]
        %v329 = vld [vmem:[%s216 + $0x138] sm:$0xf]
        %v330 = vld [vmem:[%s216 + $0x13c] sm:$0xf]
        %v331 = vld [vmem:[%s216 + $0x140] sm:$0xf]
        %v332 = vld [vmem:[%s216 + $0x144] sm:$0xf]
        %v333 = vld [vmem:[%s216 + $0x148] sm:$0xf]
        %v334 = vld [vmem:[%s216 + $0x14c] sm:$0xf]
        %v335 = vld [vmem:[%s216 + $0x150] sm:$0xf]
        %v336 = vld [vmem:[%s216 + $0x154] sm:$0xf]
        %v337 = vld [vmem:[%s216 + $0x158] sm:$0xf]
        %v338 = vld [vmem:[%s216 + $0x15c] sm:$0xf]
        %v339 = vld [vmem:[%s216 + $0x160] sm:$0xf]
        %v340 = vld [vmem:[%s216 + $0x164] sm:$0xf]
        %v341 = vld [vmem:[%s216 + $0x168] sm:$0xf]
        %v342 = vld [vmem:[%s216 + $0x16c] sm:$0xf]
        %v343 = vld [vmem:[%s216 + $0x170] sm:$0xf]
        %v344 = vld [vmem:[%s216 + $0x174] sm:$0xf]
        %v345 = vld [vmem:[%s216 + $0x178] sm:$0xf]
        %v346 = vld [vmem:[%s216 + $0x17c] sm:$0xf]
        %v347 = vld [vmem:[%s216 + $0x180] sm:$0xf]
        %v348 = vld [vmem:[%s216 + $0x184] sm:$0xf]
        %v349 = vld [vmem:[%s216 + $0x188] sm:$0xf]
        %v350 = vld [vmem:[%s216 + $0x18c] sm:$0xf]
        %v351 = vld [vmem:[%s216 + $0x190] sm:$0xf]
        %v352 = vld [vmem:[%s216 + $0x194] sm:$0xf]
        %v353 = vld [vmem:[%s216 + $0x198] sm:$0xf]
        %v354 = vld [vmem:[%s216 + $0x19c] sm:$0xf]
        %v355 = vld [vmem:[%s216 + $0x1a0] sm:$0xf]
        %v356 = vld [vmem:[%s216 + $0x1a4] sm:$0xf]
        %v357 = vld [vmem:[%s216 + $0x1a8] sm:$0xf]
        %v358 = vld [vmem:[%s216 + $0x1ac] sm:$0xf]
        %v359 = vld [vmem:[%s216 + $0x1b0] sm:$0xf]
        %v360 = vld [vmem:[%s216 + $0x1b4] sm:$0xf]
        %v361 = vld [vmem:[%s216 + $0x1b8] sm:$0xf]
        %v362 = vld [vmem:[%s216 + $0x1bc] sm:$0xf]
        %v363 = vld [vmem:[%s216 + $0x1c0] sm:$0xf]
        %v364 = vld [vmem:[%s216 + $0x1c4] sm:$0xf]
        %v365 = vld [vmem:[%s216 + $0x1c8] sm:$0xf]
        %v366 = vld [vmem:[%s216 + $0x1cc] sm:$0xf]
        %v367 = vld [vmem:[%s216 + $0x1d0] sm:$0xf]
        %v368 = vld [vmem:[%s216 + $0x1d4] sm:$0xf]
        %v369 = vld [vmem:[%s216 + $0x1d8] sm:$0xf]
        %v370 = vld [vmem:[%s216 + $0x1dc] sm:$0xf]
        %v371 = vld [vmem:[%s216 + $0x1e0] sm:$0xf]
        %v372 = vld [vmem:[%s216 + $0x1e4] sm:$0xf]
        %v373 = vld [vmem:[%s216 + $0x1e8] sm:$0xf]
        %v374 = vld [vmem:[%s216 + $0x1ec] sm:$0xf]
        %v375 = vld [vmem:[%s216 + $0x1f0] sm:$0xf]
        %v376 = vld [vmem:[%s216 + $0x1f4] sm:$0xf]
        %v377 = vld [vmem:[%s216 + $0x1f8] sm:$0xf]
        %v378 = vld [vmem:[%s216 + $0x1fc] sm:$0xf]
        %v379 = vld [vmem:[%s216 + $0x200] sm:$0xf]
        %v380 = vld [vmem:[%s216 + $0x204] sm:$0xf]
        %v381 = vld [vmem:[%s216 + $0x208] sm:$0xf]
        %v382 = vld [vmem:[%s216 + $0x20c] sm:$0xf]
        %v383 = vld [vmem:[%s216 + $0x210] sm:$0xf]
        %v384 = vld [vmem:[%s216 + $0x214] sm:$0xf]
        %v385 = vld [vmem:[%s216 + $0x218] sm:$0xf]
        %v386 = vld [vmem:[%s216 + $0x21c] sm:$0xf]
        %v387 = vld [vmem:[%s216 + $0x220] sm:$0xf]
        %v388 = vld [vmem:[%s216 + $0x224] sm:$0xf]
        %v389 = vld [vmem:[%s216 + $0x228] sm:$0xf]
        %v390 = vld [vmem:[%s216 + $0x22c] sm:$0xf]
        %v391 = vld [vmem:[%s216 + $0x230] sm:$0xf]
        %v392 = vld [vmem:[%s216 + $0x234] sm:$0xf]
        %v393 = vld [vmem:[%s216 + $0x238] sm:$0xf]
        %v394 = vld [vmem:[%s216 + $0x23c] sm:$0xf]
        %v395 = vld [vmem:[%s216 + $0x240] sm:$0xf]
        %v396 = vld [vmem:[%s216 + $0x244] sm:$0xf]
        %v397 = vld [vmem:[%s216 + $0x248] sm:$0xf]
        %v398 = vld [vmem:[%s216 + $0x24c] sm:$0xf]
        %v399 = vld [vmem:[%s216 + $0x250] sm:$0xf]
        %v400 = vld [vmem:[%s216 + $0x254] sm:$0xf]
        %v401 = vld [vmem:[%s216 + $0x258] sm:$0xf]
        %v402 = vld [vmem:[%s216 + $0x25c] sm:$0xf]
        %v403 = vld [vmem:[%s216 + $0x260] sm:$0xf]
        %v404 = vld [vmem:[%s216 + $0x264] sm:$0xf]
        %v405 = vld [vmem:[%s216 + $0x268] sm:$0xf]
        %v406 = vld [vmem:[%s216 + $0x26c] sm:$0xf]
        %v407 = vld [vmem:[%s216 + $0x270] sm:$0xf]
        %v408 = vld [vmem:[%s216 + $0x274] sm:$0xf]
        %v409 = vld [vmem:[%s216 + $0x278] sm:$0xf]
        %v410 = vld [vmem:[%s216 + $0x27c] sm:$0xf]
        %v411 = vld [vmem:[%s216 + $0x280] sm:$0xf]
        %v412 = vld [vmem:[%s216 + $0x284] sm:$0xf]
        %v413 = vld [vmem:[%s216 + $0x288] sm:$0xf]
        %v414 = vld [vmem:[%s216 + $0x28c] sm:$0xf]
        %v415 = vld [vmem:[%s216 + $0x290] sm:$0xf]
        %v416 = vld [vmem:[%s216 + $0x294] sm:$0xf]
        %v417 = vld [vmem:[%s216 + $0x298] sm:$0xf]
        %v418 = vld [vmem:[%s216 + $0x29c] sm:$0xf]
        %v419 = vld [vmem:[%s216 + $0x2a0] sm:$0xf]
        %v420 = vld [vmem:[%s216 + $0x2a4] sm:$0xf]
        %v421 = vld [vmem:[%s216 + $0x2a8] sm:$0xf]
        %v422 = vld [vmem:[%s216 + $0x2ac] sm:$0xf]
        %v423 = vld [vmem:[%s216 + $0x2b0] sm:$0xf]
        %v424 = vld [vmem:[%s216 + $0x2b4] sm:$0xf]
        %v425 = vld [vmem:[%s216 + $0x2b8] sm:$0xf]
        %v426 = vld [vmem:[%s216 + $0x2bc] sm:$0xf]
        %v427 = vld [vmem:[%s216 + $0x2c0] sm:$0xf]
        %v428 = vld [vmem:[%s216 + $0x2c4] sm:$0xf]
        %v429 = vld [vmem:[%s216 + $0x2c8] sm:$0xf]
        %v430 = vld [vmem:[%s216 + $0x2cc] sm:$0xf]
        %v431 = vld [vmem:[%s216 + $0x2d0] sm:$0xf]
        %v432 = vld [vmem:[%s216 + $0x2d4] sm:$0xf]
        %v433 = vld [vmem:[%s216 + $0x2d8] sm:$0xf]
        %v434 = vld [vmem:[%s216 + $0x2dc] sm:$0xf]
        %v435 = vld [vmem:[%s216 + $0x2e0] sm:$0xf]
        %v436 = vld [vmem:[%s216 + $0x2e4] sm:$0xf]
        %v437 = vld [vmem:[%s216 + $0x2e8] sm:$0xf]
        %v438 = vld [vmem:[%s216 + $0x2ec] sm:$0xf]
        %v439 = vld [vmem:[%s216 + $0x2f0] sm:$0xf]
        %v440 = vld [vmem:[%s216 + $0x2f4] sm:$0xf]
        %v441 = vld [vmem:[%s216 + $0x2f8] sm:$0xf]
        %v442 = vld [vmem:[%s216 + $0x2fc] sm:$0xf]
        %v443 = vld [vmem:[%s216 + $0x300] sm:$0xf]
        %v444 = vld [vmem:[%s216 + $0x304] sm:$0xf]
        %v445 = vld [vmem:[%s216 + $0x308] sm:$0xf]
        %v446 = vld [vmem:[%s216 + $0x30c] sm:$0xf]
        %v447 = vld [vmem:[%s216 + $0x310] sm:$0xf]
        %v448 = vld [vmem:[%s216 + $0x314] sm:$0xf]
        %v449 = vld [vmem:[%s216 + $0x318] sm:$0xf]
        %v450 = vld [vmem:[%s216 + $0x31c] sm:$0xf]
        %v451 = vld [vmem:[%s216 + $0x320] sm:$0xf]
        %v452 = vld [vmem:[%s216 + $0x324] sm:$0xf]
        %v453 = vld [vmem:[%s216 + $0x328] sm:$0xf]
        %v454 = vld [vmem:[%s216 + $0x32c] sm:$0xf]
        %v455 = vld [vmem:[%s216 + $0x330] sm:$0xf]
        %v456 = vld [vmem:[%s216 + $0x334] sm:$0xf]
        %v457 = vld [vmem:[%s216 + $0x338] sm:$0xf]
        %v458 = vld [vmem:[%s216 + $0x33c] sm:$0xf]
        %v459 = vld [vmem:[%s216 + $0x340] sm:$0xf]
        %v460 = vld [vmem:[%s216 + $0x344] sm:$0xf]
        %v461 = vld [vmem:[%s216 + $0x348] sm:$0xf]
        %v462 = vld [vmem:[%s216 + $0x34c] sm:$0xf]
        %v463 = vld [vmem:[%s216 + $0x350] sm:$0xf]
        %v464 = vld [vmem:[%s216 + $0x354] sm:$0xf]
        %v465 = vld [vmem:[%s216 + $0x358] sm:$0xf]
        %v466 = vld [vmem:[%s216 + $0x35c] sm:$0xf]
        %v467 = vld [vmem:[%s216 + $0x360] sm:$0xf]
        %v468 = vld [vmem:[%s216 + $0x364] sm:$0xf]
        %v469 = vld [vmem:[%s216 + $0x368] sm:$0xf]
        %v470 = vld [vmem:[%s216 + $0x36c] sm:$0xf]
        %v471 = vld [vmem:[%s216 + $0x370] sm:$0xf]
        %v472 = vld [vmem:[%s216 + $0x374] sm:$0xf]
        %v473 = vld [vmem:[%s216 + $0x378] sm:$0xf]
        %v474 = vld [vmem:[%s216 + $0x37c] sm:$0xf]
        %v475 = vld [vmem:[%s216 + $0x380] sm:$0xf]
        %v476 = vld [vmem:[%s216 + $0x384] sm:$0xf]
        %v477 = vld [vmem:[%s216 + $0x388] sm:$0xf]
        %v478 = vld [vmem:[%s216 + $0x38c] sm:$0xf]
        %v479 = vld [vmem:[%s216 + $0x390] sm:$0xf]
        %v480 = vld [vmem:[%s216 + $0x394] sm:$0xf]
        %v481 = vld [vmem:[%s216 + $0x398] sm:$0xf]
        %v482 = vld [vmem:[%s216 + $0x39c] sm:$0xf]
        %v483 = vld [vmem:[%s216 + $0x3a0] sm:$0xf]
        %v484 = vld [vmem:[%s216 + $0x3a4] sm:$0xf]
        %v485 = vld [vmem:[%s216 + $0x3a8] sm:$0xf]
        %v486 = vld [vmem:[%s216 + $0x3ac] sm:$0xf]
        %v487 = vld [vmem:[%s216 + $0x3b0] sm:$0xf]
        %v488 = vld [vmem:[%s216 + $0x3b4] sm:$0xf]
        %v489 = vld [vmem:[%s216 + $0x3b8] sm:$0xf]
        %v490 = vld [vmem:[%s216 + $0x3bc] sm:$0xf]
        %v491 = vld [vmem:[%s216 + $0x3c0] sm:$0xf]
        %v492 = vld [vmem:[%s216 + $0x3c4] sm:$0xf]
        %v493 = vld [vmem:[%s216 + $0x3c8] sm:$0xf]
        %v494 = vld [vmem:[%s216 + $0x3cc] sm:$0xf]
        %v495 = vld [vmem:[%s216 + $0x3d0] sm:$0xf]
        %v496 = vld [vmem:[%s216 + $0x3d4] sm:$0xf]
        %v497 = vld [vmem:[%s216 + $0x3d8] sm:$0xf]
        %v498 = vld [vmem:[%s216 + $0x3dc] sm:$0xf]
        %v499 = vld [vmem:[%s216 + $0x3e0] sm:$0xf]
        %v500 = vld [vmem:[%s216 + $0x3e4] sm:$0xf]
        %v501 = vld [vmem:[%s216 + $0x3e8] sm:$0xf]
        %v502 = vld [vmem:[%s216 + $0x3ec] sm:$0xf]
        %v503 = vld [vmem:[%s216 + $0x3f0] sm:$0xf]
        %v504 = vld [vmem:[%s216 + $0x3f4] sm:$0xf]
        %v505 = vld [vmem:[%s216 + $0x3f8] sm:$0xf]
        %v506 = vld [vmem:[%s216 + $0x3fc] sm:$0xf]
        %v507 = vld [vmem:[%s216 + $0x400] sm:$0xf]
        %v508 = vld [vmem:[%s216 + $0x404] sm:$0xf]
        %v509 = vld [vmem:[%s216 + $0x408] sm:$0xf]
        %v510 = vld [vmem:[%s216 + $0x40c] sm:$0xf]
        %v511 = vld [vmem:[%s216 + $0x410] sm:$0xf]
        %v512 = vld [vmem:[%s216 + $0x414] sm:$0xf]
        %v513 = vld [vmem:[%s216 + $0x418] sm:$0xf]
        %v514 = vld [vmem:[%s216 + $0x41c] sm:$0xf]
        %v515 = vld [vmem:[%s216 + $0x420] sm:$0xf]
        %v516 = vld [vmem:[%s216 + $0x424] sm:$0xf]
        %v517 = vld [vmem:[%s216 + $0x428] sm:$0xf]
        %v518 = vld [vmem:[%s216 + $0x42c] sm:$0xf]
        %v519 = vld [vmem:[%s216 + $0x430] sm:$0xf]
        %v520 = vld [vmem:[%s216 + $0x434] sm:$0xf]
        %v521 = vld [vmem:[%s216 + $0x438] sm:$0xf]
        %v522 = vld [vmem:[%s216 + $0x43c] sm:$0xf]
        %v523 = vld [vmem:[%s216 + $0x440] sm:$0xf]
        %v524 = vld [vmem:[%s216 + $0x444] sm:$0xf]
        %v525 = vld [vmem:[%s216 + $0x448] sm:$0xf]
        %v526 = vld [vmem:[%s216 + $0x44c] sm:$0xf]
        %v527 = vld [vmem:[%s216 + $0x450] sm:$0xf]
        %v528 = vld [vmem:[%s216 + $0x454] sm:$0xf]
        %v529 = vld [vmem:[%s216 + $0x458] sm:$0xf]
        %v530 = vld [vmem:[%s216 + $0x45c] sm:$0xf]
        %v531 = vld [vmem:[%s216 + $0x460] sm:$0xf]
        %v532 = vld [vmem:[%s216 + $0x464] sm:$0xf]
        %v533 = vld [vmem:[%s216 + $0x468] sm:$0xf]
        %v534 = vld [vmem:[%s216 + $0x46c] sm:$0xf]
        %v535 = vld [vmem:[%s216 + $0x470] sm:$0xf]
        %v536 = vld [vmem:[%s216 + $0x474] sm:$0xf]
        %v537 = vld [vmem:[%s216 + $0x478] sm:$0xf]
        %v538 = vld [vmem:[%s216 + $0x47c] sm:$0xf]
        %v539 = vld [vmem:[%s216 + $0x480] sm:$0xf]
        %v540 = vld [vmem:[%s216 + $0x484] sm:$0xf]
        %v541 = vld [vmem:[%s216 + $0x488] sm:$0xf]
        %v542 = vld [vmem:[%s216 + $0x48c] sm:$0xf]
        %v543 = vld [vmem:[%s216 + $0x490] sm:$0xf]
        %v544 = vld [vmem:[%s216 + $0x494] sm:$0xf]
        %v545 = vld [vmem:[%s216 + $0x498] sm:$0xf]
        %v546 = vld [vmem:[%s216 + $0x49c] sm:$0xf]
        %v547 = vld [vmem:[%s216 + $0x4a0] sm:$0xf]
        %v548 = vld [vmem:[%s216 + $0x4a4] sm:$0xf]
        %v549 = vld [vmem:[%s216 + $0x4a8] sm:$0xf]
        %v550 = vld [vmem:[%s216 + $0x4ac] sm:$0xf]
        %v551 = vld [vmem:[%s216 + $0x4b0] sm:$0xf]
        %v552 = vld [vmem:[%s216 + $0x4b4] sm:$0xf]
        %v553 = vld [vmem:[%s216 + $0x4b8] sm:$0xf]
        %v554 = vld [vmem:[%s216 + $0x4bc] sm:$0xf]
        %v555 = vld [vmem:[%s216 + $0x4c0] sm:$0xf]
        %v556 = vld [vmem:[%s216 + $0x4c4] sm:$0xf]
        %v557 = vld [vmem:[%s216 + $0x4c8] sm:$0xf]
        %v558 = vld [vmem:[%s216 + $0x4cc] sm:$0xf]
        %v559 = vld [vmem:[%s216 + $0x4d0] sm:$0xf]
        %v560 = vld [vmem:[%s216 + $0x4d4] sm:$0xf]
        %v561 = vld [vmem:[%s216 + $0x4d8] sm:$0xf]
        %v562 = vld [vmem:[%s216 + $0x4dc] sm:$0xf]
        %v563 = vld [vmem:[%s216 + $0x4e0] sm:$0xf]
        %v564 = vld [vmem:[%s216 + $0x4e4] sm:$0xf]
        %v565 = vld [vmem:[%s216 + $0x4e8] sm:$0xf]
        %v566 = vld [vmem:[%s216 + $0x4ec] sm:$0xf]
        %v567 = vld [vmem:[%s216 + $0x4f0] sm:$0xf]
        %v568 = vld [vmem:[%s216 + $0x4f4] sm:$0xf]
        %v569 = vld [vmem:[%s216 + $0x4f8] sm:$0xf]
        %v570 = vld [vmem:[%s216 + $0x4fc] sm:$0xf]
        %v571 = vld [vmem:[%s216 + $0x500] sm:$0xf]
        %v572 = vld [vmem:[%s216 + $0x504] sm:$0xf]
        %v573 = vld [vmem:[%s216 + $0x508] sm:$0xf]
        %v574 = vld [vmem:[%s216 + $0x50c] sm:$0xf]
        %v575 = vld [vmem:[%s216 + $0x510] sm:$0xf]
        %v576 = vld [vmem:[%s216 + $0x514] sm:$0xf]
        %v577 = vld [vmem:[%s216 + $0x518] sm:$0xf]
        %v578 = vld [vmem:[%s216 + $0x51c] sm:$0xf]
        %v579 = vld [vmem:[%s216 + $0x520] sm:$0xf]
        %v580 = vld [vmem:[%s216 + $0x524] sm:$0xf]
        %v581 = vld [vmem:[%s216 + $0x528] sm:$0xf]
        %v582 = vld [vmem:[%s216 + $0x52c] sm:$0xf]
        %v583 = vld [vmem:[%s216 + $0x530] sm:$0xf]
        %v584 = vld [vmem:[%s216 + $0x534] sm:$0xf]
        %v585 = vld [vmem:[%s216 + $0x538] sm:$0xf]
        %v586 = vld [vmem:[%s216 + $0x53c] sm:$0xf]
        %v587 = vld [vmem:[%s216 + $0x540] sm:$0xf]
        %v588 = vld [vmem:[%s216 + $0x544] sm:$0xf]
        %v589 = vld [vmem:[%s216 + $0x548] sm:$0xf]
        %v590 = vld [vmem:[%s216 + $0x54c] sm:$0xf]
        %v591 = vld [vmem:[%s216 + $0x550] sm:$0xf]
        %v592 = vld [vmem:[%s216 + $0x554] sm:$0xf]
        %v593 = vld [vmem:[%s216 + $0x558] sm:$0xf]
        %v594 = vld [vmem:[%s216 + $0x55c] sm:$0xf]
        %v595 = vld [vmem:[%s216 + $0x560] sm:$0xf]
        %v596 = vld [vmem:[%s216 + $0x564] sm:$0xf]
        %v597 = vld [vmem:[%s216 + $0x568] sm:$0xf]
        %v598 = vld [vmem:[%s216 + $0x56c] sm:$0xf]
        %v599 = vld [vmem:[%s216 + $0x570] sm:$0xf]
        %v600 = vld [vmem:[%s216 + $0x574] sm:$0xf]
        %v601 = vld [vmem:[%s216 + $0x578] sm:$0xf]
        %v602 = vld [vmem:[%s216 + $0x57c] sm:$0xf]
        %v603 = vld [vmem:[%s216 + $0x580] sm:$0xf]
        %v604 = vld [vmem:[%s216 + $0x584] sm:$0xf]
        %v605 = vld [vmem:[%s216 + $0x588] sm:$0xf]
        %v606 = vld [vmem:[%s216 + $0x58c] sm:$0xf]
        %v607 = vld [vmem:[%s216 + $0x590] sm:$0xf]
        %v608 = vld [vmem:[%s216 + $0x594] sm:$0xf]
        %v609 = vld [vmem:[%s216 + $0x598] sm:$0xf]
        %v610 = vld [vmem:[%s216 + $0x59c] sm:$0xf]
        %v611 = vld [vmem:[%s216 + $0x5a0] sm:$0xf]
        %v612 = vld [vmem:[%s216 + $0x5a4] sm:$0xf]
        %v613 = vld [vmem:[%s216 + $0x5a8] sm:$0xf]
        %v614 = vld [vmem:[%s216 + $0x5ac] sm:$0xf]
        %v615 = vld [vmem:[%s216 + $0x5b0] sm:$0xf]
        %v616 = vld [vmem:[%s216 + $0x5b4] sm:$0xf]
        %v617 = vld [vmem:[%s216 + $0x5b8] sm:$0xf]
        %v618 = vld [vmem:[%s216 + $0x5bc] sm:$0xf]
        %v619 = vld [vmem:[%s216 + $0x5c0] sm:$0xf]
        %v620 = vld [vmem:[%s216 + $0x5c4] sm:$0xf]
        %v621 = vld [vmem:[%s216 + $0x5c8] sm:$0xf]
        %v622 = vld [vmem:[%s216 + $0x5cc] sm:$0xf]
        %v623 = vld [vmem:[%s216 + $0x5d0] sm:$0xf]
        %v624 = vld [vmem:[%s216 + $0x5d4] sm:$0xf]
        %v625 = vld [vmem:[%s216 + $0x5d8] sm:$0xf]
        %v626 = vld [vmem:[%s216 + $0x5dc] sm:$0xf]
        %v627 = vld [vmem:[%s216 + $0x5e0] sm:$0xf]
        %v628 = vld [vmem:[%s216 + $0x5e4] sm:$0xf]
        %v629 = vld [vmem:[%s216 + $0x5e8] sm:$0xf]
        %v630 = vld [vmem:[%s216 + $0x5ec] sm:$0xf]
        %v631 = vld [vmem:[%s216 + $0x5f0] sm:$0xf]
        %v632 = vld [vmem:[%s216 + $0x5f4] sm:$0xf]
        %v633 = vld [vmem:[%s216 + $0x5f8] sm:$0xf]
        %v634 = vld [vmem:[%s216 + $0x5fc] sm:$0xf]
        %v635 = vld [vmem:[%s216 + $0x600] sm:$0xf]
        %v636 = vld [vmem:[%s216 + $0x604] sm:$0xf]
        %v637 = vld [vmem:[%s216 + $0x608] sm:$0xf]
        %v638 = vld [vmem:[%s216 + $0x60c] sm:$0xf]
        %v639 = vld [vmem:[%s216 + $0x610] sm:$0xf]
        %v640 = vld [vmem:[%s216 + $0x614] sm:$0xf]
        %v641 = vld [vmem:[%s216 + $0x618] sm:$0xf]
        %v642 = vld [vmem:[%s216 + $0x61c] sm:$0xf]
        %v643 = vld [vmem:[%s216 + $0x620] sm:$0xf]
        %v644 = vld [vmem:[%s216 + $0x624] sm:$0xf]
        %v645 = vld [vmem:[%s216 + $0x628] sm:$0xf]
        %v646 = vld [vmem:[%s216 + $0x62c] sm:$0xf]
        %v647 = vld [vmem:[%s216 + $0x630] sm:$0xf]
        %v648 = vld [vmem:[%s216 + $0x634] sm:$0xf]
        %v649 = vld [vmem:[%s216 + $0x638] sm:$0xf]
        %v650 = vld [vmem:[%s216 + $0x63c] sm:$0xf]
        %v651 = vld [vmem:[%s216 + $0x640] sm:$0xf]
        %v652 = vld [vmem:[%s216 + $0x644] sm:$0xf]
        %v653 = vld [vmem:[%s216 + $0x648] sm:$0xf]
        %v654 = vld [vmem:[%s216 + $0x64c] sm:$0xf]
        %v655 = vld [vmem:[%s216 + $0x650] sm:$0xf]
        %v656 = vld [vmem:[%s216 + $0x654] sm:$0xf]
        %v657 = vld [vmem:[%s216 + $0x658] sm:$0xf]
        %v658 = vld [vmem:[%s216 + $0x65c] sm:$0xf]
        %v659 = vld [vmem:[%s216 + $0x660] sm:$0xf]
        %v660 = vld [vmem:[%s216 + $0x664] sm:$0xf]
        %v661 = vld [vmem:[%s216 + $0x668] sm:$0xf]
        %v662 = vld [vmem:[%s216 + $0x66c] sm:$0xf]
        %v663 = vld [vmem:[%s216 + $0x670] sm:$0xf]
        %v664 = vld [vmem:[%s216 + $0x674] sm:$0xf]
        %v665 = vld [vmem:[%s216 + $0x678] sm:$0xf]
        %v666 = vld [vmem:[%s216 + $0x67c] sm:$0xf]
        %v667 = vld [vmem:[%s216 + $0x680] sm:$0xf]
        %v668 = vld [vmem:[%s216 + $0x684] sm:$0xf]
        %v669 = vld [vmem:[%s216 + $0x688] sm:$0xf]
        %v670 = vld [vmem:[%s216 + $0x68c] sm:$0xf]
        %v671 = vld [vmem:[%s216 + $0x690] sm:$0xf]
        %v672 = vld [vmem:[%s216 + $0x694] sm:$0xf]
        %v673 = vld [vmem:[%s216 + $0x698] sm:$0xf]
        %v674 = vld [vmem:[%s216 + $0x69c] sm:$0xf]
        %v675 = vld [vmem:[%s216 + $0x6a0] sm:$0xf]
        %v676 = vld [vmem:[%s216 + $0x6a4] sm:$0xf]
        %v677 = vld [vmem:[%s216 + $0x6a8] sm:$0xf]
        %v678 = vld [vmem:[%s216 + $0x6ac] sm:$0xf]
        %v679 = vld [vmem:[%s216 + $0x6b0] sm:$0xf]
        %v680 = vld [vmem:[%s216 + $0x6b4] sm:$0xf]
        %v681 = vld [vmem:[%s216 + $0x6b8] sm:$0xf]
        %v682 = vld [vmem:[%s216 + $0x6bc] sm:$0xf]
        %v683 = vld [vmem:[%s216 + $0x6c0] sm:$0xf]
        %v684 = vld [vmem:[%s216 + $0x6c4] sm:$0xf]
        %v685 = vld [vmem:[%s216 + $0x6c8] sm:$0xf]
        %v686 = vld [vmem:[%s216 + $0x6cc] sm:$0xf]
        %v687 = vld [vmem:[%s216 + $0x6d0] sm:$0xf]
        %v688 = vld [vmem:[%s216 + $0x6d4] sm:$0xf]
        %v689 = vld [vmem:[%s216 + $0x6d8] sm:$0xf]
        %v690 = vld [vmem:[%s216 + $0x6dc] sm:$0xf]
        %v691 = vld [vmem:[%s216 + $0x6e0] sm:$0xf]
        %v692 = vld [vmem:[%s216 + $0x6e4] sm:$0xf]
        %v693 = vld [vmem:[%s216 + $0x6e8] sm:$0xf]
        %v694 = vld [vmem:[%s216 + $0x6ec] sm:$0xf]
        %v695 = vld [vmem:[%s216 + $0x6f0] sm:$0xf]
        %v696 = vld [vmem:[%s216 + $0x6f4] sm:$0xf]
        %v697 = vld [vmem:[%s216 + $0x6f8] sm:$0xf]
        %v698 = vld [vmem:[%s216 + $0x6fc] sm:$0xf]
        %v699 = vld [vmem:[%s216 + $0x700] sm:$0xf]
        %v700 = vld [vmem:[%s216 + $0x704] sm:$0xf]
        %v701 = vld [vmem:[%s216 + $0x708] sm:$0xf]
        %v702 = vld [vmem:[%s216 + $0x70c] sm:$0xf]
        %v703 = vld [vmem:[%s216 + $0x710] sm:$0xf]
        %v704 = vld [vmem:[%s216 + $0x714] sm:$0xf]
        %v705 = vld [vmem:[%s216 + $0x718] sm:$0xf]
        %v706 = vld [vmem:[%s216 + $0x71c] sm:$0xf]
        %v707 = vld [vmem:[%s216 + $0x720] sm:$0xf]
        %v708 = vld [vmem:[%s216 + $0x724] sm:$0xf]
        %v709 = vld [vmem:[%s216 + $0x728] sm:$0xf]
        %v710 = vld [vmem:[%s216 + $0x72c] sm:$0xf]
        %v711 = vld [vmem:[%s216 + $0x730] sm:$0xf]
        %v712 = vld [vmem:[%s216 + $0x734] sm:$0xf]
        %v713 = vld [vmem:[%s216 + $0x738] sm:$0xf]
        %v714 = vld [vmem:[%s216 + $0x73c] sm:$0xf]
        %v715 = vld [vmem:[%s216 + $0x740] sm:$0xf]
        %v716 = vld [vmem:[%s216 + $0x744] sm:$0xf]
        %v717 = vld [vmem:[%s216 + $0x748] sm:$0xf]
        %v718 = vld [vmem:[%s216 + $0x74c] sm:$0xf]
        %v719 = vld [vmem:[%s216 + $0x750] sm:$0xf]
        %v720 = vld [vmem:[%s216 + $0x754] sm:$0xf]
        %v721 = vld [vmem:[%s216 + $0x758] sm:$0xf]
        %v722 = vld [vmem:[%s216 + $0x75c] sm:$0xf]
        %v723 = vld [vmem:[%s216 + $0x760] sm:$0xf]
        %v724 = vld [vmem:[%s216 + $0x764] sm:$0xf]
        %v725 = vld [vmem:[%s216 + $0x768] sm:$0xf]
        %v726 = vld [vmem:[%s216 + $0x76c] sm:$0xf]
        %v727 = vld [vmem:[%s216 + $0x770] sm:$0xf]
        %v728 = vld [vmem:[%s216 + $0x774] sm:$0xf]
        %v729 = vld [vmem:[%s216 + $0x778] sm:$0xf]
        %v730 = vld [vmem:[%s216 + $0x77c] sm:$0xf]
        %v731 = vld [vmem:[%s216 + $0x780] sm:$0xf]
        %v732 = vld [vmem:[%s216 + $0x784] sm:$0xf]
        %v733 = vld [vmem:[%s216 + $0x788] sm:$0xf]
        %v734 = vld [vmem:[%s216 + $0x78c] sm:$0xf]
        %v735 = vld [vmem:[%s216 + $0x790] sm:$0xf]
        %v736 = vld [vmem:[%s216 + $0x794] sm:$0xf]
        %v737 = vld [vmem:[%s216 + $0x798] sm:$0xf]
        %v738 = vld [vmem:[%s216 + $0x79c] sm:$0xf]
        %v739 = vld [vmem:[%s216 + $0x7a0] sm:$0xf]
        %v740 = vld [vmem:[%s216 + $0x7a4] sm:$0xf]
        %v741 = vld [vmem:[%s216 + $0x7a8] sm:$0xf]
        %v742 = vld [vmem:[%s216 + $0x7ac] sm:$0xf]
        %v743 = vld [vmem:[%s216 + $0x7b0] sm:$0xf]
        %v744 = vld [vmem:[%s216 + $0x7b4] sm:$0xf]
        %v745 = vld [vmem:[%s216 + $0x7b8] sm:$0xf]
        %v746 = vld [vmem:[%s216 + $0x7bc] sm:$0xf]
        %v747 = vld [vmem:[%s216 + $0x7c0] sm:$0xf]
        %v748 = vld [vmem:[%s216 + $0x7c4] sm:$0xf]
        %v749 = vld [vmem:[%s216 + $0x7c8] sm:$0xf]
        %v750 = vld [vmem:[%s216 + $0x7cc] sm:$0xf]
        %v751 = vld [vmem:[%s216 + $0x7d0] sm:$0xf]
        %v752 = vld [vmem:[%s216 + $0x7d4] sm:$0xf]
        %v753 = vld [vmem:[%s216 + $0x7d8] sm:$0xf]
        %v754 = vld [vmem:[%s216 + $0x7dc] sm:$0xf]
        %v755 = vld [vmem:[%s216 + $0x7e0] sm:$0xf]
        %v756 = vld [vmem:[%s216 + $0x7e4] sm:$0xf]
        %v757 = vld [vmem:[%s216 + $0x7e8] sm:$0xf]
        %v758 = vld [vmem:[%s216 + $0x7ec] sm:$0xf]
        %v759 = vld [vmem:[%s216 + $0x7f0] sm:$0xf]
        %v760 = vld [vmem:[%s216 + $0x7f4] sm:$0xf]
        %v761 = vld [vmem:[%s216 + $0x7f8] sm:$0xf]
        %v762 = vld [vmem:[%s216 + $0x7fc] sm:$0xf]
        %v763 = vld [vmem:[%s216 + $0x800] sm:$0xf]
        %v764 = vld [vmem:[%s216 + $0x804] sm:$0xf]
        %v765 = vld [vmem:[%s216 + $0x808] sm:$0xf]
        %v766 = vld [vmem:[%s216 + $0x80c] sm:$0xf]
        %v767 = vld [vmem:[%s216 + $0x810] sm:$0xf]
        %v768 = vld [vmem:[%s216 + $0x814] sm:$0xf]
        %v769 = vld [vmem:[%s216 + $0x818] sm:$0xf]
        %v770 = vld [vmem:[%s216 + $0x81c] sm:$0xf]
        %v771 = vld [vmem:[%s216 + $0x820] sm:$0xf]
        %v772 = vld [vmem:[%s216 + $0x824] sm:$0xf]
        %v773 = vld [vmem:[%s216 + $0x828] sm:$0xf]
        %v774 = vld [vmem:[%s216 + $0x82c] sm:$0xf]
        %v775 = vld [vmem:[%s216 + $0x830] sm:$0xf]
        %v776 = vld [vmem:[%s216 + $0x834] sm:$0xf]
        %v777 = vld [vmem:[%s216 + $0x838] sm:$0xf]
        %v778 = vld [vmem:[%s216 + $0x83c] sm:$0xf]
        %v779 = vld [vmem:[%s216 + $0x840] sm:$0xf]
        %v780 = vld [vmem:[%s216 + $0x844] sm:$0xf]
        %v781 = vld [vmem:[%s216 + $0x848] sm:$0xf]
        %v782 = vld [vmem:[%s216 + $0x84c] sm:$0xf]
        %v783 = vld [vmem:[%s216 + $0x850] sm:$0xf]
        %v784 = vld [vmem:[%s216 + $0x854] sm:$0xf]
        %v785 = vld [vmem:[%s216 + $0x858] sm:$0xf]
        %v786 = vld [vmem:[%s216 + $0x85c] sm:$0xf]
        %v787 = vld [vmem:[%s216 + $0x860] sm:$0xf]
        %v788 = vld [vmem:[%s216 + $0x864] sm:$0xf]
        %v789 = vld [vmem:[%s216 + $0x868] sm:$0xf]
        %v790 = vld [vmem:[%s216 + $0x86c] sm:$0xf]
        %v791 = vld [vmem:[%s216 + $0x870] sm:$0xf]
        %v792 = vld [vmem:[%s216 + $0x874] sm:$0xf]
        %v793 = vld [vmem:[%s216 + $0x878] sm:$0xf]
        %v794 = vld [vmem:[%s216 + $0x87c] sm:$0xf]
        %v795 = vld [vmem:[%s216 + $0x880] sm:$0xf]
        %v796 = vld [vmem:[%s216 + $0x884] sm:$0xf]
        %v797 = vld [vmem:[%s216 + $0x888] sm:$0xf]
        %v798 = vld [vmem:[%s216 + $0x88c] sm:$0xf]
        %v799 = vld [vmem:[%s216 + $0x890] sm:$0xf]
        %v800 = vld [vmem:[%s216 + $0x894] sm:$0xf]
        %v801 = vld [vmem:[%s216 + $0x898] sm:$0xf]
        %v802 = vld [vmem:[%s216 + $0x89c] sm:$0xf]
        %v803 = vld [vmem:[%s216 + $0x8a0] sm:$0xf]
        %v804 = vld [vmem:[%s216 + $0x8a4] sm:$0xf]
        %v805 = vld [vmem:[%s216 + $0x8a8] sm:$0xf]
        %v806 = vld [vmem:[%s216 + $0x8ac] sm:$0xf]
        %v807 = vld [vmem:[%s216 + $0x8b0] sm:$0xf]
        %v808 = vld [vmem:[%s216 + $0x8b4] sm:$0xf]
        %v809 = vld [vmem:[%s216 + $0x8b8] sm:$0xf]
        %v810 = vld [vmem:[%s216 + $0x8bc] sm:$0xf]
        %v811 = vld [vmem:[%s216 + $0x8c0] sm:$0xf]
        %v812 = vld [vmem:[%s216 + $0x8c4] sm:$0xf]
        %v813 = vld [vmem:[%s216 + $0x8c8] sm:$0xf]
        %v814 = vld [vmem:[%s216 + $0x8cc] sm:$0xf]
        %v815 = vld [vmem:[%s216 + $0x8d0] sm:$0xf]
        %v816 = vld [vmem:[%s216 + $0x8d4] sm:$0xf]
        %v817 = vld [vmem:[%s216 + $0x8d8] sm:$0xf]
        %v818 = vld [vmem:[%s216 + $0x8dc] sm:$0xf]
        %v819 = vld [vmem:[%s216 + $0x8e0] sm:$0xf]
        %v820 = vld [vmem:[%s216 + $0x8e4] sm:$0xf]
        %v821 = vld [vmem:[%s216 + $0x8e8] sm:$0xf]
        %v822 = vld [vmem:[%s216 + $0x8ec] sm:$0xf]
        %v823 = vld [vmem:[%s216 + $0x8f0] sm:$0xf]
        %v824 = vld [vmem:[%s216 + $0x8f4] sm:$0xf]
        %v825 = vld [vmem:[%s216 + $0x8f8] sm:$0xf]
        %v826 = vld [vmem:[%s216 + $0x8fc] sm:$0xf]
        %v827 = vld [vmem:[%s216 + $0x900] sm:$0xf]
        %v828 = vld [vmem:[%s216 + $0x904] sm:$0xf]
        %v829 = vld [vmem:[%s216 + $0x908] sm:$0xf]
        %v830 = vld [vmem:[%s216 + $0x90c] sm:$0xf]
        %v831 = vld [vmem:[%s216 + $0x910] sm:$0xf]
        %v832 = vld [vmem:[%s216 + $0x914] sm:$0xf]
        %v833 = vld [vmem:[%s216 + $0x918] sm:$0xf]
        %v834 = vld [vmem:[%s216 + $0x91c] sm:$0xf]
        %v835 = vld [vmem:[%s216 + $0x920] sm:$0xf]
        %v836 = vld [vmem:[%s216 + $0x924] sm:$0xf]
        %v837 = vld [vmem:[%s216 + $0x928] sm:$0xf]
        %v838 = vld [vmem:[%s216 + $0x92c] sm:$0xf]
        %v839 = vld [vmem:[%s216 + $0x930] sm:$0xf]
        %v840 = vld [vmem:[%s216 + $0x934] sm:$0xf]
        %v841 = vld [vmem:[%s216 + $0x938] sm:$0xf]
        %v842 = vld [vmem:[%s216 + $0x93c] sm:$0xf]
        %v843 = vld [vmem:[%s216 + $0x940] sm:$0xf]
        %v844 = vld [vmem:[%s216 + $0x944] sm:$0xf]
        %v845 = vld [vmem:[%s216 + $0x948] sm:$0xf]
        %v846 = vld [vmem:[%s216 + $0x94c] sm:$0xf]
        %v847 = vld [vmem:[%s216 + $0x950] sm:$0xf]
        %v848 = vld [vmem:[%s216 + $0x954] sm:$0xf]
        %v849 = vld [vmem:[%s216 + $0x958] sm:$0xf]
        %v850 = vld [vmem:[%s216 + $0x95c] sm:$0xf]
        %v851 = vld [vmem:[%s216 + $0x960] sm:$0xf]
        %v852 = vld [vmem:[%s216 + $0x964] sm:$0xf]
        %v853 = vld [vmem:[%s216 + $0x968] sm:$0xf]
        %v854 = vld [vmem:[%s216 + $0x96c] sm:$0xf]
        %v855 = vld [vmem:[%s216 + $0x970] sm:$0xf]
        %v856 = vld [vmem:[%s216 + $0x974] sm:$0xf]
        %v857 = vld [vmem:[%s216 + $0x978] sm:$0xf]
        %v858 = vld [vmem:[%s216 + $0x97c] sm:$0xf]
        %v859 = vld [vmem:[%s216 + $0x980] sm:$0xf]
        %v860 = vld [vmem:[%s216 + $0x984] sm:$0xf]
        %v861 = vld [vmem:[%s216 + $0x988] sm:$0xf]
        %v862 = vld [vmem:[%s216 + $0x98c] sm:$0xf]
        %v863 = vld [vmem:[%s216 + $0x990] sm:$0xf]
        %v864 = vld [vmem:[%s216 + $0x994] sm:$0xf]
        %v865 = vld [vmem:[%s216 + $0x998] sm:$0xf]
        %v866 = vld [vmem:[%s216 + $0x99c] sm:$0xf]
        %v867 = vld [vmem:[%s216 + $0x9a0] sm:$0xf]
        %v868 = vld [vmem:[%s216 + $0x9a4] sm:$0xf]
        %v869 = vld [vmem:[%s216 + $0x9a8] sm:$0xf]
        %v870 = vld [vmem:[%s216 + $0x9ac] sm:$0xf]
        %v871 = vld [vmem:[%s216 + $0x9b0] sm:$0xf]
        %v872 = vld [vmem:[%s216 + $0x9b4] sm:$0xf]
        %v873 = vld [vmem:[%s216 + $0x9b8] sm:$0xf]
        %v874 = vld [vmem:[%s216 + $0x9bc] sm:$0xf]
        %v875 = vld [vmem:[%s216 + $0x9c0] sm:$0xf]
        %v876 = vld [vmem:[%s216 + $0x9c4] sm:$0xf]
        %v877 = vld [vmem:[%s216 + $0x9c8] sm:$0xf]
        %v878 = vld [vmem:[%s216 + $0x9cc] sm:$0xf]
        %v879 = vld [vmem:[%s216 + $0x9d0] sm:$0xf]
        %v880 = vld [vmem:[%s216 + $0x9d4] sm:$0xf]
        %v881 = vld [vmem:[%s216 + $0x9d8] sm:$0xf]
        %v882 = vld [vmem:[%s216 + $0x9dc] sm:$0xf]
        %v883 = vld [vmem:[%s216 + $0x9e0] sm:$0xf]
        %v884 = vld [vmem:[%s216 + $0x9e4] sm:$0xf]
        %v885 = vld [vmem:[%s216 + $0x9e8] sm:$0xf]
        %v886 = vld [vmem:[%s216 + $0x9ec] sm:$0xf]
        %v887 = vld [vmem:[%s216 + $0x9f0] sm:$0xf]
        %v888 = vld [vmem:[%s216 + $0x9f4] sm:$0xf]
        %v889 = vld [vmem:[%s216 + $0x9f8] sm:$0xf]
        %v890 = vld [vmem:[%s216 + $0x9fc] sm:$0xf]
        %v891 = vld [vmem:[%s216 + $0xa00] sm:$0xf]
        %v892 = vld [vmem:[%s216 + $0xa04] sm:$0xf]
        %v893 = vld [vmem:[%s216 + $0xa08] sm:$0xf]
        %v894 = vld [vmem:[%s216 + $0xa0c] sm:$0xf]
        %v895 = vld [vmem:[%s216 + $0xa10] sm:$0xf]
        %v896 = vld [vmem:[%s216 + $0xa14] sm:$0xf]
        %v897 = vld [vmem:[%s216 + $0xa18] sm:$0xf]
        %v898 = vld [vmem:[%s216 + $0xa1c] sm:$0xf]
        %v899 = vld [vmem:[%s216 + $0xa20] sm:$0xf]
        %v900 = vld [vmem:[%s216 + $0xa24] sm:$0xf]
        %v901 = vld [vmem:[%s216 + $0xa28] sm:$0xf]
        %v902 = vld [vmem:[%s216 + $0xa2c] sm:$0xf]
        %v903 = vld [vmem:[%s216 + $0xa30] sm:$0xf]
        %v904 = vld [vmem:[%s216 + $0xa34] sm:$0xf]
        %v905 = vld [vmem:[%s216 + $0xa38] sm:$0xf]
        %v906 = vld [vmem:[%s216 + $0xa3c] sm:$0xf]
        %v907 = vld [vmem:[%s216 + $0xa40] sm:$0xf]
        %v908 = vld [vmem:[%s216 + $0xa44] sm:$0xf]
        %v909 = vld [vmem:[%s216 + $0xa48] sm:$0xf]
        %v910 = vld [vmem:[%s216 + $0xa4c] sm:$0xf]
        %v911 = vld [vmem:[%s216 + $0xa50] sm:$0xf]
        %v912 = vld [vmem:[%s216 + $0xa54] sm:$0xf]
        %v913 = vld [vmem:[%s216 + $0xa58] sm:$0xf]
        %v914 = vld [vmem:[%s216 + $0xa5c] sm:$0xf]
        %v915 = vld [vmem:[%s216 + $0xa60] sm:$0xf]
        %v916 = vld [vmem:[%s216 + $0xa64] sm:$0xf]
        %v917 = vld [vmem:[%s216 + $0xa68] sm:$0xf]
        %v918 = vld [vmem:[%s216 + $0xa6c] sm:$0xf]
        %v919 = vld [vmem:[%s216 + $0xa70] sm:$0xf]
        %v920 = vld [vmem:[%s216 + $0xa74] sm:$0xf]
        %v921 = vld [vmem:[%s216 + $0xa78] sm:$0xf]
        %v922 = vld [vmem:[%s216 + $0xa7c] sm:$0xf]
        %v923 = vld [vmem:[%s216 + $0xa80] sm:$0xf]
        %v924 = vld [vmem:[%s216 + $0xa84] sm:$0xf]
        %v925 = vld [vmem:[%s216 + $0xa88] sm:$0xf]
        %v926 = vld [vmem:[%s216 + $0xa8c] sm:$0xf]
        %v927 = vld [vmem:[%s216 + $0xa90] sm:$0xf]
        %v928 = vld [vmem:[%s216 + $0xa94] sm:$0xf]
        %v929 = vld [vmem:[%s216 + $0xa98] sm:$0xf]
        %v930 = vld [vmem:[%s216 + $0xa9c] sm:$0xf]
        %v931 = vld [vmem:[%s216 + $0xaa0] sm:$0xf]
        %v932 = vld [vmem:[%s216 + $0xaa4] sm:$0xf]
        %v933 = vld [vmem:[%s216 + $0xaa8] sm:$0xf]
        %v934 = vld [vmem:[%s216 + $0xaac] sm:$0xf]
        %v935 = vld [vmem:[%s216 + $0xab0] sm:$0xf]
        %v936 = vld [vmem:[%s216 + $0xab4] sm:$0xf]
        %v937 = vld [vmem:[%s216 + $0xab8] sm:$0xf]
        %v938 = vld [vmem:[%s216 + $0xabc] sm:$0xf]
        %v939 = vld [vmem:[%s216 + $0xac0] sm:$0xf]
        %v940 = vld [vmem:[%s216 + $0xac4] sm:$0xf]
        %v941 = vld [vmem:[%s216 + $0xac8] sm:$0xf]
        %v942 = vld [vmem:[%s216 + $0xacc] sm:$0xf]
        %v943 = vld [vmem:[%s216 + $0xad0] sm:$0xf]
        %v944 = vld [vmem:[%s216 + $0xad4] sm:$0xf]
        %v945 = vld [vmem:[%s216 + $0xad8] sm:$0xf]
        %v946 = vld [vmem:[%s216 + $0xadc] sm:$0xf]
        %v947 = vld [vmem:[%s216 + $0xae0] sm:$0xf]
        %v948 = vld [vmem:[%s216 + $0xae4] sm:$0xf]
        %v949 = vld [vmem:[%s216 + $0xae8] sm:$0xf]
        %v950 = vld [vmem:[%s216 + $0xaec] sm:$0xf]
        %v951 = vld [vmem:[%s216 + $0xaf0] sm:$0xf]
        %v952 = vld [vmem:[%s216 + $0xaf4] sm:$0xf]
        %v953 = vld [vmem:[%s216 + $0xaf8] sm:$0xf]
        %v954 = vld [vmem:[%s216 + $0xafc] sm:$0xf]
        %v955 = vld [vmem:[%s216 + $0xb00] sm:$0xf]
        %v956 = vld [vmem:[%s216 + $0xb04] sm:$0xf]
        %v957 = vld [vmem:[%s216 + $0xb08] sm:$0xf]
        %v958 = vld [vmem:[%s216 + $0xb0c] sm:$0xf]
        %v959 = vld [vmem:[%s216 + $0xb10] sm:$0xf]
        %v960 = vld [vmem:[%s216 + $0xb14] sm:$0xf]
        %v961 = vld [vmem:[%s216 + $0xb18] sm:$0xf]
        %v962 = vld [vmem:[%s216 + $0xb1c] sm:$0xf]
        %v963 = vld [vmem:[%s216 + $0xb20] sm:$0xf]
        %v964 = vld [vmem:[%s216 + $0xb24] sm:$0xf]
        %v965 = vld [vmem:[%s216 + $0xb28] sm:$0xf]
        %v966 = vld [vmem:[%s216 + $0xb2c] sm:$0xf]
        %v967 = vld [vmem:[%s216 + $0xb30] sm:$0xf]
        %v968 = vld [vmem:[%s216 + $0xb34] sm:$0xf]
        %v969 = vld [vmem:[%s216 + $0xb38] sm:$0xf]
        %v970 = vld [vmem:[%s216 + $0xb3c] sm:$0xf]
        %v971 = vld [vmem:[%s216 + $0xb40] sm:$0xf]
        %v972 = vld [vmem:[%s216 + $0xb44] sm:$0xf]
        %v973 = vld [vmem:[%s216 + $0xb48] sm:$0xf]
        %v974 = vld [vmem:[%s216 + $0xb4c] sm:$0xf]
        %v975 = vld [vmem:[%s216 + $0xb50] sm:$0xf]
        %v976 = vld [vmem:[%s216 + $0xb54] sm:$0xf]
        %v977 = vld [vmem:[%s216 + $0xb58] sm:$0xf]
        %v978 = vld [vmem:[%s216 + $0xb5c] sm:$0xf]
        %v979 = vld [vmem:[%s216 + $0xb60] sm:$0xf]
        %v980 = vld [vmem:[%s216 + $0xb64] sm:$0xf]
        %v981 = vld [vmem:[%s216 + $0xb68] sm:$0xf]
        %v982 = vld [vmem:[%s216 + $0xb6c] sm:$0xf]
        %v983 = vld [vmem:[%s216 + $0xb70] sm:$0xf]
        %v984 = vld [vmem:[%s216 + $0xb74] sm:$0xf]
        %v985 = vld [vmem:[%s216 + $0xb78] sm:$0xf]
        %v986 = vld [vmem:[%s216 + $0xb7c] sm:$0xf]
        %v987 = vld [vmem:[%s216 + $0xb80] sm:$0xf]
        %v988 = vld [vmem:[%s216 + $0xb84] sm:$0xf]
        %v989 = vld [vmem:[%s216 + $0xb88] sm:$0xf]
        %v990 = vld [vmem:[%s216 + $0xb8c] sm:$0xf]
        %v991 = vld [vmem:[%s216 + $0xb90] sm:$0xf]
        %v992 = vld [vmem:[%s216 + $0xb94] sm:$0xf]
        %v993 = vld [vmem:[%s216 + $0xb98] sm:$0xf]
        %v994 = vld [vmem:[%s216 + $0xb9c] sm:$0xf]
        %v995 = vld [vmem:[%s216 + $0xba0] sm:$0xf]
        %v996 = vld [vmem:[%s216 + $0xba4] sm:$0xf]
        %v997 = vld [vmem:[%s216 + $0xba8] sm:$0xf]
        %v998 = vld [vmem:[%s216 + $0xbac] sm:$0xf]
        %v999 = vld [vmem:[%s216 + $0xbb0] sm:$0xf]
        %v1000 = vld [vmem:[%s216 + $0xbb4] sm:$0xf]
        %v1001 = vld [vmem:[%s216 + $0xbb8] sm:$0xf]
        %v1002 = vld [vmem:[%s216 + $0xbbc] sm:$0xf]
        %v1003 = vld [vmem:[%s216 + $0xbc0] sm:$0xf]
        %v1004 = vld [vmem:[%s216 + $0xbc4] sm:$0xf]
        %v1005 = vld [vmem:[%s216 + $0xbc8] sm:$0xf]
        %v1006 = vld [vmem:[%s216 + $0xbcc] sm:$0xf]
        %v1007 = vld [vmem:[%s216 + $0xbd0] sm:$0xf]
        %v1008 = vld [vmem:[%s216 + $0xbd4] sm:$0xf]
        %v1009 = vld [vmem:[%s216 + $0xbd8] sm:$0xf]
        %v1010 = vld [vmem:[%s216 + $0xbdc] sm:$0xf]
        %v1011 = vld [vmem:[%s216 + $0xbe0] sm:$0xf]
        %v1012 = vld [vmem:[%s216 + $0xbe4] sm:$0xf]
        %v1013 = vld [vmem:[%s216 + $0xbe8] sm:$0xf]
        %v1014 = vld [vmem:[%s216 + $0xbec] sm:$0xf]
        %v1015 = vld [vmem:[%s216 + $0xbf0] sm:$0xf]
        %v1016 = vld [vmem:[%s216 + $0xbf4] sm:$0xf]
        %v1017 = vld [vmem:[%s216 + $0xbf8] sm:$0xf]
        %v1018 = vld [vmem:[%s216 + $0xbfc] sm:$0xf]
        %v1019 = vld [vmem:[%s216 + $0xc00] sm:$0xf]
        %v1020 = vld [vmem:[%s216 + $0xc04] sm:$0xf]
        %v1021 = vld [vmem:[%s216 + $0xc08] sm:$0xf]
        %v1022 = vld [vmem:[%s216 + $0xc0c] sm:$0xf]
        %v1023 = vld [vmem:[%s216 + $0xc10] sm:$0xf]
        %v1024 = vld [vmem:[%s216 + $0xc14] sm:$0xf]
        %v1025 = vld [vmem:[%s216 + $0xc18] sm:$0xf]
        %v1026 = vld [vmem:[%s216 + $0xc1c] sm:$0xf]
        %v1027 = vld [vmem:[%s216 + $0xc20] sm:$0xf]
        %v1028 = vld [vmem:[%s216 + $0xc24] sm:$0xf]
        %v1029 = vld [vmem:[%s216 + $0xc28] sm:$0xf]
        %v1030 = vld [vmem:[%s216 + $0xc2c] sm:$0xf]
        %v1031 = vld [vmem:[%s216 + $0xc30] sm:$0xf]
        %v1032 = vld [vmem:[%s216 + $0xc34] sm:$0xf]
        %v1033 = vld [vmem:[%s216 + $0xc38] sm:$0xf]
        %v1034 = vld [vmem:[%s216 + $0xc3c] sm:$0xf]
        %v1035 = vld [vmem:[%s216 + $0xc40] sm:$0xf]
        %v1036 = vld [vmem:[%s216 + $0xc44] sm:$0xf]
        %v1037 = vld [vmem:[%s216 + $0xc48] sm:$0xf]
        %v1038 = vld [vmem:[%s216 + $0xc4c] sm:$0xf]
        %v1039 = vld [vmem:[%s216 + $0xc50] sm:$0xf]
        %v1040 = vld [vmem:[%s216 + $0xc54] sm:$0xf]
        %v1041 = vld [vmem:[%s216 + $0xc58] sm:$0xf]
        %v1042 = vld [vmem:[%s216 + $0xc5c] sm:$0xf]
        %v1043 = vld [vmem:[%s216 + $0xc60] sm:$0xf]
        %v1044 = vld [vmem:[%s216 + $0xc64] sm:$0xf]
        %v1045 = vld [vmem:[%s216 + $0xc68] sm:$0xf]
        %v1046 = vld [vmem:[%s216 + $0xc6c] sm:$0xf]
        %v1047 = vld [vmem:[%s216 + $0xc70] sm:$0xf]
        %v1048 = vld [vmem:[%s216 + $0xc74] sm:$0xf]
        %v1049 = vld [vmem:[%s216 + $0xc78] sm:$0xf]
        %v1050 = vld [vmem:[%s216 + $0xc7c] sm:$0xf]
        %v1076 = vunpack.c.l.b16 %v226
        %v1077 = vunpack.c.h.b16 %v226
        %v1078 = vunpack.c.l.b16 %v227
        %v1079 = vunpack.c.h.b16 %v227
        %v1080 = vunpack.c.l.b16 %v228
        %v1081 = vunpack.c.h.b16 %v228
        %v1082 = vunpack.c.l.b16 %v229
        %v1083 = vunpack.c.h.b16 %v229
        %v1084 = vunpack.c.l.b16 %v230
        %v1085 = vunpack.c.h.b16 %v230
        %v1086 = vunpack.c.l.b16 %v231
        %v1087 = vunpack.c.h.b16 %v231
        %v1088 = vunpack.c.l.b16 %v232
        %v1089 = vunpack.c.h.b16 %v232
        %v1090 = vunpack.c.l.b16 %v233
        %v1091 = vunpack.c.h.b16 %v233
        %v1092 = vunpack.c.l.b16 %v234
        %v1093 = vunpack.c.h.b16 %v234
        %v1094 = vunpack.c.l.b16 %v235
        %v1095 = vunpack.c.h.b16 %v235
        %v1096 = vunpack.c.l.b16 %v236
        %v1097 = vunpack.c.h.b16 %v236
        %v1098 = vunpack.c.l.b16 %v237
        %v1099 = vunpack.c.h.b16 %v237
        %v1100 = vunpack.c.l.b16 %v238
        %v1101 = vunpack.c.h.b16 %v238
        %v1102 = vunpack.c.l.b16 %v239
        %v1103 = vunpack.c.h.b16 %v239
        %v1104 = vunpack.c.l.b16 %v240
        %v1105 = vunpack.c.h.b16 %v240
        %v1106 = vunpack.c.l.b16 %v241
        %v1107 = vunpack.c.h.b16 %v241
        %v1108 = vunpack.c.l.b16 %v242
        %v1109 = vunpack.c.h.b16 %v242
        %v1110 = vunpack.c.l.b16 %v243
        %v1111 = vunpack.c.h.b16 %v243
        %v1112 = vunpack.c.l.b16 %v244
        %v1113 = vunpack.c.h.b16 %v244
        %v1114 = vunpack.c.l.b16 %v245
        %v1115 = vunpack.c.h.b16 %v245
        %v1116 = vunpack.c.l.b16 %v246
        %v1117 = vunpack.c.h.b16 %v246
        %v1118 = vunpack.c.l.b16 %v247
        %v1119 = vunpack.c.h.b16 %v247
        %v1120 = vunpack.c.l.b16 %v248
        %v1121 = vunpack.c.h.b16 %v248
        %v1122 = vunpack.c.l.b16 %v249
        %v1123 = vunpack.c.h.b16 %v249
        %v1124 = vunpack.c.l.b16 %v250
        %v1125 = vunpack.c.h.b16 %v250
        %v1126 = vpack.c.b16 %v1076, %v1076
        %v1127 = vpack.c.b16 %v1077, %v1077
        %v1128 = vpack.c.b16 %v1078, %v1078
        %v1129 = vpack.c.b16 %v1079, %v1079
        %v1130 = vpack.c.b16 %v1080, %v1080
        %v1131 = vpack.c.b16 %v1081, %v1081
        %v1132 = vpack.c.b16 %v1082, %v1082
        %v1133 = vpack.c.b16 %v1083, %v1083
        %v1134 = vpack.c.b16 %v1084, %v1084
        %v1135 = vpack.c.b16 %v1085, %v1085
        %v1136 = vpack.c.b16 %v1086, %v1086
        %v1137 = vpack.c.b16 %v1087, %v1087
        %v1138 = vpack.c.b16 %v1088, %v1088
        %v1139 = vpack.c.b16 %v1089, %v1089
        %v1140 = vpack.c.b16 %v1090, %v1090
        %v1141 = vpack.c.b16 %v1091, %v1091
        %v1142 = vpack.c.b16 %v1092, %v1092
        %v1143 = vpack.c.b16 %v1093, %v1093
        %v1144 = vpack.c.b16 %v1094, %v1094
        %v1145 = vpack.c.b16 %v1095, %v1095
        %v1146 = vpack.c.b16 %v1096, %v1096
        %v1147 = vpack.c.b16 %v1097, %v1097
        %v1148 = vpack.c.b16 %v1098, %v1098
        %v1149 = vpack.c.b16 %v1099, %v1099
        %v1150 = vpack.c.b16 %v1100, %v1100
        %v1151 = vpack.c.b16 %v1101, %v1101
        %v1152 = vpack.c.b16 %v1102, %v1102
        %v1153 = vpack.c.b16 %v1103, %v1103
        %v1154 = vpack.c.b16 %v1104, %v1104
        %v1155 = vpack.c.b16 %v1105, %v1105
        %v1156 = vpack.c.b16 %v1106, %v1106
        %v1157 = vpack.c.b16 %v1107, %v1107
        %v1158 = vpack.c.b16 %v1108, %v1108
        %v1159 = vpack.c.b16 %v1109, %v1109
        %v1160 = vpack.c.b16 %v1110, %v1110
        %v1161 = vpack.c.b16 %v1111, %v1111
        %v1162 = vpack.c.b16 %v1112, %v1112
        %v1163 = vpack.c.b16 %v1113, %v1113
        %v1164 = vpack.c.b16 %v1114, %v1114
        %v1165 = vpack.c.b16 %v1115, %v1115
        %v1166 = vpack.c.b16 %v1116, %v1116
        %v1167 = vpack.c.b16 %v1117, %v1117
        %v1168 = vpack.c.b16 %v1118, %v1118
        %v1169 = vpack.c.b16 %v1119, %v1119
        %v1170 = vpack.c.b16 %v1120, %v1120
        %v1171 = vpack.c.b16 %v1121, %v1121
        %v1172 = vpack.c.b16 %v1122, %v1122
        %v1173 = vpack.c.b16 %v1123, %v1123
        %v1174 = vpack.c.b16 %v1124, %v1124
        %v1175 = vpack.c.b16 %v1125, %v1125
        %v2026 = vunpack.c.l.b16 %v251
        %v2027 = vunpack.c.l.b16 %v252
        %v2028 = vunpack.c.l.b16 %v253
        %v2029 = vunpack.c.l.b16 %v254
        %v2030 = vunpack.c.l.b16 %v255
        %v2031 = vunpack.c.l.b16 %v256
        %v2032 = vunpack.c.l.b16 %v257
        %v2033 = vunpack.c.l.b16 %v258
        %v2034 = vunpack.c.l.b16 %v259
        %v2035 = vunpack.c.l.b16 %v260
        %v2036 = vunpack.c.l.b16 %v261
        %v2037 = vunpack.c.l.b16 %v262
        %v2038 = vunpack.c.l.b16 %v263
        %v2039 = vunpack.c.l.b16 %v264
        %v2040 = vunpack.c.l.b16 %v265
        %v2041 = vunpack.c.l.b16 %v266
        %v2042 = vunpack.c.l.b16 %v267
        %v2043 = vunpack.c.l.b16 %v268
        %v2044 = vunpack.c.l.b16 %v269
        %v2045 = vunpack.c.l.b16 %v270
        %v2046 = vunpack.c.l.b16 %v271
        %v2047 = vunpack.c.l.b16 %v272
        %v2048 = vunpack.c.l.b16 %v273
        %v2049 = vunpack.c.l.b16 %v274
        %v2050 = vunpack.c.l.b16 %v275
        %v2051 = vunpack.c.l.b16 %v276
        %v2052 = vunpack.c.l.b16 %v277
        %v2053 = vunpack.c.l.b16 %v278
        %v2054 = vunpack.c.l.b16 %v279
        %v2055 = vunpack.c.l.b16 %v280
        %v2056 = vunpack.c.l.b16 %v281
        %v2057 = vunpack.c.l.b16 %v282
        %v2058 = vunpack.c.l.b16 %v283
        %v2059 = vunpack.c.l.b16 %v284
        %v2060 = vunpack.c.l.b16 %v285
        %v2061 = vunpack.c.l.b16 %v286
        %v2062 = vunpack.c.l.b16 %v287
        %v2063 = vunpack.c.l.b16 %v288
        %v2064 = vunpack.c.l.b16 %v289
        %v2065 = vunpack.c.l.b16 %v290
        %v2066 = vunpack.c.l.b16 %v291
        %v2067 = vunpack.c.l.b16 %v292
        %v2068 = vunpack.c.l.b16 %v293
        %v2069 = vunpack.c.l.b16 %v294
        %v2070 = vunpack.c.l.b16 %v295
        %v2071 = vunpack.c.l.b16 %v296
        %v2072 = vunpack.c.l.b16 %v297
        %v2073 = vunpack.c.l.b16 %v298
        %v2074 = vunpack.c.l.b16 %v299
        %v2075 = vunpack.c.l.b16 %v300
        %v2076 = vunpack.c.l.b16 %v301
        %v2077 = vunpack.c.l.b16 %v302
        %v2078 = vunpack.c.l.b16 %v303
        %v2079 = vunpack.c.l.b16 %v304
        %v2080 = vunpack.c.l.b16 %v305
        %v2081 = vunpack.c.l.b16 %v306
        %v2082 = vunpack.c.l.b16 %v307
        %v2083 = vunpack.c.l.b16 %v308
        %v2084 = vunpack.c.l.b16 %v309
        %v2085 = vunpack.c.l.b16 %v310
        %v2086 = vunpack.c.l.b16 %v311
        %v2087 = vunpack.c.l.b16 %v312
        %v2088 = vunpack.c.l.b16 %v313
        %v2089 = vunpack.c.l.b16 %v314
        %v2090 = vunpack.c.l.b16 %v315
        %v2091 = vunpack.c.l.b16 %v316
        %v2092 = vunpack.c.l.b16 %v317
        %v2093 = vunpack.c.l.b16 %v318
        %v2094 = vunpack.c.l.b16 %v319
        %v2095 = vunpack.c.l.b16 %v320
        %v2096 = vunpack.c.l.b16 %v321
        %v2097 = vunpack.c.l.b16 %v322
        %v2098 = vunpack.c.l.b16 %v323
        %v2099 = vunpack.c.l.b16 %v324
        %v2100 = vunpack.c.l.b16 %v325
        %v2101 = vunpack.c.l.b16 %v326
        %v2102 = vunpack.c.l.b16 %v327
        %v2103 = vunpack.c.l.b16 %v328
        %v2104 = vunpack.c.l.b16 %v329
        %v2105 = vunpack.c.l.b16 %v330
        %v2106 = vunpack.c.l.b16 %v331
        %v2107 = vunpack.c.l.b16 %v332
        %v2108 = vunpack.c.l.b16 %v333
        %v2109 = vunpack.c.l.b16 %v334
        %v2110 = vunpack.c.l.b16 %v335
        %v2111 = vunpack.c.l.b16 %v336
        %v2112 = vunpack.c.l.b16 %v337
        %v2113 = vunpack.c.l.b16 %v338
        %v2114 = vunpack.c.l.b16 %v339
        %v2115 = vunpack.c.l.b16 %v340
        %v2116 = vunpack.c.l.b16 %v341
        %v2117 = vunpack.c.l.b16 %v342
        %v2118 = vunpack.c.l.b16 %v343
        %v2119 = vunpack.c.l.b16 %v344
        %v2120 = vunpack.c.l.b16 %v345
        %v2121 = vunpack.c.l.b16 %v346
        %v2122 = vunpack.c.l.b16 %v347
        %v2123 = vunpack.c.l.b16 %v348
        %v2124 = vunpack.c.l.b16 %v349
        %v2125 = vunpack.c.l.b16 %v350
        %v2126 = vunpack.c.l.b16 %v351
        %v2127 = vunpack.c.l.b16 %v352
        %v2128 = vunpack.c.l.b16 %v353
        %v2129 = vunpack.c.l.b16 %v354
        %v2130 = vunpack.c.l.b16 %v355
        %v2131 = vunpack.c.l.b16 %v356
        %v2132 = vunpack.c.l.b16 %v357
        %v2133 = vunpack.c.l.b16 %v358
        %v2134 = vunpack.c.l.b16 %v359
        %v2135 = vunpack.c.l.b16 %v360
        %v2136 = vunpack.c.l.b16 %v361
        %v2137 = vunpack.c.l.b16 %v362
        %v2138 = vunpack.c.l.b16 %v363
        %v2139 = vunpack.c.l.b16 %v364
        %v2140 = vunpack.c.l.b16 %v365
        %v2141 = vunpack.c.l.b16 %v366
        %v2142 = vunpack.c.l.b16 %v367
        %v2143 = vunpack.c.l.b16 %v368
        %v2144 = vunpack.c.l.b16 %v369
        %v2145 = vunpack.c.l.b16 %v370
        %v2146 = vunpack.c.l.b16 %v371
        %v2147 = vunpack.c.l.b16 %v372
        %v2148 = vunpack.c.l.b16 %v373
        %v2149 = vunpack.c.l.b16 %v374
        %v2150 = vunpack.c.l.b16 %v375
        %v2151 = vunpack.c.l.b16 %v376
        %v2152 = vunpack.c.l.b16 %v377
        %v2153 = vunpack.c.l.b16 %v378
        %v2154 = vunpack.c.l.b16 %v379
        %v2155 = vunpack.c.l.b16 %v380
        %v2156 = vunpack.c.l.b16 %v381
        %v2157 = vunpack.c.l.b16 %v382
        %v2158 = vunpack.c.l.b16 %v383
        %v2159 = vunpack.c.l.b16 %v384
        %v2160 = vunpack.c.l.b16 %v385
        %v2161 = vunpack.c.l.b16 %v386
        %v2162 = vunpack.c.l.b16 %v387
        %v2163 = vunpack.c.l.b16 %v388
        %v2164 = vunpack.c.l.b16 %v389
        %v2165 = vunpack.c.l.b16 %v390
        %v2166 = vunpack.c.l.b16 %v391
        %v2167 = vunpack.c.l.b16 %v392
        %v2168 = vunpack.c.l.b16 %v393
        %v2169 = vunpack.c.l.b16 %v394
        %v2170 = vunpack.c.l.b16 %v395
        %v2171 = vunpack.c.l.b16 %v396
        %v2172 = vunpack.c.l.b16 %v397
        %v2173 = vunpack.c.l.b16 %v398
        %v2174 = vunpack.c.l.b16 %v399
        %v2175 = vunpack.c.l.b16 %v400
        %v2176 = vunpack.c.l.b16 %v401
        %v2177 = vunpack.c.l.b16 %v402
        %v2178 = vunpack.c.l.b16 %v403
        %v2179 = vunpack.c.l.b16 %v404
        %v2180 = vunpack.c.l.b16 %v405
        %v2181 = vunpack.c.l.b16 %v406
        %v2182 = vunpack.c.l.b16 %v407
        %v2183 = vunpack.c.l.b16 %v408
        %v2184 = vunpack.c.l.b16 %v409
        %v2185 = vunpack.c.l.b16 %v410
        %v2186 = vunpack.c.l.b16 %v411
        %v2187 = vunpack.c.l.b16 %v412
        %v2188 = vunpack.c.l.b16 %v413
        %v2189 = vunpack.c.l.b16 %v414
        %v2190 = vunpack.c.l.b16 %v415
        %v2191 = vunpack.c.l.b16 %v416
        %v2192 = vunpack.c.l.b16 %v417
        %v2193 = vunpack.c.l.b16 %v418
        %v2194 = vunpack.c.l.b16 %v419
        %v2195 = vunpack.c.l.b16 %v420
        %v2196 = vunpack.c.l.b16 %v421
        %v2197 = vunpack.c.l.b16 %v422
        %v2198 = vunpack.c.l.b16 %v423
        %v2199 = vunpack.c.l.b16 %v424
        %v2200 = vunpack.c.l.b16 %v425
        %v2201 = vunpack.c.l.b16 %v426
        %v2202 = vunpack.c.l.b16 %v427
        %v2203 = vunpack.c.l.b16 %v428
        %v2204 = vunpack.c.l.b16 %v429
        %v2205 = vunpack.c.l.b16 %v430
        %v2206 = vunpack.c.l.b16 %v431
        %v2207 = vunpack.c.l.b16 %v432
        %v2208 = vunpack.c.l.b16 %v433
        %v2209 = vunpack.c.l.b16 %v434
        %v2210 = vunpack.c.l.b16 %v435
        %v2211 = vunpack.c.l.b16 %v436
        %v2212 = vunpack.c.l.b16 %v437
        %v2213 = vunpack.c.l.b16 %v438
        %v2214 = vunpack.c.l.b16 %v439
        %v2215 = vunpack.c.l.b16 %v440
        %v2216 = vunpack.c.l.b16 %v441
        %v2217 = vunpack.c.l.b16 %v442
        %v2218 = vunpack.c.l.b16 %v443
        %v2219 = vunpack.c.l.b16 %v444
        %v2220 = vunpack.c.l.b16 %v445
        %v2221 = vunpack.c.l.b16 %v446
        %v2222 = vunpack.c.l.b16 %v447
        %v2223 = vunpack.c.l.b16 %v448
        %v2224 = vunpack.c.l.b16 %v449
        %v2225 = vunpack.c.l.b16 %v450
        %v2226 = vunpack.c.l.b16 %v451
        %v2227 = vunpack.c.l.b16 %v452
        %v2228 = vunpack.c.l.b16 %v453
        %v2229 = vunpack.c.l.b16 %v454
        %v2230 = vunpack.c.l.b16 %v455
        %v2231 = vunpack.c.l.b16 %v456
        %v2232 = vunpack.c.l.b16 %v457
        %v2233 = vunpack.c.l.b16 %v458
        %v2234 = vunpack.c.l.b16 %v459
        %v2235 = vunpack.c.l.b16 %v460
        %v2236 = vunpack.c.l.b16 %v461
        %v2237 = vunpack.c.l.b16 %v462
        %v2238 = vunpack.c.l.b16 %v463
        %v2239 = vunpack.c.l.b16 %v464
        %v2240 = vunpack.c.l.b16 %v465
        %v2241 = vunpack.c.l.b16 %v466
        %v2242 = vunpack.c.l.b16 %v467
        %v2243 = vunpack.c.l.b16 %v468
        %v2244 = vunpack.c.l.b16 %v469
        %v2245 = vunpack.c.l.b16 %v470
        %v2246 = vunpack.c.l.b16 %v471
        %v2247 = vunpack.c.l.b16 %v472
        %v2248 = vunpack.c.l.b16 %v473
        %v2249 = vunpack.c.l.b16 %v474
        %v2250 = vunpack.c.l.b16 %v475
        %v2251 = vunpack.c.l.b16 %v476
        %v2252 = vunpack.c.l.b16 %v477
        %v2253 = vunpack.c.l.b16 %v478
        %v2254 = vunpack.c.l.b16 %v479
        %v2255 = vunpack.c.l.b16 %v480
        %v2256 = vunpack.c.l.b16 %v481
        %v2257 = vunpack.c.l.b16 %v482
        %v2258 = vunpack.c.l.b16 %v483
        %v2259 = vunpack.c.l.b16 %v484
        %v2260 = vunpack.c.l.b16 %v485
        %v2261 = vunpack.c.l.b16 %v486
        %v2262 = vunpack.c.l.b16 %v487
        %v2263 = vunpack.c.l.b16 %v488
        %v2264 = vunpack.c.l.b16 %v489
        %v2265 = vunpack.c.l.b16 %v490
        %v2266 = vunpack.c.l.b16 %v491
        %v2267 = vunpack.c.l.b16 %v492
        %v2268 = vunpack.c.l.b16 %v493
        %v2269 = vunpack.c.l.b16 %v494
        %v2270 = vunpack.c.l.b16 %v495
        %v2271 = vunpack.c.l.b16 %v496
        %v2272 = vunpack.c.l.b16 %v497
        %v2273 = vunpack.c.l.b16 %v498
        %v2274 = vunpack.c.l.b16 %v499
        %v2275 = vunpack.c.l.b16 %v500
        %v2276 = vunpack.c.l.b16 %v501
        %v2277 = vunpack.c.l.b16 %v502
        %v2278 = vunpack.c.l.b16 %v503
        %v2279 = vunpack.c.l.b16 %v504
        %v2280 = vunpack.c.l.b16 %v505
        %v2281 = vunpack.c.l.b16 %v506
        %v2282 = vunpack.c.l.b16 %v507
        %v2283 = vunpack.c.l.b16 %v508
        %v2284 = vunpack.c.l.b16 %v509
        %v2285 = vunpack.c.l.b16 %v510
        %v2286 = vunpack.c.l.b16 %v511
        %v2287 = vunpack.c.l.b16 %v512
        %v2288 = vunpack.c.l.b16 %v513
        %v2289 = vunpack.c.l.b16 %v514
        %v2290 = vunpack.c.l.b16 %v515
        %v2291 = vunpack.c.l.b16 %v516
        %v2292 = vunpack.c.l.b16 %v517
        %v2293 = vunpack.c.l.b16 %v518
        %v2294 = vunpack.c.l.b16 %v519
        %v2295 = vunpack.c.l.b16 %v520
        %v2296 = vunpack.c.l.b16 %v521
        %v2297 = vunpack.c.l.b16 %v522
        %v2298 = vunpack.c.l.b16 %v523
        %v2299 = vunpack.c.l.b16 %v524
        %v2300 = vunpack.c.l.b16 %v525
        %v2301 = vunpack.c.l.b16 %v526
        %v2302 = vunpack.c.l.b16 %v527
        %v2303 = vunpack.c.l.b16 %v528
        %v2304 = vunpack.c.l.b16 %v529
        %v2305 = vunpack.c.l.b16 %v530
        %v2306 = vunpack.c.l.b16 %v531
        %v2307 = vunpack.c.l.b16 %v532
        %v2308 = vunpack.c.l.b16 %v533
        %v2309 = vunpack.c.l.b16 %v534
        %v2310 = vunpack.c.l.b16 %v535
        %v2311 = vunpack.c.l.b16 %v536
        %v2312 = vunpack.c.l.b16 %v537
        %v2313 = vunpack.c.l.b16 %v538
        %v2314 = vunpack.c.l.b16 %v539
        %v2315 = vunpack.c.l.b16 %v540
        %v2316 = vunpack.c.l.b16 %v541
        %v2317 = vunpack.c.l.b16 %v542
        %v2318 = vunpack.c.l.b16 %v543
        %v2319 = vunpack.c.l.b16 %v544
        %v2320 = vunpack.c.l.b16 %v545
        %v2321 = vunpack.c.l.b16 %v546
        %v2322 = vunpack.c.l.b16 %v547
        %v2323 = vunpack.c.l.b16 %v548
        %v2324 = vunpack.c.l.b16 %v549
        %v2325 = vunpack.c.l.b16 %v550
        %v2326 = vunpack.c.l.b16 %v551
        %v2327 = vunpack.c.l.b16 %v552
        %v2328 = vunpack.c.l.b16 %v553
        %v2329 = vunpack.c.l.b16 %v554
        %v2330 = vunpack.c.l.b16 %v555
        %v2331 = vunpack.c.l.b16 %v556
        %v2332 = vunpack.c.l.b16 %v557
        %v2333 = vunpack.c.l.b16 %v558
        %v2334 = vunpack.c.l.b16 %v559
        %v2335 = vunpack.c.l.b16 %v560
        %v2336 = vunpack.c.l.b16 %v561
        %v2337 = vunpack.c.l.b16 %v562
        %v2338 = vunpack.c.l.b16 %v563
        %v2339 = vunpack.c.l.b16 %v564
        %v2340 = vunpack.c.l.b16 %v565
        %v2341 = vunpack.c.l.b16 %v566
        %v2342 = vunpack.c.l.b16 %v567
        %v2343 = vunpack.c.l.b16 %v568
        %v2344 = vunpack.c.l.b16 %v569
        %v2345 = vunpack.c.l.b16 %v570
        %v2346 = vunpack.c.l.b16 %v571
        %v2347 = vunpack.c.l.b16 %v572
        %v2348 = vunpack.c.l.b16 %v573
        %v2349 = vunpack.c.l.b16 %v574
        %v2350 = vunpack.c.l.b16 %v575
        %v2351 = vunpack.c.l.b16 %v576
        %v2352 = vunpack.c.l.b16 %v577
        %v2353 = vunpack.c.l.b16 %v578
        %v2354 = vunpack.c.l.b16 %v579
        %v2355 = vunpack.c.l.b16 %v580
        %v2356 = vunpack.c.l.b16 %v581
        %v2357 = vunpack.c.l.b16 %v582
        %v2358 = vunpack.c.l.b16 %v583
        %v2359 = vunpack.c.l.b16 %v584
        %v2360 = vunpack.c.l.b16 %v585
        %v2361 = vunpack.c.l.b16 %v586
        %v2362 = vunpack.c.l.b16 %v587
        %v2363 = vunpack.c.l.b16 %v588
        %v2364 = vunpack.c.l.b16 %v589
        %v2365 = vunpack.c.l.b16 %v590
        %v2366 = vunpack.c.l.b16 %v591
        %v2367 = vunpack.c.l.b16 %v592
        %v2368 = vunpack.c.l.b16 %v593
        %v2369 = vunpack.c.l.b16 %v594
        %v2370 = vunpack.c.l.b16 %v595
        %v2371 = vunpack.c.l.b16 %v596
        %v2372 = vunpack.c.l.b16 %v597
        %v2373 = vunpack.c.l.b16 %v598
        %v2374 = vunpack.c.l.b16 %v599
        %v2375 = vunpack.c.l.b16 %v600
        %v2376 = vunpack.c.l.b16 %v601
        %v2377 = vunpack.c.l.b16 %v602
        %v2378 = vunpack.c.l.b16 %v603
        %v2379 = vunpack.c.l.b16 %v604
        %v2380 = vunpack.c.l.b16 %v605
        %v2381 = vunpack.c.l.b16 %v606
        %v2382 = vunpack.c.l.b16 %v607
        %v2383 = vunpack.c.l.b16 %v608
        %v2384 = vunpack.c.l.b16 %v609
        %v2385 = vunpack.c.l.b16 %v610
        %v2386 = vunpack.c.l.b16 %v611
        %v2387 = vunpack.c.l.b16 %v612
        %v2388 = vunpack.c.l.b16 %v613
        %v2389 = vunpack.c.l.b16 %v614
        %v2390 = vunpack.c.l.b16 %v615
        %v2391 = vunpack.c.l.b16 %v616
        %v2392 = vunpack.c.l.b16 %v617
        %v2393 = vunpack.c.l.b16 %v618
        %v2394 = vunpack.c.l.b16 %v619
        %v2395 = vunpack.c.l.b16 %v620
        %v2396 = vunpack.c.l.b16 %v621
        %v2397 = vunpack.c.l.b16 %v622
        %v2398 = vunpack.c.l.b16 %v623
        %v2399 = vunpack.c.l.b16 %v624
        %v2400 = vunpack.c.l.b16 %v625
        %v2401 = vunpack.c.l.b16 %v626
        %v2402 = vunpack.c.l.b16 %v627
        %v2403 = vunpack.c.l.b16 %v628
        %v2404 = vunpack.c.l.b16 %v629
        %v2405 = vunpack.c.l.b16 %v630
        %v2406 = vunpack.c.l.b16 %v631
        %v2407 = vunpack.c.l.b16 %v632
        %v2408 = vunpack.c.l.b16 %v633
        %v2409 = vunpack.c.l.b16 %v634
        %v2410 = vunpack.c.l.b16 %v635
        %v2411 = vunpack.c.l.b16 %v636
        %v2412 = vunpack.c.l.b16 %v637
        %v2413 = vunpack.c.l.b16 %v638
        %v2414 = vunpack.c.l.b16 %v639
        %v2415 = vunpack.c.l.b16 %v640
        %v2416 = vunpack.c.l.b16 %v641
        %v2417 = vunpack.c.l.b16 %v642
        %v2418 = vunpack.c.l.b16 %v643
        %v2419 = vunpack.c.l.b16 %v644
        %v2420 = vunpack.c.l.b16 %v645
        %v2421 = vunpack.c.l.b16 %v646
        %v2422 = vunpack.c.l.b16 %v647
        %v2423 = vunpack.c.l.b16 %v648
        %v2424 = vunpack.c.l.b16 %v649
        %v2425 = vunpack.c.l.b16 %v650
        %v2426 = vunpack.c.l.b16 %v651
        %v2427 = vunpack.c.l.b16 %v652
        %v2428 = vunpack.c.l.b16 %v653
        %v2429 = vunpack.c.l.b16 %v654
        %v2430 = vunpack.c.l.b16 %v655
        %v2431 = vunpack.c.l.b16 %v656
        %v2432 = vunpack.c.l.b16 %v657
        %v2433 = vunpack.c.l.b16 %v658
        %v2434 = vunpack.c.l.b16 %v659
        %v2435 = vunpack.c.l.b16 %v660
        %v2436 = vunpack.c.l.b16 %v661
        %v2437 = vunpack.c.l.b16 %v662
        %v2438 = vunpack.c.l.b16 %v663
        %v2439 = vunpack.c.l.b16 %v664
        %v2440 = vunpack.c.l.b16 %v665
        %v2441 = vunpack.c.l.b16 %v666
        %v2442 = vunpack.c.l.b16 %v667
        %v2443 = vunpack.c.l.b16 %v668
        %v2444 = vunpack.c.l.b16 %v669
        %v2445 = vunpack.c.l.b16 %v670
        %v2446 = vunpack.c.l.b16 %v671
        %v2447 = vunpack.c.l.b16 %v672
        %v2448 = vunpack.c.l.b16 %v673
        %v2449 = vunpack.c.l.b16 %v674
        %v2450 = vunpack.c.l.b16 %v675
        %v2451 = vunpack.c.l.b16 %v676
        %v2452 = vunpack.c.l.b16 %v677
        %v2453 = vunpack.c.l.b16 %v678
        %v2454 = vunpack.c.l.b16 %v679
        %v2455 = vunpack.c.l.b16 %v680
        %v2456 = vunpack.c.l.b16 %v681
        %v2457 = vunpack.c.l.b16 %v682
        %v2458 = vunpack.c.l.b16 %v683
        %v2459 = vunpack.c.l.b16 %v684
        %v2460 = vunpack.c.l.b16 %v685
        %v2461 = vunpack.c.l.b16 %v686
        %v2462 = vunpack.c.l.b16 %v687
        %v2463 = vunpack.c.l.b16 %v688
        %v2464 = vunpack.c.l.b16 %v689
        %v2465 = vunpack.c.l.b16 %v690
        %v2466 = vunpack.c.l.b16 %v691
        %v2467 = vunpack.c.l.b16 %v692
        %v2468 = vunpack.c.l.b16 %v693
        %v2469 = vunpack.c.l.b16 %v694
        %v2470 = vunpack.c.l.b16 %v695
        %v2471 = vunpack.c.l.b16 %v696
        %v2472 = vunpack.c.l.b16 %v697
        %v2473 = vunpack.c.l.b16 %v698
        %v2474 = vunpack.c.l.b16 %v699
        %v2475 = vunpack.c.l.b16 %v700
        %v2476 = vunpack.c.l.b16 %v701
        %v2477 = vunpack.c.l.b16 %v702
        %v2478 = vunpack.c.l.b16 %v703
        %v2479 = vunpack.c.l.b16 %v704
        %v2480 = vunpack.c.l.b16 %v705
        %v2481 = vunpack.c.l.b16 %v706
        %v2482 = vunpack.c.l.b16 %v707
        %v2483 = vunpack.c.l.b16 %v708
        %v2484 = vunpack.c.l.b16 %v709
        %v2485 = vunpack.c.l.b16 %v710
        %v2486 = vunpack.c.l.b16 %v711
        %v2487 = vunpack.c.l.b16 %v712
        %v2488 = vunpack.c.l.b16 %v713
        %v2489 = vunpack.c.l.b16 %v714
        %v2490 = vunpack.c.l.b16 %v715
        %v2491 = vunpack.c.l.b16 %v716
        %v2492 = vunpack.c.l.b16 %v717
        %v2493 = vunpack.c.l.b16 %v718
        %v2494 = vunpack.c.l.b16 %v719
        %v2495 = vunpack.c.l.b16 %v720
        %v2496 = vunpack.c.l.b16 %v721
        %v2497 = vunpack.c.l.b16 %v722
        %v2498 = vunpack.c.l.b16 %v723
        %v2499 = vunpack.c.l.b16 %v724
        %v2500 = vunpack.c.l.b16 %v725
        %v2501 = vunpack.c.l.b16 %v726
        %v2502 = vunpack.c.l.b16 %v727
        %v2503 = vunpack.c.l.b16 %v728
        %v2504 = vunpack.c.l.b16 %v729
        %v2505 = vunpack.c.l.b16 %v730
        %v2506 = vunpack.c.l.b16 %v731
        %v2507 = vunpack.c.l.b16 %v732
        %v2508 = vunpack.c.l.b16 %v733
        %v2509 = vunpack.c.l.b16 %v734
        %v2510 = vunpack.c.l.b16 %v735
        %v2511 = vunpack.c.l.b16 %v736
        %v2512 = vunpack.c.l.b16 %v737
        %v2513 = vunpack.c.l.b16 %v738
        %v2514 = vunpack.c.l.b16 %v739
        %v2515 = vunpack.c.l.b16 %v740
        %v2516 = vunpack.c.l.b16 %v741
        %v2517 = vunpack.c.l.b16 %v742
        %v2518 = vunpack.c.l.b16 %v743
        %v2519 = vunpack.c.l.b16 %v744
        %v2520 = vunpack.c.l.b16 %v745
        %v2521 = vunpack.c.l.b16 %v746
        %v2522 = vunpack.c.l.b16 %v747
        %v2523 = vunpack.c.l.b16 %v748
        %v2524 = vunpack.c.l.b16 %v749
        %v2525 = vunpack.c.l.b16 %v750
        %v2526 = vunpack.c.l.b16 %v751
        %v2527 = vunpack.c.l.b16 %v752
        %v2528 = vunpack.c.l.b16 %v753
        %v2529 = vunpack.c.l.b16 %v754
        %v2530 = vunpack.c.l.b16 %v755
        %v2531 = vunpack.c.l.b16 %v756
        %v2532 = vunpack.c.l.b16 %v757
        %v2533 = vunpack.c.l.b16 %v758
        %v2534 = vunpack.c.l.b16 %v759
        %v2535 = vunpack.c.l.b16 %v760
        %v2536 = vunpack.c.l.b16 %v761
        %v2537 = vunpack.c.l.b16 %v762
        %v2538 = vunpack.c.l.b16 %v763
        %v2539 = vunpack.c.l.b16 %v764
        %v2540 = vunpack.c.l.b16 %v765
        %v2541 = vunpack.c.l.b16 %v766
        %v2542 = vunpack.c.l.b16 %v767
        %v2543 = vunpack.c.l.b16 %v768
        %v2544 = vunpack.c.l.b16 %v769
        %v2545 = vunpack.c.l.b16 %v770
        %v2546 = vunpack.c.l.b16 %v771
        %v2547 = vunpack.c.l.b16 %v772
        %v2548 = vunpack.c.l.b16 %v773
        %v2549 = vunpack.c.l.b16 %v774
        %v2550 = vunpack.c.l.b16 %v775
        %v2551 = vunpack.c.l.b16 %v776
        %v2552 = vunpack.c.l.b16 %v777
        %v2553 = vunpack.c.l.b16 %v778
        %v2554 = vunpack.c.l.b16 %v779
        %v2555 = vunpack.c.l.b16 %v780
        %v2556 = vunpack.c.l.b16 %v781
        %v2557 = vunpack.c.l.b16 %v782
        %v2558 = vunpack.c.l.b16 %v783
        %v2559 = vunpack.c.l.b16 %v784
        %v2560 = vunpack.c.l.b16 %v785
        %v2561 = vunpack.c.l.b16 %v786
        %v2562 = vunpack.c.l.b16 %v787
        %v2563 = vunpack.c.l.b16 %v788
        %v2564 = vunpack.c.l.b16 %v789
        %v2565 = vunpack.c.l.b16 %v790
        %v2566 = vunpack.c.l.b16 %v791
        %v2567 = vunpack.c.l.b16 %v792
        %v2568 = vunpack.c.l.b16 %v793
        %v2569 = vunpack.c.l.b16 %v794
        %v2570 = vunpack.c.l.b16 %v795
        %v2571 = vunpack.c.l.b16 %v796
        %v2572 = vunpack.c.l.b16 %v797
        %v2573 = vunpack.c.l.b16 %v798
        %v2574 = vunpack.c.l.b16 %v799
        %v2575 = vunpack.c.l.b16 %v800
        %v2576 = vunpack.c.l.b16 %v801
        %v2577 = vunpack.c.l.b16 %v802
        %v2578 = vunpack.c.l.b16 %v803
        %v2579 = vunpack.c.l.b16 %v804
        %v2580 = vunpack.c.l.b16 %v805
        %v2581 = vunpack.c.l.b16 %v806
        %v2582 = vunpack.c.l.b16 %v807
        %v2583 = vunpack.c.l.b16 %v808
        %v2584 = vunpack.c.l.b16 %v809
        %v2585 = vunpack.c.l.b16 %v810
        %v2586 = vunpack.c.l.b16 %v811
        %v2587 = vunpack.c.l.b16 %v812
        %v2588 = vunpack.c.l.b16 %v813
        %v2589 = vunpack.c.l.b16 %v814
        %v2590 = vunpack.c.l.b16 %v815
        %v2591 = vunpack.c.l.b16 %v816
        %v2592 = vunpack.c.l.b16 %v817
        %v2593 = vunpack.c.l.b16 %v818
        %v2594 = vunpack.c.l.b16 %v819
        %v2595 = vunpack.c.l.b16 %v820
        %v2596 = vunpack.c.l.b16 %v821
        %v2597 = vunpack.c.l.b16 %v822
        %v2598 = vunpack.c.l.b16 %v823
        %v2599 = vunpack.c.l.b16 %v824
        %v2600 = vunpack.c.l.b16 %v825
        %v2601 = vunpack.c.l.b16 %v826
        %v2602 = vunpack.c.l.b16 %v827
        %v2603 = vunpack.c.l.b16 %v828
        %v2604 = vunpack.c.l.b16 %v829
        %v2605 = vunpack.c.l.b16 %v830
        %v2606 = vunpack.c.l.b16 %v831
        %v2607 = vunpack.c.l.b16 %v832
        %v2608 = vunpack.c.l.b16 %v833
        %v2609 = vunpack.c.l.b16 %v834
        %v2610 = vunpack.c.l.b16 %v835
        %v2611 = vunpack.c.l.b16 %v836
        %v2612 = vunpack.c.l.b16 %v837
        %v2613 = vunpack.c.l.b16 %v838
        %v2614 = vunpack.c.l.b16 %v839
        %v2615 = vunpack.c.l.b16 %v840
        %v2616 = vunpack.c.l.b16 %v841
        %v2617 = vunpack.c.l.b16 %v842
        %v2618 = vunpack.c.l.b16 %v843
        %v2619 = vunpack.c.l.b16 %v844
        %v2620 = vunpack.c.l.b16 %v845
        %v2621 = vunpack.c.l.b16 %v846
        %v2622 = vunpack.c.l.b16 %v847
        %v2623 = vunpack.c.l.b16 %v848
        %v2624 = vunpack.c.l.b16 %v849
        %v2625 = vunpack.c.l.b16 %v850
        %v2626 = vunpack.c.l.b16 %v851
        %v2627 = vunpack.c.l.b16 %v852
        %v2628 = vunpack.c.l.b16 %v853
        %v2629 = vunpack.c.l.b16 %v854
        %v2630 = vunpack.c.l.b16 %v855
        %v2631 = vunpack.c.l.b16 %v856
        %v2632 = vunpack.c.l.b16 %v857
        %v2633 = vunpack.c.l.b16 %v858
        %v2634 = vunpack.c.l.b16 %v859
        %v2635 = vunpack.c.l.b16 %v860
        %v2636 = vunpack.c.l.b16 %v861
        %v2637 = vunpack.c.l.b16 %v862
        %v2638 = vunpack.c.l.b16 %v863
        %v2639 = vunpack.c.l.b16 %v864
        %v2640 = vunpack.c.l.b16 %v865
        %v2641 = vunpack.c.l.b16 %v866
        %v2642 = vunpack.c.l.b16 %v867
        %v2643 = vunpack.c.l.b16 %v868
        %v2644 = vunpack.c.l.b16 %v869
        %v2645 = vunpack.c.l.b16 %v870
        %v2646 = vunpack.c.l.b16 %v871
        %v2647 = vunpack.c.l.b16 %v872
        %v2648 = vunpack.c.l.b16 %v873
        %v2649 = vunpack.c.l.b16 %v874
        %v2650 = vunpack.c.l.b16 %v875
        %v2651 = vunpack.c.l.b16 %v876
        %v2652 = vunpack.c.l.b16 %v877
        %v2653 = vunpack.c.l.b16 %v878
        %v2654 = vunpack.c.l.b16 %v879
        %v2655 = vunpack.c.l.b16 %v880
        %v2656 = vunpack.c.l.b16 %v881
        %v2657 = vunpack.c.l.b16 %v882
        %v2658 = vunpack.c.l.b16 %v883
        %v2659 = vunpack.c.l.b16 %v884
        %v2660 = vunpack.c.l.b16 %v885
        %v2661 = vunpack.c.l.b16 %v886
        %v2662 = vunpack.c.l.b16 %v887
        %v2663 = vunpack.c.l.b16 %v888
        %v2664 = vunpack.c.l.b16 %v889
        %v2665 = vunpack.c.l.b16 %v890
        %v2666 = vunpack.c.l.b16 %v891
        %v2667 = vunpack.c.l.b16 %v892
        %v2668 = vunpack.c.l.b16 %v893
        %v2669 = vunpack.c.l.b16 %v894
        %v2670 = vunpack.c.l.b16 %v895
        %v2671 = vunpack.c.l.b16 %v896
        %v2672 = vunpack.c.l.b16 %v897
        %v2673 = vunpack.c.l.b16 %v898
        %v2674 = vunpack.c.l.b16 %v899
        %v2675 = vunpack.c.l.b16 %v900
        %v2676 = vunpack.c.l.b16 %v901
        %v2677 = vunpack.c.l.b16 %v902
        %v2678 = vunpack.c.l.b16 %v903
        %v2679 = vunpack.c.l.b16 %v904
        %v2680 = vunpack.c.l.b16 %v905
        %v2681 = vunpack.c.l.b16 %v906
        %v2682 = vunpack.c.l.b16 %v907
        %v2683 = vunpack.c.l.b16 %v908
        %v2684 = vunpack.c.l.b16 %v909
        %v2685 = vunpack.c.l.b16 %v910
        %v2686 = vunpack.c.l.b16 %v911
        %v2687 = vunpack.c.l.b16 %v912
        %v2688 = vunpack.c.l.b16 %v913
        %v2689 = vunpack.c.l.b16 %v914
        %v2690 = vunpack.c.l.b16 %v915
        %v2691 = vunpack.c.l.b16 %v916
        %v2692 = vunpack.c.l.b16 %v917
        %v2693 = vunpack.c.l.b16 %v918
        %v2694 = vunpack.c.l.b16 %v919
        %v2695 = vunpack.c.l.b16 %v920
        %v2696 = vunpack.c.l.b16 %v921
        %v2697 = vunpack.c.l.b16 %v922
        %v2698 = vunpack.c.l.b16 %v923
        %v2699 = vunpack.c.l.b16 %v924
        %v2700 = vunpack.c.l.b16 %v925
        %v2701 = vunpack.c.l.b16 %v926
        %v2702 = vunpack.c.l.b16 %v927
        %v2703 = vunpack.c.l.b16 %v928
        %v2704 = vunpack.c.l.b16 %v929
        %v2705 = vunpack.c.l.b16 %v930
        %v2706 = vunpack.c.l.b16 %v931
        %v2707 = vunpack.c.l.b16 %v932
        %v2708 = vunpack.c.l.b16 %v933
        %v2709 = vunpack.c.l.b16 %v934
        %v2710 = vunpack.c.l.b16 %v935
        %v2711 = vunpack.c.l.b16 %v936
        %v2712 = vunpack.c.l.b16 %v937
        %v2713 = vunpack.c.l.b16 %v938
        %v2714 = vunpack.c.l.b16 %v939
        %v2715 = vunpack.c.l.b16 %v940
        %v2716 = vunpack.c.l.b16 %v941
        %v2717 = vunpack.c.l.b16 %v942
        %v2718 = vunpack.c.l.b16 %v943
        %v2719 = vunpack.c.l.b16 %v944
        %v2720 = vunpack.c.l.b16 %v945
        %v2721 = vunpack.c.l.b16 %v946
        %v2722 = vunpack.c.l.b16 %v947
        %v2723 = vunpack.c.l.b16 %v948
        %v2724 = vunpack.c.l.b16 %v949
        %v2725 = vunpack.c.l.b16 %v950
        %v2726 = vunpack.c.l.b16 %v951
        %v2727 = vunpack.c.l.b16 %v952
        %v2728 = vunpack.c.l.b16 %v953
        %v2729 = vunpack.c.l.b16 %v954
        %v2730 = vunpack.c.l.b16 %v955
        %v2731 = vunpack.c.l.b16 %v956
        %v2732 = vunpack.c.l.b16 %v957
        %v2733 = vunpack.c.l.b16 %v958
        %v2734 = vunpack.c.l.b16 %v959
        %v2735 = vunpack.c.l.b16 %v960
        %v2736 = vunpack.c.l.b16 %v961
        %v2737 = vunpack.c.l.b16 %v962
        %v2738 = vunpack.c.l.b16 %v963
        %v2739 = vunpack.c.l.b16 %v964
        %v2740 = vunpack.c.l.b16 %v965
        %v2741 = vunpack.c.l.b16 %v966
        %v2742 = vunpack.c.l.b16 %v967
        %v2743 = vunpack.c.l.b16 %v968
        %v2744 = vunpack.c.l.b16 %v969
        %v2745 = vunpack.c.l.b16 %v970
        %v2746 = vunpack.c.l.b16 %v971
        %v2747 = vunpack.c.l.b16 %v972
        %v2748 = vunpack.c.l.b16 %v973
        %v2749 = vunpack.c.l.b16 %v974
        %v2750 = vunpack.c.l.b16 %v975
        %v2751 = vunpack.c.l.b16 %v976
        %v2752 = vunpack.c.l.b16 %v977
        %v2753 = vunpack.c.l.b16 %v978
        %v2754 = vunpack.c.l.b16 %v979
        %v2755 = vunpack.c.l.b16 %v980
        %v2756 = vunpack.c.l.b16 %v981
        %v2757 = vunpack.c.l.b16 %v982
        %v2758 = vunpack.c.l.b16 %v983
        %v2759 = vunpack.c.l.b16 %v984
        %v2760 = vunpack.c.l.b16 %v985
        %v2761 = vunpack.c.l.b16 %v986
        %v2762 = vunpack.c.l.b16 %v987
        %v2763 = vunpack.c.l.b16 %v988
        %v2764 = vunpack.c.l.b16 %v989
        %v2765 = vunpack.c.l.b16 %v990
        %v2766 = vunpack.c.l.b16 %v991
        %v2767 = vunpack.c.l.b16 %v992
        %v2768 = vunpack.c.l.b16 %v993
        %v2769 = vunpack.c.l.b16 %v994
        %v2770 = vunpack.c.l.b16 %v995
        %v2771 = vunpack.c.l.b16 %v996
        %v2772 = vunpack.c.l.b16 %v997
        %v2773 = vunpack.c.l.b16 %v998
        %v2774 = vunpack.c.l.b16 %v999
        %v2775 = vunpack.c.l.b16 %v1000
        %v2776 = vunpack.c.l.b16 %v1001
        %v2777 = vunpack.c.l.b16 %v1002
        %v2778 = vunpack.c.l.b16 %v1003
        %v2779 = vunpack.c.l.b16 %v1004
        %v2780 = vunpack.c.l.b16 %v1005
        %v2781 = vunpack.c.l.b16 %v1006
        %v2782 = vunpack.c.l.b16 %v1007
        %v2783 = vunpack.c.l.b16 %v1008
        %v2784 = vunpack.c.l.b16 %v1009
        %v2785 = vunpack.c.l.b16 %v1010
        %v2786 = vunpack.c.l.b16 %v1011
        %v2787 = vunpack.c.l.b16 %v1012
        %v2788 = vunpack.c.l.b16 %v1013
        %v2789 = vunpack.c.l.b16 %v1014
        %v2790 = vunpack.c.l.b16 %v1015
        %v2791 = vunpack.c.l.b16 %v1016
        %v2792 = vunpack.c.l.b16 %v1017
        %v2793 = vunpack.c.l.b16 %v1018
        %v2794 = vunpack.c.l.b16 %v1019
        %v2795 = vunpack.c.l.b16 %v1020
        %v2796 = vunpack.c.l.b16 %v1021
        %v2797 = vunpack.c.l.b16 %v1022
        %v2798 = vunpack.c.l.b16 %v1023
        %v2799 = vunpack.c.l.b16 %v1024
        %v2800 = vunpack.c.l.b16 %v1025
        %v2801 = vunpack.c.l.b16 %v1026
        %v2802 = vunpack.c.l.b16 %v1027
        %v2803 = vunpack.c.l.b16 %v1028
        %v2804 = vunpack.c.l.b16 %v1029
        %v2805 = vunpack.c.l.b16 %v1030
        %v2806 = vunpack.c.l.b16 %v1031
        %v2807 = vunpack.c.l.b16 %v1032
        %v2808 = vunpack.c.l.b16 %v1033
        %v2809 = vunpack.c.l.b16 %v1034
        %v2810 = vunpack.c.l.b16 %v1035
        %v2811 = vunpack.c.l.b16 %v1036
        %v2812 = vunpack.c.l.b16 %v1037
        %v2813 = vunpack.c.l.b16 %v1038
        %v2814 = vunpack.c.l.b16 %v1039
        %v2815 = vunpack.c.l.b16 %v1040
        %v2816 = vunpack.c.l.b16 %v1041
        %v2817 = vunpack.c.l.b16 %v1042
        %v2818 = vunpack.c.l.b16 %v1043
        %v2819 = vunpack.c.l.b16 %v1044
        %v2820 = vunpack.c.l.b16 %v1045
        %v2821 = vunpack.c.l.b16 %v1046
        %v2822 = vunpack.c.l.b16 %v1047
        %v2823 = vunpack.c.l.b16 %v1048
        %v2824 = vunpack.c.l.b16 %v1049
        %v2825 = vunpack.c.l.b16 %v1050
        %v2826 = vpack.c.b16 %v2027, %v2026
        %v2827 = vpack.c.b16 %v2029, %v2028
        %v2828 = vpack.c.b16 %v2031, %v2030
        %v2829 = vpack.c.b16 %v2033, %v2032
        %v2830 = vpack.c.b16 %v2035, %v2034
        %v2831 = vpack.c.b16 %v2037, %v2036
        %v2832 = vpack.c.b16 %v2039, %v2038
        %v2833 = vpack.c.b16 %v2041, %v2040
        %v2834 = vpack.c.b16 %v2043, %v2042
        %v2835 = vpack.c.b16 %v2045, %v2044
        %v2836 = vpack.c.b16 %v2047, %v2046
        %v2837 = vpack.c.b16 %v2049, %v2048
        %v2838 = vpack.c.b16 %v2051, %v2050
        %v2839 = vpack.c.b16 %v2053, %v2052
        %v2840 = vpack.c.b16 %v2055, %v2054
        %v2841 = vpack.c.b16 %v2057, %v2056
        %v2842 = vpack.c.b16 %v2059, %v2058
        %v2843 = vpack.c.b16 %v2061, %v2060
        %v2844 = vpack.c.b16 %v2063, %v2062
        %v2845 = vpack.c.b16 %v2065, %v2064
        %v2846 = vpack.c.b16 %v2067, %v2066
        %v2847 = vpack.c.b16 %v2069, %v2068
        %v2848 = vpack.c.b16 %v2071, %v2070
        %v2849 = vpack.c.b16 %v2073, %v2072
        %v2850 = vpack.c.b16 %v2075, %v2074
        %v2851 = vpack.c.b16 %v2077, %v2076
        %v2852 = vpack.c.b16 %v2079, %v2078
        %v2853 = vpack.c.b16 %v2081, %v2080
        %v2854 = vpack.c.b16 %v2083, %v2082
        %v2855 = vpack.c.b16 %v2085, %v2084
        %v2856 = vpack.c.b16 %v2087, %v2086
        %v2857 = vpack.c.b16 %v2089, %v2088
        %v2858 = vpack.c.b16 %v2091, %v2090
        %v2859 = vpack.c.b16 %v2093, %v2092
        %v2860 = vpack.c.b16 %v2095, %v2094
        %v2861 = vpack.c.b16 %v2097, %v2096
        %v2862 = vpack.c.b16 %v2099, %v2098
        %v2863 = vpack.c.b16 %v2101, %v2100
        %v2864 = vpack.c.b16 %v2103, %v2102
        %v2865 = vpack.c.b16 %v2105, %v2104
        %v2866 = vpack.c.b16 %v2107, %v2106
        %v2867 = vpack.c.b16 %v2109, %v2108
        %v2868 = vpack.c.b16 %v2111, %v2110
        %v2869 = vpack.c.b16 %v2113, %v2112
        %v2870 = vpack.c.b16 %v2115, %v2114
        %v2871 = vpack.c.b16 %v2117, %v2116
        %v2872 = vpack.c.b16 %v2119, %v2118
        %v2873 = vpack.c.b16 %v2121, %v2120
        %v2874 = vpack.c.b16 %v2123, %v2122
        %v2875 = vpack.c.b16 %v2125, %v2124
        %v2876 = vpack.c.b16 %v2127, %v2126
        %v2877 = vpack.c.b16 %v2129, %v2128
        %v2878 = vpack.c.b16 %v2131, %v2130
        %v2879 = vpack.c.b16 %v2133, %v2132
        %v2880 = vpack.c.b16 %v2135, %v2134
        %v2881 = vpack.c.b16 %v2137, %v2136
        %v2882 = vpack.c.b16 %v2139, %v2138
        %v2883 = vpack.c.b16 %v2141, %v2140
        %v2884 = vpack.c.b16 %v2143, %v2142
        %v2885 = vpack.c.b16 %v2145, %v2144
        %v2886 = vpack.c.b16 %v2147, %v2146
        %v2887 = vpack.c.b16 %v2149, %v2148
        %v2888 = vpack.c.b16 %v2151, %v2150
        %v2889 = vpack.c.b16 %v2153, %v2152
        %v2890 = vpack.c.b16 %v2155, %v2154
        %v2891 = vpack.c.b16 %v2157, %v2156
        %v2892 = vpack.c.b16 %v2159, %v2158
        %v2893 = vpack.c.b16 %v2161, %v2160
        %v2894 = vpack.c.b16 %v2163, %v2162
        %v2895 = vpack.c.b16 %v2165, %v2164
        %v2896 = vpack.c.b16 %v2167, %v2166
        %v2897 = vpack.c.b16 %v2169, %v2168
        %v2898 = vpack.c.b16 %v2171, %v2170
        %v2899 = vpack.c.b16 %v2173, %v2172
        %v2900 = vpack.c.b16 %v2175, %v2174
        %v2901 = vpack.c.b16 %v2177, %v2176
        %v2902 = vpack.c.b16 %v2179, %v2178
        %v2903 = vpack.c.b16 %v2181, %v2180
        %v2904 = vpack.c.b16 %v2183, %v2182
        %v2905 = vpack.c.b16 %v2185, %v2184
        %v2906 = vpack.c.b16 %v2187, %v2186
        %v2907 = vpack.c.b16 %v2189, %v2188
        %v2908 = vpack.c.b16 %v2191, %v2190
        %v2909 = vpack.c.b16 %v2193, %v2192
        %v2910 = vpack.c.b16 %v2195, %v2194
        %v2911 = vpack.c.b16 %v2197, %v2196
        %v2912 = vpack.c.b16 %v2199, %v2198
        %v2913 = vpack.c.b16 %v2201, %v2200
        %v2914 = vpack.c.b16 %v2203, %v2202
        %v2915 = vpack.c.b16 %v2205, %v2204
        %v2916 = vpack.c.b16 %v2207, %v2206
        %v2917 = vpack.c.b16 %v2209, %v2208
        %v2918 = vpack.c.b16 %v2211, %v2210
        %v2919 = vpack.c.b16 %v2213, %v2212
        %v2920 = vpack.c.b16 %v2215, %v2214
        %v2921 = vpack.c.b16 %v2217, %v2216
        %v2922 = vpack.c.b16 %v2219, %v2218
        %v2923 = vpack.c.b16 %v2221, %v2220
        %v2924 = vpack.c.b16 %v2223, %v2222
        %v2925 = vpack.c.b16 %v2225, %v2224
        %v2926 = vpack.c.b16 %v2227, %v2226
        %v2927 = vpack.c.b16 %v2229, %v2228
        %v2928 = vpack.c.b16 %v2231, %v2230
        %v2929 = vpack.c.b16 %v2233, %v2232
        %v2930 = vpack.c.b16 %v2235, %v2234
        %v2931 = vpack.c.b16 %v2237, %v2236
        %v2932 = vpack.c.b16 %v2239, %v2238
        %v2933 = vpack.c.b16 %v2241, %v2240
        %v2934 = vpack.c.b16 %v2243, %v2242
        %v2935 = vpack.c.b16 %v2245, %v2244
        %v2936 = vpack.c.b16 %v2247, %v2246
        %v2937 = vpack.c.b16 %v2249, %v2248
        %v2938 = vpack.c.b16 %v2251, %v2250
        %v2939 = vpack.c.b16 %v2253, %v2252
        %v2940 = vpack.c.b16 %v2255, %v2254
        %v2941 = vpack.c.b16 %v2257, %v2256
        %v2942 = vpack.c.b16 %v2259, %v2258
        %v2943 = vpack.c.b16 %v2261, %v2260
        %v2944 = vpack.c.b16 %v2263, %v2262
        %v2945 = vpack.c.b16 %v2265, %v2264
        %v2946 = vpack.c.b16 %v2267, %v2266
        %v2947 = vpack.c.b16 %v2269, %v2268
        %v2948 = vpack.c.b16 %v2271, %v2270
        %v2949 = vpack.c.b16 %v2273, %v2272
        %v2950 = vpack.c.b16 %v2275, %v2274
        %v2951 = vpack.c.b16 %v2277, %v2276
        %v2952 = vpack.c.b16 %v2279, %v2278
        %v2953 = vpack.c.b16 %v2281, %v2280
        %v2954 = vpack.c.b16 %v2283, %v2282
        %v2955 = vpack.c.b16 %v2285, %v2284
        %v2956 = vpack.c.b16 %v2287, %v2286
        %v2957 = vpack.c.b16 %v2289, %v2288
        %v2958 = vpack.c.b16 %v2291, %v2290
        %v2959 = vpack.c.b16 %v2293, %v2292
        %v2960 = vpack.c.b16 %v2295, %v2294
        %v2961 = vpack.c.b16 %v2297, %v2296
        %v2962 = vpack.c.b16 %v2299, %v2298
        %v2963 = vpack.c.b16 %v2301, %v2300
        %v2964 = vpack.c.b16 %v2303, %v2302
        %v2965 = vpack.c.b16 %v2305, %v2304
        %v2966 = vpack.c.b16 %v2307, %v2306
        %v2967 = vpack.c.b16 %v2309, %v2308
        %v2968 = vpack.c.b16 %v2311, %v2310
        %v2969 = vpack.c.b16 %v2313, %v2312
        %v2970 = vpack.c.b16 %v2315, %v2314
        %v2971 = vpack.c.b16 %v2317, %v2316
        %v2972 = vpack.c.b16 %v2319, %v2318
        %v2973 = vpack.c.b16 %v2321, %v2320
        %v2974 = vpack.c.b16 %v2323, %v2322
        %v2975 = vpack.c.b16 %v2325, %v2324
        %v2976 = vpack.c.b16 %v2327, %v2326
        %v2977 = vpack.c.b16 %v2329, %v2328
        %v2978 = vpack.c.b16 %v2331, %v2330
        %v2979 = vpack.c.b16 %v2333, %v2332
        %v2980 = vpack.c.b16 %v2335, %v2334
        %v2981 = vpack.c.b16 %v2337, %v2336
        %v2982 = vpack.c.b16 %v2339, %v2338
        %v2983 = vpack.c.b16 %v2341, %v2340
        %v2984 = vpack.c.b16 %v2343, %v2342
        %v2985 = vpack.c.b16 %v2345, %v2344
        %v2986 = vpack.c.b16 %v2347, %v2346
        %v2987 = vpack.c.b16 %v2349, %v2348
        %v2988 = vpack.c.b16 %v2351, %v2350
        %v2989 = vpack.c.b16 %v2353, %v2352
        %v2990 = vpack.c.b16 %v2355, %v2354
        %v2991 = vpack.c.b16 %v2357, %v2356
        %v2992 = vpack.c.b16 %v2359, %v2358
        %v2993 = vpack.c.b16 %v2361, %v2360
        %v2994 = vpack.c.b16 %v2363, %v2362
        %v2995 = vpack.c.b16 %v2365, %v2364
        %v2996 = vpack.c.b16 %v2367, %v2366
        %v2997 = vpack.c.b16 %v2369, %v2368
        %v2998 = vpack.c.b16 %v2371, %v2370
        %v2999 = vpack.c.b16 %v2373, %v2372
        %v3000 = vpack.c.b16 %v2375, %v2374
        %v3001 = vpack.c.b16 %v2377, %v2376
        %v3002 = vpack.c.b16 %v2379, %v2378
        %v3003 = vpack.c.b16 %v2381, %v2380
        %v3004 = vpack.c.b16 %v2383, %v2382
        %v3005 = vpack.c.b16 %v2385, %v2384
        %v3006 = vpack.c.b16 %v2387, %v2386
        %v3007 = vpack.c.b16 %v2389, %v2388
        %v3008 = vpack.c.b16 %v2391, %v2390
        %v3009 = vpack.c.b16 %v2393, %v2392
        %v3010 = vpack.c.b16 %v2395, %v2394
        %v3011 = vpack.c.b16 %v2397, %v2396
        %v3012 = vpack.c.b16 %v2399, %v2398
        %v3013 = vpack.c.b16 %v2401, %v2400
        %v3014 = vpack.c.b16 %v2403, %v2402
        %v3015 = vpack.c.b16 %v2405, %v2404
        %v3016 = vpack.c.b16 %v2407, %v2406
        %v3017 = vpack.c.b16 %v2409, %v2408
        %v3018 = vpack.c.b16 %v2411, %v2410
        %v3019 = vpack.c.b16 %v2413, %v2412
        %v3020 = vpack.c.b16 %v2415, %v2414
        %v3021 = vpack.c.b16 %v2417, %v2416
        %v3022 = vpack.c.b16 %v2419, %v2418
        %v3023 = vpack.c.b16 %v2421, %v2420
        %v3024 = vpack.c.b16 %v2423, %v2422
        %v3025 = vpack.c.b16 %v2425, %v2424
        %v3026 = vpack.c.b16 %v2427, %v2426
        %v3027 = vpack.c.b16 %v2429, %v2428
        %v3028 = vpack.c.b16 %v2431, %v2430
        %v3029 = vpack.c.b16 %v2433, %v2432
        %v3030 = vpack.c.b16 %v2435, %v2434
        %v3031 = vpack.c.b16 %v2437, %v2436
        %v3032 = vpack.c.b16 %v2439, %v2438
        %v3033 = vpack.c.b16 %v2441, %v2440
        %v3034 = vpack.c.b16 %v2443, %v2442
        %v3035 = vpack.c.b16 %v2445, %v2444
        %v3036 = vpack.c.b16 %v2447, %v2446
        %v3037 = vpack.c.b16 %v2449, %v2448
        %v3038 = vpack.c.b16 %v2451, %v2450
        %v3039 = vpack.c.b16 %v2453, %v2452
        %v3040 = vpack.c.b16 %v2455, %v2454
        %v3041 = vpack.c.b16 %v2457, %v2456
        %v3042 = vpack.c.b16 %v2459, %v2458
        %v3043 = vpack.c.b16 %v2461, %v2460
        %v3044 = vpack.c.b16 %v2463, %v2462
        %v3045 = vpack.c.b16 %v2465, %v2464
        %v3046 = vpack.c.b16 %v2467, %v2466
        %v3047 = vpack.c.b16 %v2469, %v2468
        %v3048 = vpack.c.b16 %v2471, %v2470
        %v3049 = vpack.c.b16 %v2473, %v2472
        %v3050 = vpack.c.b16 %v2475, %v2474
        %v3051 = vpack.c.b16 %v2477, %v2476
        %v3052 = vpack.c.b16 %v2479, %v2478
        %v3053 = vpack.c.b16 %v2481, %v2480
        %v3054 = vpack.c.b16 %v2483, %v2482
        %v3055 = vpack.c.b16 %v2485, %v2484
        %v3056 = vpack.c.b16 %v2487, %v2486
        %v3057 = vpack.c.b16 %v2489, %v2488
        %v3058 = vpack.c.b16 %v2491, %v2490
        %v3059 = vpack.c.b16 %v2493, %v2492
        %v3060 = vpack.c.b16 %v2495, %v2494
        %v3061 = vpack.c.b16 %v2497, %v2496
        %v3062 = vpack.c.b16 %v2499, %v2498
        %v3063 = vpack.c.b16 %v2501, %v2500
        %v3064 = vpack.c.b16 %v2503, %v2502
        %v3065 = vpack.c.b16 %v2505, %v2504
        %v3066 = vpack.c.b16 %v2507, %v2506
        %v3067 = vpack.c.b16 %v2509, %v2508
        %v3068 = vpack.c.b16 %v2511, %v2510
        %v3069 = vpack.c.b16 %v2513, %v2512
        %v3070 = vpack.c.b16 %v2515, %v2514
        %v3071 = vpack.c.b16 %v2517, %v2516
        %v3072 = vpack.c.b16 %v2519, %v2518
        %v3073 = vpack.c.b16 %v2521, %v2520
        %v3074 = vpack.c.b16 %v2523, %v2522
        %v3075 = vpack.c.b16 %v2525, %v2524
        %v3076 = vpack.c.b16 %v2527, %v2526
        %v3077 = vpack.c.b16 %v2529, %v2528
        %v3078 = vpack.c.b16 %v2531, %v2530
        %v3079 = vpack.c.b16 %v2533, %v2532
        %v3080 = vpack.c.b16 %v2535, %v2534
        %v3081 = vpack.c.b16 %v2537, %v2536
        %v3082 = vpack.c.b16 %v2539, %v2538
        %v3083 = vpack.c.b16 %v2541, %v2540
        %v3084 = vpack.c.b16 %v2543, %v2542
        %v3085 = vpack.c.b16 %v2545, %v2544
        %v3086 = vpack.c.b16 %v2547, %v2546
        %v3087 = vpack.c.b16 %v2549, %v2548
        %v3088 = vpack.c.b16 %v2551, %v2550
        %v3089 = vpack.c.b16 %v2553, %v2552
        %v3090 = vpack.c.b16 %v2555, %v2554
        %v3091 = vpack.c.b16 %v2557, %v2556
        %v3092 = vpack.c.b16 %v2559, %v2558
        %v3093 = vpack.c.b16 %v2561, %v2560
        %v3094 = vpack.c.b16 %v2563, %v2562
        %v3095 = vpack.c.b16 %v2565, %v2564
        %v3096 = vpack.c.b16 %v2567, %v2566
        %v3097 = vpack.c.b16 %v2569, %v2568
        %v3098 = vpack.c.b16 %v2571, %v2570
        %v3099 = vpack.c.b16 %v2573, %v2572
        %v3100 = vpack.c.b16 %v2575, %v2574
        %v3101 = vpack.c.b16 %v2577, %v2576
        %v3102 = vpack.c.b16 %v2579, %v2578
        %v3103 = vpack.c.b16 %v2581, %v2580
        %v3104 = vpack.c.b16 %v2583, %v2582
        %v3105 = vpack.c.b16 %v2585, %v2584
        %v3106 = vpack.c.b16 %v2587, %v2586
        %v3107 = vpack.c.b16 %v2589, %v2588
        %v3108 = vpack.c.b16 %v2591, %v2590
        %v3109 = vpack.c.b16 %v2593, %v2592
        %v3110 = vpack.c.b16 %v2595, %v2594
        %v3111 = vpack.c.b16 %v2597, %v2596
        %v3112 = vpack.c.b16 %v2599, %v2598
        %v3113 = vpack.c.b16 %v2601, %v2600
        %v3114 = vpack.c.b16 %v2603, %v2602
        %v3115 = vpack.c.b16 %v2605, %v2604
        %v3116 = vpack.c.b16 %v2607, %v2606
        %v3117 = vpack.c.b16 %v2609, %v2608
        %v3118 = vpack.c.b16 %v2611, %v2610
        %v3119 = vpack.c.b16 %v2613, %v2612
        %v3120 = vpack.c.b16 %v2615, %v2614
        %v3121 = vpack.c.b16 %v2617, %v2616
        %v3122 = vpack.c.b16 %v2619, %v2618
        %v3123 = vpack.c.b16 %v2621, %v2620
        %v3124 = vpack.c.b16 %v2623, %v2622
        %v3125 = vpack.c.b16 %v2625, %v2624
        %v3126 = vpack.c.b16 %v2627, %v2626
        %v3127 = vpack.c.b16 %v2629, %v2628
        %v3128 = vpack.c.b16 %v2631, %v2630
        %v3129 = vpack.c.b16 %v2633, %v2632
        %v3130 = vpack.c.b16 %v2635, %v2634
        %v3131 = vpack.c.b16 %v2637, %v2636
        %v3132 = vpack.c.b16 %v2639, %v2638
        %v3133 = vpack.c.b16 %v2641, %v2640
        %v3134 = vpack.c.b16 %v2643, %v2642
        %v3135 = vpack.c.b16 %v2645, %v2644
        %v3136 = vpack.c.b16 %v2647, %v2646
        %v3137 = vpack.c.b16 %v2649, %v2648
        %v3138 = vpack.c.b16 %v2651, %v2650
        %v3139 = vpack.c.b16 %v2653, %v2652
        %v3140 = vpack.c.b16 %v2655, %v2654
        %v3141 = vpack.c.b16 %v2657, %v2656
        %v3142 = vpack.c.b16 %v2659, %v2658
        %v3143 = vpack.c.b16 %v2661, %v2660
        %v3144 = vpack.c.b16 %v2663, %v2662
        %v3145 = vpack.c.b16 %v2665, %v2664
        %v3146 = vpack.c.b16 %v2667, %v2666
        %v3147 = vpack.c.b16 %v2669, %v2668
        %v3148 = vpack.c.b16 %v2671, %v2670
        %v3149 = vpack.c.b16 %v2673, %v2672
        %v3150 = vpack.c.b16 %v2675, %v2674
        %v3151 = vpack.c.b16 %v2677, %v2676
        %v3152 = vpack.c.b16 %v2679, %v2678
        %v3153 = vpack.c.b16 %v2681, %v2680
        %v3154 = vpack.c.b16 %v2683, %v2682
        %v3155 = vpack.c.b16 %v2685, %v2684
        %v3156 = vpack.c.b16 %v2687, %v2686
        %v3157 = vpack.c.b16 %v2689, %v2688
        %v3158 = vpack.c.b16 %v2691, %v2690
        %v3159 = vpack.c.b16 %v2693, %v2692
        %v3160 = vpack.c.b16 %v2695, %v2694
        %v3161 = vpack.c.b16 %v2697, %v2696
        %v3162 = vpack.c.b16 %v2699, %v2698
        %v3163 = vpack.c.b16 %v2701, %v2700
        %v3164 = vpack.c.b16 %v2703, %v2702
        %v3165 = vpack.c.b16 %v2705, %v2704
        %v3166 = vpack.c.b16 %v2707, %v2706
        %v3167 = vpack.c.b16 %v2709, %v2708
        %v3168 = vpack.c.b16 %v2711, %v2710
        %v3169 = vpack.c.b16 %v2713, %v2712
        %v3170 = vpack.c.b16 %v2715, %v2714
        %v3171 = vpack.c.b16 %v2717, %v2716
        %v3172 = vpack.c.b16 %v2719, %v2718
        %v3173 = vpack.c.b16 %v2721, %v2720
        %v3174 = vpack.c.b16 %v2723, %v2722
        %v3175 = vpack.c.b16 %v2725, %v2724
        %v3176 = vpack.c.b16 %v2727, %v2726
        %v3177 = vpack.c.b16 %v2729, %v2728
        %v3178 = vpack.c.b16 %v2731, %v2730
        %v3179 = vpack.c.b16 %v2733, %v2732
        %v3180 = vpack.c.b16 %v2735, %v2734
        %v3181 = vpack.c.b16 %v2737, %v2736
        %v3182 = vpack.c.b16 %v2739, %v2738
        %v3183 = vpack.c.b16 %v2741, %v2740
        %v3184 = vpack.c.b16 %v2743, %v2742
        %v3185 = vpack.c.b16 %v2745, %v2744
        %v3186 = vpack.c.b16 %v2747, %v2746
        %v3187 = vpack.c.b16 %v2749, %v2748
        %v3188 = vpack.c.b16 %v2751, %v2750
        %v3189 = vpack.c.b16 %v2753, %v2752
        %v3190 = vpack.c.b16 %v2755, %v2754
        %v3191 = vpack.c.b16 %v2757, %v2756
        %v3192 = vpack.c.b16 %v2759, %v2758
        %v3193 = vpack.c.b16 %v2761, %v2760
        %v3194 = vpack.c.b16 %v2763, %v2762
        %v3195 = vpack.c.b16 %v2765, %v2764
        %v3196 = vpack.c.b16 %v2767, %v2766
        %v3197 = vpack.c.b16 %v2769, %v2768
        %v3198 = vpack.c.b16 %v2771, %v2770
        %v3199 = vpack.c.b16 %v2773, %v2772
        %v3200 = vpack.c.b16 %v2775, %v2774
        %v3201 = vpack.c.b16 %v2777, %v2776
        %v3202 = vpack.c.b16 %v2779, %v2778
        %v3203 = vpack.c.b16 %v2781, %v2780
        %v3204 = vpack.c.b16 %v2783, %v2782
        %v3205 = vpack.c.b16 %v2785, %v2784
        %v3206 = vpack.c.b16 %v2787, %v2786
        %v3207 = vpack.c.b16 %v2789, %v2788
        %v3208 = vpack.c.b16 %v2791, %v2790
        %v3209 = vpack.c.b16 %v2793, %v2792
        %v3210 = vpack.c.b16 %v2795, %v2794
        %v3211 = vpack.c.b16 %v2797, %v2796
        %v3212 = vpack.c.b16 %v2799, %v2798
        %v3213 = vpack.c.b16 %v2801, %v2800
        %v3214 = vpack.c.b16 %v2803, %v2802
        %v3215 = vpack.c.b16 %v2805, %v2804
        %v3216 = vpack.c.b16 %v2807, %v2806
        %v3217 = vpack.c.b16 %v2809, %v2808
        %v3218 = vpack.c.b16 %v2811, %v2810
        %v3219 = vpack.c.b16 %v2813, %v2812
        %v3220 = vpack.c.b16 %v2815, %v2814
        %v3221 = vpack.c.b16 %v2817, %v2816
        %v3222 = vpack.c.b16 %v2819, %v2818
        %v3223 = vpack.c.b16 %v2821, %v2820
        %v3224 = vpack.c.b16 %v2823, %v2822
        %v3225 = vpack.c.b16 %v2825, %v2824
        %3626 = vmatprep.subr.bf16.mxu0 0
        %3627 = vmatpush1.bf16.msra.mxu0 %v2826
        %3628 = vmatprep.subr.bf16.mxu0 0
        %3629 = vmatpush1.bf16.msra.mxu0 %v2827
        %3630 = vmatprep.subr.bf16.mxu0 0
        %3631 = vmatpush1.bf16.msra.mxu0 %v2828
        %3632 = vmatprep.subr.bf16.mxu0 0
        %3633 = vmatpush1.bf16.msra.mxu0 %v2829
        %3634 = vmatprep.subr.bf16.mxu0 0
        %3635 = vmatpush1.bf16.msra.mxu0 %v2830
        %3636 = vmatprep.subr.bf16.mxu0 0
        %3637 = vmatpush1.bf16.msra.mxu0 %v2831
        %3638 = vmatprep.subr.bf16.mxu0 0
        %3639 = vmatpush1.bf16.msra.mxu0 %v2832
        %3640 = vmatprep.subr.bf16.mxu0 0
        %3641 = vmatpush1.bf16.msra.mxu0 %v2833
        %3642 = vmatprep.subr.bf16.mxu0 0
        %3643 = vmatpush1.bf16.msra.mxu0 %v2834
        %3644 = vmatprep.subr.bf16.mxu0 0
        %3645 = vmatpush1.bf16.msra.mxu0 %v2835
        %3646 = vmatprep.subr.bf16.mxu0 0
        %3647 = vmatpush1.bf16.msra.mxu0 %v2836
        %3648 = vmatprep.subr.bf16.mxu0 0
        %3649 = vmatpush1.bf16.msra.mxu0 %v2837
        %3650 = vmatprep.subr.bf16.mxu0 0
        %3651 = vmatpush1.bf16.msra.mxu0 %v2838
        %3652 = vmatprep.subr.bf16.mxu0 0
        %3653 = vmatpush1.bf16.msra.mxu0 %v2839
        %3654 = vmatprep.subr.bf16.mxu0 0
        %3655 = vmatpush1.bf16.msra.mxu0 %v2840
        %3656 = vmatprep.subr.bf16.mxu0 0
        %3657 = vmatpush1.bf16.msra.mxu0 %v2841
        %3658 = vmatprep.mubr.bf16.mxu0 %v1127
        %3659 = vmatmul.mubr.bf16.gmra.mrb[0].mxu0 %v1126
        %v3660 = vpop.f32.mrb[0].mxu0
        %v3661 = vadd.f32 0.0, %v3660
        %v3662 = vpop.f32.mrb[0].mxu0
        %v3663 = vpop.f32.mrb[0].mxu0
        %v3664 = vpop.f32.mrb[0].mxu0
        %3665 = vdwg.mxu0
        %3666 = vmatprep.subr.bf16.mxu0 0
        %3667 = vmatpush1.bf16.msra.mxu0 %v2842
        %3668 = vmatprep.subr.bf16.mxu0 0
        %3669 = vmatpush1.bf16.msra.mxu0 %v2843
        %3670 = vmatprep.subr.bf16.mxu0 0
        %3671 = vmatpush1.bf16.msra.mxu0 %v2844
        %3672 = vmatprep.subr.bf16.mxu0 0
        %3673 = vmatpush1.bf16.msra.mxu0 %v2845
        %3674 = vmatprep.subr.bf16.mxu0 0
        %3675 = vmatpush1.bf16.msra.mxu0 %v2846
        %3676 = vmatprep.subr.bf16.mxu0 0
        %3677 = vmatpush1.bf16.msra.mxu0 %v2847
        %3678 = vmatprep.subr.bf16.mxu0 0
        %3679 = vmatpush1.bf16.msra.mxu0 %v2848
        %3680 = vmatprep.subr.bf16.mxu0 0
        %3681 = vmatpush1.bf16.msra.mxu0 %v2849
        %3682 = vmatprep.subr.bf16.mxu0 0
        %3683 = vmatpush1.bf16.msra.mxu0 %v2850
        %3684 = vmatprep.subr.bf16.mxu0 0
        %3685 = vmatpush1.bf16.msra.mxu0 %v2851
        %3686 = vmatprep.subr.bf16.mxu0 0
        %3687 = vmatpush1.bf16.msra.mxu0 %v2852
        %3688 = vmatprep.subr.bf16.mxu0 0
        %3689 = vmatpush1.bf16.msra.mxu0 %v2853
        %3690 = vmatprep.subr.bf16.mxu0 0
        %3691 = vmatpush1.bf16.msra.mxu0 %v2854
        %3692 = vmatprep.subr.bf16.mxu0 0
        %3693 = vmatpush1.bf16.msra.mxu0 %v2855
        %3694 = vmatprep.subr.bf16.mxu0 0
        %3695 = vmatpush1.bf16.msra.mxu0 %v2856
        %3696 = vmatprep.subr.bf16.mxu0 0
        %3697 = vmatpush1.bf16.msra.mxu0 %v2857
        %3698 = vmatprep.mubr.bf16.mxu0 %v1129
        %3699 = vmatmul.mubr.bf16.gmra.mrb[0].mxu0 %v1128
        %v3700 = vpop.f32.mrb[0].mxu0
        %v3701 = vadd.f32 %v3661, %v3700
        %v3702 = vpop.f32.mrb[0].mxu0
        %v3703 = vpop.f32.mrb[0].mxu0
        %v3704 = vpop.f32.mrb[0].mxu0
        %3705 = vdwg.mxu0
        %3706 = vmatprep.subr.bf16.mxu0 0
        %3707 = vmatpush1.bf16.msra.mxu0 %v2858
        %3708 = vmatprep.subr.bf16.mxu0 0
        %3709 = vmatpush1.bf16.msra.mxu0 %v2859
        %3710 = vmatprep.subr.bf16.mxu0 0
        %3711 = vmatpush1.bf16.msra.mxu0 %v2860
        %3712 = vmatprep.subr.bf16.mxu0 0
        %3713 = vmatpush1.bf16.msra.mxu0 %v2861
        %3714 = vmatprep.subr.bf16.mxu0 0
        %3715 = vmatpush1.bf16.msra.mxu0 %v2862
        %3716 = vmatprep.subr.bf16.mxu0 0
        %3717 = vmatpush1.bf16.msra.mxu0 %v2863
        %3718 = vmatprep.subr.bf16.mxu0 0
        %3719 = vmatpush1.bf16.msra.mxu0 %v2864
        %3720 = vmatprep.subr.bf16.mxu0 0
        %3721 = vmatpush1.bf16.msra.mxu0 %v2865
        %3722 = vmatprep.subr.bf16.mxu0 0
        %3723 = vmatpush1.bf16.msra.mxu0 %v2866
        %3724 = vmatprep.subr.bf16.mxu0 0
        %3725 = vmatpush1.bf16.msra.mxu0 %v2867
        %3726 = vmatprep.subr.bf16.mxu0 0
        %3727 = vmatpush1.bf16.msra.mxu0 %v2868
        %3728 = vmatprep.subr.bf16.mxu0 0
        %3729 = vmatpush1.bf16.msra.mxu0 %v2869
        %3730 = vmatprep.subr.bf16.mxu0 0
        %3731 = vmatpush1.bf16.msra.mxu0 %v2870
        %3732 = vmatprep.subr.bf16.mxu0 0
        %3733 = vmatpush1.bf16.msra.mxu0 %v2871
        %3734 = vmatprep.subr.bf16.mxu0 0
        %3735 = vmatpush1.bf16.msra.mxu0 %v2872
        %3736 = vmatprep.subr.bf16.mxu0 0
        %3737 = vmatpush1.bf16.msra.mxu0 %v2873
        %3738 = vmatprep.mubr.bf16.mxu0 %v1131
        %3739 = vmatmul.mubr.bf16.gmra.mrb[0].mxu0 %v1130
        %v3740 = vpop.f32.mrb[0].mxu0
        %v3741 = vadd.f32 %v3701, %v3740
        %v3742 = vpop.f32.mrb[0].mxu0
        %v3743 = vpop.f32.mrb[0].mxu0
        %v3744 = vpop.f32.mrb[0].mxu0
        %3745 = vdwg.mxu0
        %3746 = vmatprep.subr.bf16.mxu0 0
        %3747 = vmatpush1.bf16.msra.mxu0 %v2874
        %3748 = vmatprep.subr.bf16.mxu0 0
        %3749 = vmatpush1.bf16.msra.mxu0 %v2875
        %3750 = vmatprep.subr.bf16.mxu0 0
        %3751 = vmatpush1.bf16.msra.mxu0 %v2876
        %3752 = vmatprep.subr.bf16.mxu0 0
        %3753 = vmatpush1.bf16.msra.mxu0 %v2877
        %3754 = vmatprep.subr.bf16.mxu0 0
        %3755 = vmatpush1.bf16.msra.mxu0 %v2878
        %3756 = vmatprep.subr.bf16.mxu0 0
        %3757 = vmatpush1.bf16.msra.mxu0 %v2879
        %3758 = vmatprep.subr.bf16.mxu0 0
        %3759 = vmatpush1.bf16.msra.mxu0 %v2880
        %3760 = vmatprep.subr.bf16.mxu0 0
        %3761 = vmatpush1.bf16.msra.mxu0 %v2881
        %3762 = vmatprep.subr.bf16.mxu0 0
        %3763 = vmatpush1.bf16.msra.mxu0 %v2882
        %3764 = vmatprep.subr.bf16.mxu0 0
        %3765 = vmatpush1.bf16.msra.mxu0 %v2883
        %3766 = vmatprep.subr.bf16.mxu0 0
        %3767 = vmatpush1.bf16.msra.mxu0 %v2884
        %3768 = vmatprep.subr.bf16.mxu0 0
        %3769 = vmatpush1.bf16.msra.mxu0 %v2885
        %3770 = vmatprep.subr.bf16.mxu0 0
        %3771 = vmatpush1.bf16.msra.mxu0 %v2886
        %3772 = vmatprep.subr.bf16.mxu0 0
        %3773 = vmatpush1.bf16.msra.mxu0 %v2887
        %3774 = vmatprep.subr.bf16.mxu0 0
        %3775 = vmatpush1.bf16.msra.mxu0 %v2888
        %3776 = vmatprep.subr.bf16.mxu0 0
        %3777 = vmatpush1.bf16.msra.mxu0 %v2889
        %3778 = vmatprep.mubr.bf16.mxu0 %v1133
        %3779 = vmatmul.mubr.bf16.gmra.mrb[0].mxu0 %v1132
        %v3780 = vpop.f32.mrb[0].mxu0
        %v3781 = vadd.f32 %v3741, %v3780
        %v3782 = vpop.f32.mrb[0].mxu0
        %v3783 = vpop.f32.mrb[0].mxu0
        %v3784 = vpop.f32.mrb[0].mxu0
        %3785 = vdwg.mxu0
        %3786 = vmatprep.subr.bf16.mxu0 0
        %3787 = vmatpush1.bf16.msra.mxu0 %v2890
        %3788 = vmatprep.subr.bf16.mxu0 0
        %3789 = vmatpush1.bf16.msra.mxu0 %v2891
        %3790 = vmatprep.subr.bf16.mxu0 0
        %3791 = vmatpush1.bf16.msra.mxu0 %v2892
        %3792 = vmatprep.subr.bf16.mxu0 0
        %3793 = vmatpush1.bf16.msra.mxu0 %v2893
        %3794 = vmatprep.subr.bf16.mxu0 0
        %3795 = vmatpush1.bf16.msra.mxu0 %v2894
        %3796 = vmatprep.subr.bf16.mxu0 0
        %3797 = vmatpush1.bf16.msra.mxu0 %v2895
        %3798 = vmatprep.subr.bf16.mxu0 0
        %3799 = vmatpush1.bf16.msra.mxu0 %v2896
        %3800 = vmatprep.subr.bf16.mxu0 0
        %3801 = vmatpush1.bf16.msra.mxu0 %v2897
        %3802 = vmatprep.subr.bf16.mxu0 0
        %3803 = vmatpush1.bf16.msra.mxu0 %v2898
        %3804 = vmatprep.subr.bf16.mxu0 0
        %3805 = vmatpush1.bf16.msra.mxu0 %v2899
        %3806 = vmatprep.subr.bf16.mxu0 0
        %3807 = vmatpush1.bf16.msra.mxu0 %v2900
        %3808 = vmatprep.subr.bf16.mxu0 0
        %3809 = vmatpush1.bf16.msra.mxu0 %v2901
        %3810 = vmatprep.subr.bf16.mxu0 0
        %3811 = vmatpush1.bf16.msra.mxu0 %v2902
        %3812 = vmatprep.subr.bf16.mxu0 0
        %3813 = vmatpush1.bf16.msra.mxu0 %v2903
        %3814 = vmatprep.subr.bf16.mxu0 0
        %3815 = vmatpush1.bf16.msra.mxu0 %v2904
        %3816 = vmatprep.subr.bf16.mxu0 0
        %3817 = vmatpush1.bf16.msra.mxu0 %v2905
        %3818 = vmatprep.mubr.bf16.mxu0 %v1135
        %3819 = vmatmul.mubr.bf16.gmra.mrb[0].mxu0 %v1134
        %v3820 = vpop.f32.mrb[0].mxu0
        %v3821 = vadd.f32 %v3781, %v3820
        %v3822 = vpop.f32.mrb[0].mxu0
        %v3823 = vpop.f32.mrb[0].mxu0
        %v3824 = vpop.f32.mrb[0].mxu0
        %3825 = vdwg.mxu0
        %3826 = vmatprep.subr.bf16.mxu0 0
        %3827 = vmatpush1.bf16.msra.mxu0 %v2906
        %3828 = vmatprep.subr.bf16.mxu0 0
        %3829 = vmatpush1.bf16.msra.mxu0 %v2907
        %3830 = vmatprep.subr.bf16.mxu0 0
        %3831 = vmatpush1.bf16.msra.mxu0 %v2908
        %3832 = vmatprep.subr.bf16.mxu0 0
        %3833 = vmatpush1.bf16.msra.mxu0 %v2909
        %3834 = vmatprep.subr.bf16.mxu0 0
        %3835 = vmatpush1.bf16.msra.mxu0 %v2910
        %3836 = vmatprep.subr.bf16.mxu0 0
        %3837 = vmatpush1.bf16.msra.mxu0 %v2911
        %3838 = vmatprep.subr.bf16.mxu0 0
        %3839 = vmatpush1.bf16.msra.mxu0 %v2912
        %3840 = vmatprep.subr.bf16.mxu0 0
        %3841 = vmatpush1.bf16.msra.mxu0 %v2913
        %3842 = vmatprep.subr.bf16.mxu0 0
        %3843 = vmatpush1.bf16.msra.mxu0 %v2914
        %3844 = vmatprep.subr.bf16.mxu0 0
        %3845 = vmatpush1.bf16.msra.mxu0 %v2915
        %3846 = vmatprep.subr.bf16.mxu0 0
        %3847 = vmatpush1.bf16.msra.mxu0 %v2916
        %3848 = vmatprep.subr.bf16.mxu0 0
        %3849 = vmatpush1.bf16.msra.mxu0 %v2917
        %3850 = vmatprep.subr.bf16.mxu0 0
        %3851 = vmatpush1.bf16.msra.mxu0 %v2918
        %3852 = vmatprep.subr.bf16.mxu0 0
        %3853 = vmatpush1.bf16.msra.mxu0 %v2919
        %3854 = vmatprep.subr.bf16.mxu0 0
        %3855 = vmatpush1.bf16.msra.mxu0 %v2920
        %3856 = vmatprep.subr.bf16.mxu0 0
        %3857 = vmatpush1.bf16.msra.mxu0 %v2921
        %3858 = vmatprep.mubr.bf16.mxu0 %v1137
        %3859 = vmatmul.mubr.bf16.gmra.mrb[0].mxu0 %v1136
        %v3860 = vpop.f32.mrb[0].mxu0
        %v3861 = vadd.f32 %v3821, %v3860
        %v3862 = vpop.f32.mrb[0].mxu0
        %v3863 = vpop.f32.mrb[0].mxu0
        %v3864 = vpop.f32.mrb[0].mxu0
        %3865 = vdwg.mxu0
        %3866 = vmatprep.subr.bf16.mxu0 0
        %3867 = vmatpush1.bf16.msra.mxu0 %v2922
        %3868 = vmatprep.subr.bf16.mxu0 0
        %3869 = vmatpush1.bf16.msra.mxu0 %v2923
        %3870 = vmatprep.subr.bf16.mxu0 0
        %3871 = vmatpush1.bf16.msra.mxu0 %v2924
        %3872 = vmatprep.subr.bf16.mxu0 0
        %3873 = vmatpush1.bf16.msra.mxu0 %v2925
        %3874 = vmatprep.subr.bf16.mxu0 0
        %3875 = vmatpush1.bf16.msra.mxu0 %v2926
        %3876 = vmatprep.subr.bf16.mxu0 0
        %3877 = vmatpush1.bf16.msra.mxu0 %v2927
        %3878 = vmatprep.subr.bf16.mxu0 0
        %3879 = vmatpush1.bf16.msra.mxu0 %v2928
        %3880 = vmatprep.subr.bf16.mxu0 0
        %3881 = vmatpush1.bf16.msra.mxu0 %v2929
        %3882 = vmatprep.subr.bf16.mxu0 0
        %3883 = vmatpush1.bf16.msra.mxu0 %v2930
        %3884 = vmatprep.subr.bf16.mxu0 0
        %3885 = vmatpush1.bf16.msra.mxu0 %v2931
        %3886 = vmatprep.subr.bf16.mxu0 0
        %3887 = vmatpush1.bf16.msra.mxu0 %v2932
        %3888 = vmatprep.subr.bf16.mxu0 0
        %3889 = vmatpush1.bf16.msra.mxu0 %v2933
        %3890 = vmatprep.subr.bf16.mxu0 0
        %3891 = vmatpush1.bf16.msra.mxu0 %v2934
        %3892 = vmatprep.subr.bf16.mxu0 0
        %3893 = vmatpush1.bf16.msra.mxu0 %v2935
        %3894 = vmatprep.subr.bf16.mxu0 0
        %3895 = vmatpush1.bf16.msra.mxu0 %v2936
        %3896 = vmatprep.subr.bf16.mxu0 0
        %3897 = vmatpush1.bf16.msra.mxu0 %v2937
        %3898 = vmatprep.mubr.bf16.mxu0 %v1139
        %3899 = vmatmul.mubr.bf16.gmra.mrb[0].mxu0 %v1138
        %v3900 = vpop.f32.mrb[0].mxu0
        %v3901 = vadd.f32 %v3861, %v3900
        %v3902 = vpop.f32.mrb[0].mxu0
        %v3903 = vpop.f32.mrb[0].mxu0
        %v3904 = vpop.f32.mrb[0].mxu0
        %3905 = vdwg.mxu0
        %3906 = vmatprep.subr.bf16.mxu0 0
        %3907 = vmatpush1.bf16.msra.mxu0 %v2938
        %3908 = vmatprep.subr.bf16.mxu0 0
        %3909 = vmatpush1.bf16.msra.mxu0 %v2939
        %3910 = vmatprep.subr.bf16.mxu0 0
        %3911 = vmatpush1.bf16.msra.mxu0 %v2940
        %3912 = vmatprep.subr.bf16.mxu0 0
        %3913 = vmatpush1.bf16.msra.mxu0 %v2941
        %3914 = vmatprep.subr.bf16.mxu0 0
        %3915 = vmatpush1.bf16.msra.mxu0 %v2942
        %3916 = vmatprep.subr.bf16.mxu0 0
        %3917 = vmatpush1.bf16.msra.mxu0 %v2943
        %3918 = vmatprep.subr.bf16.mxu0 0
        %3919 = vmatpush1.bf16.msra.mxu0 %v2944
        %3920 = vmatprep.subr.bf16.mxu0 0
        %3921 = vmatpush1.bf16.msra.mxu0 %v2945
        %3922 = vmatprep.subr.bf16.mxu0 0
        %3923 = vmatpush1.bf16.msra.mxu0 %v2946
        %3924 = vmatprep.subr.bf16.mxu0 0
        %3925 = vmatpush1.bf16.msra.mxu0 %v2947
        %3926 = vmatprep.subr.bf16.mxu0 0
        %3927 = vmatpush1.bf16.msra.mxu0 %v2948
        %3928 = vmatprep.subr.bf16.mxu0 0
        %3929 = vmatpush1.bf16.msra.mxu0 %v2949
        %3930 = vmatprep.subr.bf16.mxu0 0
        %3931 = vmatpush1.bf16.msra.mxu0 %v2950
        %3932 = vmatprep.subr.bf16.mxu0 0
        %3933 = vmatpush1.bf16.msra.mxu0 %v2951
        %3934 = vmatprep.subr.bf16.mxu0 0
        %3935 = vmatpush1.bf16.msra.mxu0 %v2952
        %3936 = vmatprep.subr.bf16.mxu0 0
        %3937 = vmatpush1.bf16.msra.mxu0 %v2953
        %3938 = vmatprep.mubr.bf16.mxu0 %v1141
        %3939 = vmatmul.mubr.bf16.gmra.mrb[0].mxu0 %v1140
        %v3940 = vpop.f32.mrb[0].mxu0
        %v3941 = vadd.f32 %v3901, %v3940
        %v3942 = vpop.f32.mrb[0].mxu0
        %v3943 = vpop.f32.mrb[0].mxu0
        %v3944 = vpop.f32.mrb[0].mxu0
        %3945 = vdwg.mxu0
        %3946 = vmatprep.subr.bf16.mxu0 0
        %3947 = vmatpush1.bf16.msra.mxu0 %v2954
        %3948 = vmatprep.subr.bf16.mxu0 0
        %3949 = vmatpush1.bf16.msra.mxu0 %v2955
        %3950 = vmatprep.subr.bf16.mxu0 0
        %3951 = vmatpush1.bf16.msra.mxu0 %v2956
        %3952 = vmatprep.subr.bf16.mxu0 0
        %3953 = vmatpush1.bf16.msra.mxu0 %v2957
        %3954 = vmatprep.subr.bf16.mxu0 0
        %3955 = vmatpush1.bf16.msra.mxu0 %v2958
        %3956 = vmatprep.subr.bf16.mxu0 0
        %3957 = vmatpush1.bf16.msra.mxu0 %v2959
        %3958 = vmatprep.subr.bf16.mxu0 0
        %3959 = vmatpush1.bf16.msra.mxu0 %v2960
        %3960 = vmatprep.subr.bf16.mxu0 0
        %3961 = vmatpush1.bf16.msra.mxu0 %v2961
        %3962 = vmatprep.subr.bf16.mxu0 0
        %3963 = vmatpush1.bf16.msra.mxu0 %v2962
        %3964 = vmatprep.subr.bf16.mxu0 0
        %3965 = vmatpush1.bf16.msra.mxu0 %v2963
        %3966 = vmatprep.subr.bf16.mxu0 0
        %3967 = vmatpush1.bf16.msra.mxu0 %v2964
        %3968 = vmatprep.subr.bf16.mxu0 0
        %3969 = vmatpush1.bf16.msra.mxu0 %v2965
        %3970 = vmatprep.subr.bf16.mxu0 0
        %3971 = vmatpush1.bf16.msra.mxu0 %v2966
        %3972 = vmatprep.subr.bf16.mxu0 0
        %3973 = vmatpush1.bf16.msra.mxu0 %v2967
        %3974 = vmatprep.subr.bf16.mxu0 0
        %3975 = vmatpush1.bf16.msra.mxu0 %v2968
        %3976 = vmatprep.subr.bf16.mxu0 0
        %3977 = vmatpush1.bf16.msra.mxu0 %v2969
        %3978 = vmatprep.mubr.bf16.mxu0 %v1143
        %3979 = vmatmul.mubr.bf16.gmra.mrb[0].mxu0 %v1142
        %v3980 = vpop.f32.mrb[0].mxu0
        %v3981 = vadd.f32 %v3941, %v3980
        %v3982 = vpop.f32.mrb[0].mxu0
        %v3983 = vpop.f32.mrb[0].mxu0
        %v3984 = vpop.f32.mrb[0].mxu0
        %3985 = vdwg.mxu0
        %3986 = vmatprep.subr.bf16.mxu0 0
        %3987 = vmatpush1.bf16.msra.mxu0 %v2970
        %3988 = vmatprep.subr.bf16.mxu0 0
        %3989 = vmatpush1.bf16.msra.mxu0 %v2971
        %3990 = vmatprep.subr.bf16.mxu0 0
        %3991 = vmatpush1.bf16.msra.mxu0 %v2972
        %3992 = vmatprep.subr.bf16.mxu0 0
        %3993 = vmatpush1.bf16.msra.mxu0 %v2973
        %3994 = vmatprep.subr.bf16.mxu0 0
        %3995 = vmatpush1.bf16.msra.mxu0 %v2974
        %3996 = vmatprep.subr.bf16.mxu0 0
        %3997 = vmatpush1.bf16.msra.mxu0 %v2975
        %3998 = vmatprep.subr.bf16.mxu0 0
        %3999 = vmatpush1.bf16.msra.mxu0 %v2976
        %4000 = vmatprep.subr.bf16.mxu0 0
        %4001 = vmatpush1.bf16.msra.mxu0 %v2977
        %4002 = vmatprep.subr.bf16.mxu0 0
        %4003 = vmatpush1.bf16.msra.mxu0 %v2978
        %4004 = vmatprep.subr.bf16.mxu0 0
        %4005 = vmatpush1.bf16.msra.mxu0 %v2979
        %4006 = vmatprep.subr.bf16.mxu0 0
        %4007 = vmatpush1.bf16.msra.mxu0 %v2980
        %4008 = vmatprep.subr.bf16.mxu0 0
        %4009 = vmatpush1.bf16.msra.mxu0 %v2981
        %4010 = vmatprep.subr.bf16.mxu0 0
        %4011 = vmatpush1.bf16.msra.mxu0 %v2982
        %4012 = vmatprep.subr.bf16.mxu0 0
        %4013 = vmatpush1.bf16.msra.mxu0 %v2983
        %4014 = vmatprep.subr.bf16.mxu0 0
        %4015 = vmatpush1.bf16.msra.mxu0 %v2984
        %4016 = vmatprep.subr.bf16.mxu0 0
        %4017 = vmatpush1.bf16.msra.mxu0 %v2985
        %4018 = vmatprep.mubr.bf16.mxu0 %v1145
        %4019 = vmatmul.mubr.bf16.gmra.mrb[0].mxu0 %v1144
        %v4020 = vpop.f32.mrb[0].mxu0
        %v4021 = vadd.f32 %v3981, %v4020
        %v4022 = vpop.f32.mrb[0].mxu0
        %v4023 = vpop.f32.mrb[0].mxu0
        %v4024 = vpop.f32.mrb[0].mxu0
        %4025 = vdwg.mxu0
        %4026 = vmatprep.subr.bf16.mxu0 0
        %4027 = vmatpush1.bf16.msra.mxu0 %v2986
        %4028 = vmatprep.subr.bf16.mxu0 0
        %4029 = vmatpush1.bf16.msra.mxu0 %v2987
        %4030 = vmatprep.subr.bf16.mxu0 0
        %4031 = vmatpush1.bf16.msra.mxu0 %v2988
        %4032 = vmatprep.subr.bf16.mxu0 0
        %4033 = vmatpush1.bf16.msra.mxu0 %v2989
        %4034 = vmatprep.subr.bf16.mxu0 0
        %4035 = vmatpush1.bf16.msra.mxu0 %v2990
        %4036 = vmatprep.subr.bf16.mxu0 0
        %4037 = vmatpush1.bf16.msra.mxu0 %v2991
        %4038 = vmatprep.subr.bf16.mxu0 0
        %4039 = vmatpush1.bf16.msra.mxu0 %v2992
        %4040 = vmatprep.subr.bf16.mxu0 0
        %4041 = vmatpush1.bf16.msra.mxu0 %v2993
        %4042 = vmatprep.subr.bf16.mxu0 0
        %4043 = vmatpush1.bf16.msra.mxu0 %v2994
        %4044 = vmatprep.subr.bf16.mxu0 0
        %4045 = vmatpush1.bf16.msra.mxu0 %v2995
        %4046 = vmatprep.subr.bf16.mxu0 0
        %4047 = vmatpush1.bf16.msra.mxu0 %v2996
        %4048 = vmatprep.subr.bf16.mxu0 0
        %4049 = vmatpush1.bf16.msra.mxu0 %v2997
        %4050 = vmatprep.subr.bf16.mxu0 0
        %4051 = vmatpush1.bf16.msra.mxu0 %v2998
        %4052 = vmatprep.subr.bf16.mxu0 0
        %4053 = vmatpush1.bf16.msra.mxu0 %v2999
        %4054 = vmatprep.subr.bf16.mxu0 0
        %4055 = vmatpush1.bf16.msra.mxu0 %v3000
        %4056 = vmatprep.subr.bf16.mxu0 0
        %4057 = vmatpush1.bf16.msra.mxu0 %v3001
        %4058 = vmatprep.mubr.bf16.mxu0 %v1147
        %4059 = vmatmul.mubr.bf16.gmra.mrb[0].mxu0 %v1146
        %v4060 = vpop.f32.mrb[0].mxu0
        %v4061 = vadd.f32 %v4021, %v4060
        %v4062 = vpop.f32.mrb[0].mxu0
        %v4063 = vpop.f32.mrb[0].mxu0
        %v4064 = vpop.f32.mrb[0].mxu0
        %4065 = vdwg.mxu0
        %4066 = vmatprep.subr.bf16.mxu0 0
        %4067 = vmatpush1.bf16.msra.mxu0 %v3002
        %4068 = vmatprep.subr.bf16.mxu0 0
        %4069 = vmatpush1.bf16.msra.mxu0 %v3003
        %4070 = vmatprep.subr.bf16.mxu0 0
        %4071 = vmatpush1.bf16.msra.mxu0 %v3004
        %4072 = vmatprep.subr.bf16.mxu0 0
        %4073 = vmatpush1.bf16.msra.mxu0 %v3005
        %4074 = vmatprep.subr.bf16.mxu0 0
        %4075 = vmatpush1.bf16.msra.mxu0 %v3006
        %4076 = vmatprep.subr.bf16.mxu0 0
        %4077 = vmatpush1.bf16.msra.mxu0 %v3007
        %4078 = vmatprep.subr.bf16.mxu0 0
        %4079 = vmatpush1.bf16.msra.mxu0 %v3008
        %4080 = vmatprep.subr.bf16.mxu0 0
        %4081 = vmatpush1.bf16.msra.mxu0 %v3009
        %4082 = vmatprep.subr.bf16.mxu0 0
        %4083 = vmatpush1.bf16.msra.mxu0 %v3010
        %4084 = vmatprep.subr.bf16.mxu0 0
        %4085 = vmatpush1.bf16.msra.mxu0 %v3011
        %4086 = vmatprep.subr.bf16.mxu0 0
        %4087 = vmatpush1.bf16.msra.mxu0 %v3012
        %4088 = vmatprep.subr.bf16.mxu0 0
        %4089 = vmatpush1.bf16.msra.mxu0 %v3013
        %4090 = vmatprep.subr.bf16.mxu0 0
        %4091 = vmatpush1.bf16.msra.mxu0 %v3014
        %4092 = vmatprep.subr.bf16.mxu0 0
        %4093 = vmatpush1.bf16.msra.mxu0 %v3015
        %4094 = vmatprep.subr.bf16.mxu0 0
        %4095 = vmatpush1.bf16.msra.mxu0 %v3016
        %4096 = vmatprep.subr.bf16.mxu0 0
        %4097 = vmatpush1.bf16.msra.mxu0 %v3017
        %4098 = vmatprep.mubr.bf16.mxu0 %v1149
        %4099 = vmatmul.mubr.bf16.gmra.mrb[0].mxu0 %v1148
        %v4100 = vpop.f32.mrb[0].mxu0
        %v4101 = vadd.f32 %v4061, %v4100
        %v4102 = vpop.f32.mrb[0].mxu0
        %v4103 = vpop.f32.mrb[0].mxu0
        %v4104 = vpop.f32.mrb[0].mxu0
        %4105 = vdwg.mxu0
        %4106 = vmatprep.subr.bf16.mxu0 0
        %4107 = vmatpush1.bf16.msra.mxu0 %v3018
        %4108 = vmatprep.subr.bf16.mxu0 0
        %4109 = vmatpush1.bf16.msra.mxu0 %v3019
        %4110 = vmatprep.subr.bf16.mxu0 0
        %4111 = vmatpush1.bf16.msra.mxu0 %v3020
        %4112 = vmatprep.subr.bf16.mxu0 0
        %4113 = vmatpush1.bf16.msra.mxu0 %v3021
        %4114 = vmatprep.subr.bf16.mxu0 0
        %4115 = vmatpush1.bf16.msra.mxu0 %v3022
        %4116 = vmatprep.subr.bf16.mxu0 0
        %4117 = vmatpush1.bf16.msra.mxu0 %v3023
        %4118 = vmatprep.subr.bf16.mxu0 0
        %4119 = vmatpush1.bf16.msra.mxu0 %v3024
        %4120 = vmatprep.subr.bf16.mxu0 0
        %4121 = vmatpush1.bf16.msra.mxu0 %v3025
        %4122 = vmatprep.subr.bf16.mxu0 0
        %4123 = vmatpush1.bf16.msra.mxu0 %v3026
        %4124 = vmatprep.subr.bf16.mxu0 0
        %4125 = vmatpush1.bf16.msra.mxu0 %v3027
        %4126 = vmatprep.subr.bf16.mxu0 0
        %4127 = vmatpush1.bf16.msra.mxu0 %v3028
        %4128 = vmatprep.subr.bf16.mxu0 0
        %4129 = vmatpush1.bf16.msra.mxu0 %v3029
        %4130 = vmatprep.subr.bf16.mxu0 0
        %4131 = vmatpush1.bf16.msra.mxu0 %v3030
        %4132 = vmatprep.subr.bf16.mxu0 0
        %4133 = vmatpush1.bf16.msra.mxu0 %v3031
        %4134 = vmatprep.subr.bf16.mxu0 0
        %4135 = vmatpush1.bf16.msra.mxu0 %v3032
        %4136 = vmatprep.subr.bf16.mxu0 0
        %4137 = vmatpush1.bf16.msra.mxu0 %v3033
        %4138 = vmatprep.mubr.bf16.mxu0 %v1151
        %4139 = vmatmul.mubr.bf16.gmra.mrb[0].mxu0 %v1150
        %v4140 = vpop.f32.mrb[0].mxu0
        %v4141 = vadd.f32 %v4101, %v4140
        %v4142 = vpop.f32.mrb[0].mxu0
        %v4143 = vpop.f32.mrb[0].mxu0
        %v4144 = vpop.f32.mrb[0].mxu0
        %4145 = vdwg.mxu0
        %4146 = vmatprep.subr.bf16.mxu0 0
        %4147 = vmatpush1.bf16.msra.mxu0 %v3034
        %4148 = vmatprep.subr.bf16.mxu0 0
        %4149 = vmatpush1.bf16.msra.mxu0 %v3035
        %4150 = vmatprep.subr.bf16.mxu0 0
        %4151 = vmatpush1.bf16.msra.mxu0 %v3036
        %4152 = vmatprep.subr.bf16.mxu0 0
        %4153 = vmatpush1.bf16.msra.mxu0 %v3037
        %4154 = vmatprep.subr.bf16.mxu0 0
        %4155 = vmatpush1.bf16.msra.mxu0 %v3038
        %4156 = vmatprep.subr.bf16.mxu0 0
        %4157 = vmatpush1.bf16.msra.mxu0 %v3039
        %4158 = vmatprep.subr.bf16.mxu0 0
        %4159 = vmatpush1.bf16.msra.mxu0 %v3040
        %4160 = vmatprep.subr.bf16.mxu0 0
        %4161 = vmatpush1.bf16.msra.mxu0 %v3041
        %4162 = vmatprep.subr.bf16.mxu0 0
        %4163 = vmatpush1.bf16.msra.mxu0 %v3042
        %4164 = vmatprep.subr.bf16.mxu0 0
        %4165 = vmatpush1.bf16.msra.mxu0 %v3043
        %4166 = vmatprep.subr.bf16.mxu0 0
        %4167 = vmatpush1.bf16.msra.mxu0 %v3044
        %4168 = vmatprep.subr.bf16.mxu0 0
        %4169 = vmatpush1.bf16.msra.mxu0 %v3045
        %4170 = vmatprep.subr.bf16.mxu0 0
        %4171 = vmatpush1.bf16.msra.mxu0 %v3046
        %4172 = vmatprep.subr.bf16.mxu0 0
        %4173 = vmatpush1.bf16.msra.mxu0 %v3047
        %4174 = vmatprep.subr.bf16.mxu0 0
        %4175 = vmatpush1.bf16.msra.mxu0 %v3048
        %4176 = vmatprep.subr.bf16.mxu0 0
        %4177 = vmatpush1.bf16.msra.mxu0 %v3049
        %4178 = vmatprep.mubr.bf16.mxu0 %v1153
        %4179 = vmatmul.mubr.bf16.gmra.mrb[0].mxu0 %v1152
        %v4180 = vpop.f32.mrb[0].mxu0
        %v4181 = vadd.f32 %v4141, %v4180
        %v4182 = vpop.f32.mrb[0].mxu0
        %v4183 = vpop.f32.mrb[0].mxu0
        %v4184 = vpop.f32.mrb[0].mxu0
        %4185 = vdwg.mxu0
        %4186 = vmatprep.subr.bf16.mxu0 0
        %4187 = vmatpush1.bf16.msra.mxu0 %v3050
        %4188 = vmatprep.subr.bf16.mxu0 0
        %4189 = vmatpush1.bf16.msra.mxu0 %v3051
        %4190 = vmatprep.subr.bf16.mxu0 0
        %4191 = vmatpush1.bf16.msra.mxu0 %v3052
        %4192 = vmatprep.subr.bf16.mxu0 0
        %4193 = vmatpush1.bf16.msra.mxu0 %v3053
        %4194 = vmatprep.subr.bf16.mxu0 0
        %4195 = vmatpush1.bf16.msra.mxu0 %v3054
        %4196 = vmatprep.subr.bf16.mxu0 0
        %4197 = vmatpush1.bf16.msra.mxu0 %v3055
        %4198 = vmatprep.subr.bf16.mxu0 0
        %4199 = vmatpush1.bf16.msra.mxu0 %v3056
        %4200 = vmatprep.subr.bf16.mxu0 0
        %4201 = vmatpush1.bf16.msra.mxu0 %v3057
        %4202 = vmatprep.subr.bf16.mxu0 0
        %4203 = vmatpush1.bf16.msra.mxu0 %v3058
        %4204 = vmatprep.subr.bf16.mxu0 0
        %4205 = vmatpush1.bf16.msra.mxu0 %v3059
        %4206 = vmatprep.subr.bf16.mxu0 0
        %4207 = vmatpush1.bf16.msra.mxu0 %v3060
        %4208 = vmatprep.subr.bf16.mxu0 0
        %4209 = vmatpush1.bf16.msra.mxu0 %v3061
        %4210 = vmatprep.subr.bf16.mxu0 0
        %4211 = vmatpush1.bf16.msra.mxu0 %v3062
        %4212 = vmatprep.subr.bf16.mxu0 0
        %4213 = vmatpush1.bf16.msra.mxu0 %v3063
        %4214 = vmatprep.subr.bf16.mxu0 0
        %4215 = vmatpush1.bf16.msra.mxu0 %v3064
        %4216 = vmatprep.subr.bf16.mxu0 0
        %4217 = vmatpush1.bf16.msra.mxu0 %v3065
        %4218 = vmatprep.mubr.bf16.mxu0 %v1155
        %4219 = vmatmul.mubr.bf16.gmra.mrb[0].mxu0 %v1154
        %v4220 = vpop.f32.mrb[0].mxu0
        %v4221 = vadd.f32 %v4181, %v4220
        %v4222 = vpop.f32.mrb[0].mxu0
        %v4223 = vpop.f32.mrb[0].mxu0
        %v4224 = vpop.f32.mrb[0].mxu0
        %4225 = vdwg.mxu0
        %4226 = vmatprep.subr.bf16.mxu0 0
        %4227 = vmatpush1.bf16.msra.mxu0 %v3066
        %4228 = vmatprep.subr.bf16.mxu0 0
        %4229 = vmatpush1.bf16.msra.mxu0 %v3067
        %4230 = vmatprep.subr.bf16.mxu0 0
        %4231 = vmatpush1.bf16.msra.mxu0 %v3068
        %4232 = vmatprep.subr.bf16.mxu0 0
        %4233 = vmatpush1.bf16.msra.mxu0 %v3069
        %4234 = vmatprep.subr.bf16.mxu0 0
        %4235 = vmatpush1.bf16.msra.mxu0 %v3070
        %4236 = vmatprep.subr.bf16.mxu0 0
        %4237 = vmatpush1.bf16.msra.mxu0 %v3071
        %4238 = vmatprep.subr.bf16.mxu0 0
        %4239 = vmatpush1.bf16.msra.mxu0 %v3072
        %4240 = vmatprep.subr.bf16.mxu0 0
        %4241 = vmatpush1.bf16.msra.mxu0 %v3073
        %4242 = vmatprep.subr.bf16.mxu0 0
        %4243 = vmatpush1.bf16.msra.mxu0 %v3074
        %4244 = vmatprep.subr.bf16.mxu0 0
        %4245 = vmatpush1.bf16.msra.mxu0 %v3075
        %4246 = vmatprep.subr.bf16.mxu0 0
        %4247 = vmatpush1.bf16.msra.mxu0 %v3076
        %4248 = vmatprep.subr.bf16.mxu0 0
        %4249 = vmatpush1.bf16.msra.mxu0 %v3077
        %4250 = vmatprep.subr.bf16.mxu0 0
        %4251 = vmatpush1.bf16.msra.mxu0 %v3078
        %4252 = vmatprep.subr.bf16.mxu0 0
        %4253 = vmatpush1.bf16.msra.mxu0 %v3079
        %4254 = vmatprep.subr.bf16.mxu0 0
        %4255 = vmatpush1.bf16.msra.mxu0 %v3080
        %4256 = vmatprep.subr.bf16.mxu0 0
        %4257 = vmatpush1.bf16.msra.mxu0 %v3081
        %4258 = vmatprep.mubr.bf16.mxu0 %v1157
        %4259 = vmatmul.mubr.bf16.gmra.mrb[0].mxu0 %v1156
        %v4260 = vpop.f32.mrb[0].mxu0
        %v4261 = vadd.f32 %v4221, %v4260
        %v4262 = vpop.f32.mrb[0].mxu0
        %v4263 = vpop.f32.mrb[0].mxu0
        %v4264 = vpop.f32.mrb[0].mxu0
        %4265 = vdwg.mxu0
        %4266 = vmatprep.subr.bf16.mxu0 0
        %4267 = vmatpush1.bf16.msra.mxu0 %v3082
        %4268 = vmatprep.subr.bf16.mxu0 0
        %4269 = vmatpush1.bf16.msra.mxu0 %v3083
        %4270 = vmatprep.subr.bf16.mxu0 0
        %4271 = vmatpush1.bf16.msra.mxu0 %v3084
        %4272 = vmatprep.subr.bf16.mxu0 0
        %4273 = vmatpush1.bf16.msra.mxu0 %v3085
        %4274 = vmatprep.subr.bf16.mxu0 0
        %4275 = vmatpush1.bf16.msra.mxu0 %v3086
        %4276 = vmatprep.subr.bf16.mxu0 0
        %4277 = vmatpush1.bf16.msra.mxu0 %v3087
        %4278 = vmatprep.subr.bf16.mxu0 0
        %4279 = vmatpush1.bf16.msra.mxu0 %v3088
        %4280 = vmatprep.subr.bf16.mxu0 0
        %4281 = vmatpush1.bf16.msra.mxu0 %v3089
        %4282 = vmatprep.subr.bf16.mxu0 0
        %4283 = vmatpush1.bf16.msra.mxu0 %v3090
        %4284 = vmatprep.subr.bf16.mxu0 0
        %4285 = vmatpush1.bf16.msra.mxu0 %v3091
        %4286 = vmatprep.subr.bf16.mxu0 0
        %4287 = vmatpush1.bf16.msra.mxu0 %v3092
        %4288 = vmatprep.subr.bf16.mxu0 0
        %4289 = vmatpush1.bf16.msra.mxu0 %v3093
        %4290 = vmatprep.subr.bf16.mxu0 0
        %4291 = vmatpush1.bf16.msra.mxu0 %v3094
        %4292 = vmatprep.subr.bf16.mxu0 0
        %4293 = vmatpush1.bf16.msra.mxu0 %v3095
        %4294 = vmatprep.subr.bf16.mxu0 0
        %4295 = vmatpush1.bf16.msra.mxu0 %v3096
        %4296 = vmatprep.subr.bf16.mxu0 0
        %4297 = vmatpush1.bf16.msra.mxu0 %v3097
        %4298 = vmatprep.mubr.bf16.mxu0 %v1159
        %4299 = vmatmul.mubr.bf16.gmra.mrb[0].mxu0 %v1158
        %v4300 = vpop.f32.mrb[0].mxu0
        %v4301 = vadd.f32 %v4261, %v4300
        %v4302 = vpop.f32.mrb[0].mxu0
        %v4303 = vpop.f32.mrb[0].mxu0
        %v4304 = vpop.f32.mrb[0].mxu0
        %4305 = vdwg.mxu0
        %4306 = vmatprep.subr.bf16.mxu0 0
        %4307 = vmatpush1.bf16.msra.mxu0 %v3098
        %4308 = vmatprep.subr.bf16.mxu0 0
        %4309 = vmatpush1.bf16.msra.mxu0 %v3099
        %4310 = vmatprep.subr.bf16.mxu0 0
        %4311 = vmatpush1.bf16.msra.mxu0 %v3100
        %4312 = vmatprep.subr.bf16.mxu0 0
        %4313 = vmatpush1.bf16.msra.mxu0 %v3101
        %4314 = vmatprep.subr.bf16.mxu0 0
        %4315 = vmatpush1.bf16.msra.mxu0 %v3102
        %4316 = vmatprep.subr.bf16.mxu0 0
        %4317 = vmatpush1.bf16.msra.mxu0 %v3103
        %4318 = vmatprep.subr.bf16.mxu0 0
        %4319 = vmatpush1.bf16.msra.mxu0 %v3104
        %4320 = vmatprep.subr.bf16.mxu0 0
        %4321 = vmatpush1.bf16.msra.mxu0 %v3105
        %4322 = vmatprep.subr.bf16.mxu0 0
        %4323 = vmatpush1.bf16.msra.mxu0 %v3106
        %4324 = vmatprep.subr.bf16.mxu0 0
        %4325 = vmatpush1.bf16.msra.mxu0 %v3107
        %4326 = vmatprep.subr.bf16.mxu0 0
        %4327 = vmatpush1.bf16.msra.mxu0 %v3108
        %4328 = vmatprep.subr.bf16.mxu0 0
        %4329 = vmatpush1.bf16.msra.mxu0 %v3109
        %4330 = vmatprep.subr.bf16.mxu0 0
        %4331 = vmatpush1.bf16.msra.mxu0 %v3110
        %4332 = vmatprep.subr.bf16.mxu0 0
        %4333 = vmatpush1.bf16.msra.mxu0 %v3111
        %4334 = vmatprep.subr.bf16.mxu0 0
        %4335 = vmatpush1.bf16.msra.mxu0 %v3112
        %4336 = vmatprep.subr.bf16.mxu0 0
        %4337 = vmatpush1.bf16.msra.mxu0 %v3113
        %4338 = vmatprep.mubr.bf16.mxu0 %v1161
        %4339 = vmatmul.mubr.bf16.gmra.mrb[0].mxu0 %v1160
        %v4340 = vpop.f32.mrb[0].mxu0
        %v4341 = vadd.f32 %v4301, %v4340
        %v4342 = vpop.f32.mrb[0].mxu0
        %v4343 = vpop.f32.mrb[0].mxu0
        %v4344 = vpop.f32.mrb[0].mxu0
        %4345 = vdwg.mxu0
        %4346 = vmatprep.subr.bf16.mxu0 0
        %4347 = vmatpush1.bf16.msra.mxu0 %v3114
        %4348 = vmatprep.subr.bf16.mxu0 0
        %4349 = vmatpush1.bf16.msra.mxu0 %v3115
        %4350 = vmatprep.subr.bf16.mxu0 0
        %4351 = vmatpush1.bf16.msra.mxu0 %v3116
        %4352 = vmatprep.subr.bf16.mxu0 0
        %4353 = vmatpush1.bf16.msra.mxu0 %v3117
        %4354 = vmatprep.subr.bf16.mxu0 0
        %4355 = vmatpush1.bf16.msra.mxu0 %v3118
        %4356 = vmatprep.subr.bf16.mxu0 0
        %4357 = vmatpush1.bf16.msra.mxu0 %v3119
        %4358 = vmatprep.subr.bf16.mxu0 0
        %4359 = vmatpush1.bf16.msra.mxu0 %v3120
        %4360 = vmatprep.subr.bf16.mxu0 0
        %4361 = vmatpush1.bf16.msra.mxu0 %v3121
        %4362 = vmatprep.subr.bf16.mxu0 0
        %4363 = vmatpush1.bf16.msra.mxu0 %v3122
        %4364 = vmatprep.subr.bf16.mxu0 0
        %4365 = vmatpush1.bf16.msra.mxu0 %v3123
        %4366 = vmatprep.subr.bf16.mxu0 0
        %4367 = vmatpush1.bf16.msra.mxu0 %v3124
        %4368 = vmatprep.subr.bf16.mxu0 0
        %4369 = vmatpush1.bf16.msra.mxu0 %v3125
        %4370 = vmatprep.subr.bf16.mxu0 0
        %4371 = vmatpush1.bf16.msra.mxu0 %v3126
        %4372 = vmatprep.subr.bf16.mxu0 0
        %4373 = vmatpush1.bf16.msra.mxu0 %v3127
        %4374 = vmatprep.subr.bf16.mxu0 0
        %4375 = vmatpush1.bf16.msra.mxu0 %v3128
        %4376 = vmatprep.subr.bf16.mxu0 0
        %4377 = vmatpush1.bf16.msra.mxu0 %v3129
        %4378 = vmatprep.mubr.bf16.mxu0 %v1163
        %4379 = vmatmul.mubr.bf16.gmra.mrb[0].mxu0 %v1162
        %v4380 = vpop.f32.mrb[0].mxu0
        %v4381 = vadd.f32 %v4341, %v4380
        %v4382 = vpop.f32.mrb[0].mxu0
        %v4383 = vpop.f32.mrb[0].mxu0
        %v4384 = vpop.f32.mrb[0].mxu0
        %4385 = vdwg.mxu0
        %4386 = vmatprep.subr.bf16.mxu0 0
        %4387 = vmatpush1.bf16.msra.mxu0 %v3130
        %4388 = vmatprep.subr.bf16.mxu0 0
        %4389 = vmatpush1.bf16.msra.mxu0 %v3131
        %4390 = vmatprep.subr.bf16.mxu0 0
        %4391 = vmatpush1.bf16.msra.mxu0 %v3132
        %4392 = vmatprep.subr.bf16.mxu0 0
        %4393 = vmatpush1.bf16.msra.mxu0 %v3133
        %4394 = vmatprep.subr.bf16.mxu0 0
        %4395 = vmatpush1.bf16.msra.mxu0 %v3134
        %4396 = vmatprep.subr.bf16.mxu0 0
        %4397 = vmatpush1.bf16.msra.mxu0 %v3135
        %4398 = vmatprep.subr.bf16.mxu0 0
        %4399 = vmatpush1.bf16.msra.mxu0 %v3136
        %4400 = vmatprep.subr.bf16.mxu0 0
        %4401 = vmatpush1.bf16.msra.mxu0 %v3137
        %4402 = vmatprep.subr.bf16.mxu0 0
        %4403 = vmatpush1.bf16.msra.mxu0 %v3138
        %4404 = vmatprep.subr.bf16.mxu0 0
        %4405 = vmatpush1.bf16.msra.mxu0 %v3139
        %4406 = vmatprep.subr.bf16.mxu0 0
        %4407 = vmatpush1.bf16.msra.mxu0 %v3140
        %4408 = vmatprep.subr.bf16.mxu0 0
        %4409 = vmatpush1.bf16.msra.mxu0 %v3141
        %4410 = vmatprep.subr.bf16.mxu0 0
        %4411 = vmatpush1.bf16.msra.mxu0 %v3142
        %4412 = vmatprep.subr.bf16.mxu0 0
        %4413 = vmatpush1.bf16.msra.mxu0 %v3143
        %4414 = vmatprep.subr.bf16.mxu0 0
        %4415 = vmatpush1.bf16.msra.mxu0 %v3144
        %4416 = vmatprep.subr.bf16.mxu0 0
        %4417 = vmatpush1.bf16.msra.mxu0 %v3145
        %4418 = vmatprep.mubr.bf16.mxu0 %v1165
        %4419 = vmatmul.mubr.bf16.gmra.mrb[0].mxu0 %v1164
        %v4420 = vpop.f32.mrb[0].mxu0
        %v4421 = vadd.f32 %v4381, %v4420
        %v4422 = vpop.f32.mrb[0].mxu0
        %v4423 = vpop.f32.mrb[0].mxu0
        %v4424 = vpop.f32.mrb[0].mxu0
        %4425 = vdwg.mxu0
        %4426 = vmatprep.subr.bf16.mxu0 0
        %4427 = vmatpush1.bf16.msra.mxu0 %v3146
        %4428 = vmatprep.subr.bf16.mxu0 0
        %4429 = vmatpush1.bf16.msra.mxu0 %v3147
        %4430 = vmatprep.subr.bf16.mxu0 0
        %4431 = vmatpush1.bf16.msra.mxu0 %v3148
        %4432 = vmatprep.subr.bf16.mxu0 0
        %4433 = vmatpush1.bf16.msra.mxu0 %v3149
        %4434 = vmatprep.subr.bf16.mxu0 0
        %4435 = vmatpush1.bf16.msra.mxu0 %v3150
        %4436 = vmatprep.subr.bf16.mxu0 0
        %4437 = vmatpush1.bf16.msra.mxu0 %v3151
        %4438 = vmatprep.subr.bf16.mxu0 0
        %4439 = vmatpush1.bf16.msra.mxu0 %v3152
        %4440 = vmatprep.subr.bf16.mxu0 0
        %4441 = vmatpush1.bf16.msra.mxu0 %v3153
        %4442 = vmatprep.subr.bf16.mxu0 0
        %4443 = vmatpush1.bf16.msra.mxu0 %v3154
        %4444 = vmatprep.subr.bf16.mxu0 0
        %4445 = vmatpush1.bf16.msra.mxu0 %v3155
        %4446 = vmatprep.subr.bf16.mxu0 0
        %4447 = vmatpush1.bf16.msra.mxu0 %v3156
        %4448 = vmatprep.subr.bf16.mxu0 0
        %4449 = vmatpush1.bf16.msra.mxu0 %v3157
        %4450 = vmatprep.subr.bf16.mxu0 0
        %4451 = vmatpush1.bf16.msra.mxu0 %v3158
        %4452 = vmatprep.subr.bf16.mxu0 0
        %4453 = vmatpush1.bf16.msra.mxu0 %v3159
        %4454 = vmatprep.subr.bf16.mxu0 0
        %4455 = vmatpush1.bf16.msra.mxu0 %v3160
        %4456 = vmatprep.subr.bf16.mxu0 0
        %4457 = vmatpush1.bf16.msra.mxu0 %v3161
        %4458 = vmatprep.mubr.bf16.mxu0 %v1167
        %4459 = vmatmul.mubr.bf16.gmra.mrb[0].mxu0 %v1166
        %v4460 = vpop.f32.mrb[0].mxu0
        %v4461 = vadd.f32 %v4421, %v4460
        %v4462 = vpop.f32.mrb[0].mxu0
        %v4463 = vpop.f32.mrb[0].mxu0
        %v4464 = vpop.f32.mrb[0].mxu0
        %4465 = vdwg.mxu0
        %4466 = vmatprep.subr.bf16.mxu0 0
        %4467 = vmatpush1.bf16.msra.mxu0 %v3162
        %4468 = vmatprep.subr.bf16.mxu0 0
        %4469 = vmatpush1.bf16.msra.mxu0 %v3163
        %4470 = vmatprep.subr.bf16.mxu0 0
        %4471 = vmatpush1.bf16.msra.mxu0 %v3164
        %4472 = vmatprep.subr.bf16.mxu0 0
        %4473 = vmatpush1.bf16.msra.mxu0 %v3165
        %4474 = vmatprep.subr.bf16.mxu0 0
        %4475 = vmatpush1.bf16.msra.mxu0 %v3166
        %4476 = vmatprep.subr.bf16.mxu0 0
        %4477 = vmatpush1.bf16.msra.mxu0 %v3167
        %4478 = vmatprep.subr.bf16.mxu0 0
        %4479 = vmatpush1.bf16.msra.mxu0 %v3168
        %4480 = vmatprep.subr.bf16.mxu0 0
        %4481 = vmatpush1.bf16.msra.mxu0 %v3169
        %4482 = vmatprep.subr.bf16.mxu0 0
        %4483 = vmatpush1.bf16.msra.mxu0 %v3170
        %4484 = vmatprep.subr.bf16.mxu0 0
        %4485 = vmatpush1.bf16.msra.mxu0 %v3171
        %4486 = vmatprep.subr.bf16.mxu0 0
        %4487 = vmatpush1.bf16.msra.mxu0 %v3172
        %4488 = vmatprep.subr.bf16.mxu0 0
        %4489 = vmatpush1.bf16.msra.mxu0 %v3173
        %4490 = vmatprep.subr.bf16.mxu0 0
        %4491 = vmatpush1.bf16.msra.mxu0 %v3174
        %4492 = vmatprep.subr.bf16.mxu0 0
        %4493 = vmatpush1.bf16.msra.mxu0 %v3175
        %4494 = vmatprep.subr.bf16.mxu0 0
        %4495 = vmatpush1.bf16.msra.mxu0 %v3176
        %4496 = vmatprep.subr.bf16.mxu0 0
        %4497 = vmatpush1.bf16.msra.mxu0 %v3177
        %4498 = vmatprep.mubr.bf16.mxu0 %v1169
        %4499 = vmatmul.mubr.bf16.gmra.mrb[0].mxu0 %v1168
        %v4500 = vpop.f32.mrb[0].mxu0
        %v4501 = vadd.f32 %v4461, %v4500
        %v4502 = vpop.f32.mrb[0].mxu0
        %v4503 = vpop.f32.mrb[0].mxu0
        %v4504 = vpop.f32.mrb[0].mxu0
        %4505 = vdwg.mxu0
        %4506 = vmatprep.subr.bf16.mxu0 0
        %4507 = vmatpush1.bf16.msra.mxu0 %v3178
        %4508 = vmatprep.subr.bf16.mxu0 0
        %4509 = vmatpush1.bf16.msra.mxu0 %v3179
        %4510 = vmatprep.subr.bf16.mxu0 0
        %4511 = vmatpush1.bf16.msra.mxu0 %v3180
        %4512 = vmatprep.subr.bf16.mxu0 0
        %4513 = vmatpush1.bf16.msra.mxu0 %v3181
        %4514 = vmatprep.subr.bf16.mxu0 0
        %4515 = vmatpush1.bf16.msra.mxu0 %v3182
        %4516 = vmatprep.subr.bf16.mxu0 0
        %4517 = vmatpush1.bf16.msra.mxu0 %v3183
        %4518 = vmatprep.subr.bf16.mxu0 0
        %4519 = vmatpush1.bf16.msra.mxu0 %v3184
        %4520 = vmatprep.subr.bf16.mxu0 0
        %4521 = vmatpush1.bf16.msra.mxu0 %v3185
        %4522 = vmatprep.subr.bf16.mxu0 0
        %4523 = vmatpush1.bf16.msra.mxu0 %v3186
        %4524 = vmatprep.subr.bf16.mxu0 0
        %4525 = vmatpush1.bf16.msra.mxu0 %v3187
        %4526 = vmatprep.subr.bf16.mxu0 0
        %4527 = vmatpush1.bf16.msra.mxu0 %v3188
        %4528 = vmatprep.subr.bf16.mxu0 0
        %4529 = vmatpush1.bf16.msra.mxu0 %v3189
        %4530 = vmatprep.subr.bf16.mxu0 0
        %4531 = vmatpush1.bf16.msra.mxu0 %v3190
        %4532 = vmatprep.subr.bf16.mxu0 0
        %4533 = vmatpush1.bf16.msra.mxu0 %v3191
        %4534 = vmatprep.subr.bf16.mxu0 0
        %4535 = vmatpush1.bf16.msra.mxu0 %v3192
        %4536 = vmatprep.subr.bf16.mxu0 0
        %4537 = vmatpush1.bf16.msra.mxu0 %v3193
        %4538 = vmatprep.mubr.bf16.mxu0 %v1171
        %4539 = vmatmul.mubr.bf16.gmra.mrb[0].mxu0 %v1170
        %v4540 = vpop.f32.mrb[0].mxu0
        %v4541 = vadd.f32 %v4501, %v4540
        %v4542 = vpop.f32.mrb[0].mxu0
        %v4543 = vpop.f32.mrb[0].mxu0
        %v4544 = vpop.f32.mrb[0].mxu0
        %4545 = vdwg.mxu0
        %4546 = vmatprep.subr.bf16.mxu0 0
        %4547 = vmatpush1.bf16.msra.mxu0 %v3194
        %4548 = vmatprep.subr.bf16.mxu0 0
        %4549 = vmatpush1.bf16.msra.mxu0 %v3195
        %4550 = vmatprep.subr.bf16.mxu0 0
        %4551 = vmatpush1.bf16.msra.mxu0 %v3196
        %4552 = vmatprep.subr.bf16.mxu0 0
        %4553 = vmatpush1.bf16.msra.mxu0 %v3197
        %4554 = vmatprep.subr.bf16.mxu0 0
        %4555 = vmatpush1.bf16.msra.mxu0 %v3198
        %4556 = vmatprep.subr.bf16.mxu0 0
        %4557 = vmatpush1.bf16.msra.mxu0 %v3199
        %4558 = vmatprep.subr.bf16.mxu0 0
        %4559 = vmatpush1.bf16.msra.mxu0 %v3200
        %4560 = vmatprep.subr.bf16.mxu0 0
        %4561 = vmatpush1.bf16.msra.mxu0 %v3201
        %4562 = vmatprep.subr.bf16.mxu0 0
        %4563 = vmatpush1.bf16.msra.mxu0 %v3202
        %4564 = vmatprep.subr.bf16.mxu0 0
        %4565 = vmatpush1.bf16.msra.mxu0 %v3203
        %4566 = vmatprep.subr.bf16.mxu0 0
        %4567 = vmatpush1.bf16.msra.mxu0 %v3204
        %4568 = vmatprep.subr.bf16.mxu0 0
        %4569 = vmatpush1.bf16.msra.mxu0 %v3205
        %4570 = vmatprep.subr.bf16.mxu0 0
        %4571 = vmatpush1.bf16.msra.mxu0 %v3206
        %4572 = vmatprep.subr.bf16.mxu0 0
        %4573 = vmatpush1.bf16.msra.mxu0 %v3207
        %4574 = vmatprep.subr.bf16.mxu0 0
        %4575 = vmatpush1.bf16.msra.mxu0 %v3208
        %4576 = vmatprep.subr.bf16.mxu0 0
        %4577 = vmatpush1.bf16.msra.mxu0 %v3209
        %4578 = vmatprep.mubr.bf16.mxu0 %v1173
        %4579 = vmatmul.mubr.bf16.gmra.mrb[0].mxu0 %v1172
        %v4580 = vpop.f32.mrb[0].mxu0
        %v4581 = vadd.f32 %v4541, %v4580
        %v4582 = vpop.f32.mrb[0].mxu0
        %v4583 = vpop.f32.mrb[0].mxu0
        %v4584 = vpop.f32.mrb[0].mxu0
        %4585 = vdwg.mxu0
        %4586 = vmatprep.subr.bf16.mxu0 0
        %4587 = vmatpush1.bf16.msra.mxu0 %v3210
        %4588 = vmatprep.subr.bf16.mxu0 0
        %4589 = vmatpush1.bf16.msra.mxu0 %v3211
        %4590 = vmatprep.subr.bf16.mxu0 0
        %4591 = vmatpush1.bf16.msra.mxu0 %v3212
        %4592 = vmatprep.subr.bf16.mxu0 0
        %4593 = vmatpush1.bf16.msra.mxu0 %v3213
        %4594 = vmatprep.subr.bf16.mxu0 0
        %4595 = vmatpush1.bf16.msra.mxu0 %v3214
        %4596 = vmatprep.subr.bf16.mxu0 0
        %4597 = vmatpush1.bf16.msra.mxu0 %v3215
        %4598 = vmatprep.subr.bf16.mxu0 0
        %4599 = vmatpush1.bf16.msra.mxu0 %v3216
        %4600 = vmatprep.subr.bf16.mxu0 0
        %4601 = vmatpush1.bf16.msra.mxu0 %v3217
        %4602 = vmatprep.subr.bf16.mxu0 0
        %4603 = vmatpush1.bf16.msra.mxu0 %v3218
        %4604 = vmatprep.subr.bf16.mxu0 0
        %4605 = vmatpush1.bf16.msra.mxu0 %v3219
        %4606 = vmatprep.subr.bf16.mxu0 0
        %4607 = vmatpush1.bf16.msra.mxu0 %v3220
        %4608 = vmatprep.subr.bf16.mxu0 0
        %4609 = vmatpush1.bf16.msra.mxu0 %v3221
        %4610 = vmatprep.subr.bf16.mxu0 0
        %4611 = vmatpush1.bf16.msra.mxu0 %v3222
        %4612 = vmatprep.subr.bf16.mxu0 0
        %4613 = vmatpush1.bf16.msra.mxu0 %v3223
        %4614 = vmatprep.subr.bf16.mxu0 0
        %4615 = vmatpush1.bf16.msra.mxu0 %v3224
        %4616 = vmatprep.subr.bf16.mxu0 0
        %4617 = vmatpush1.bf16.msra.mxu0 %v3225
        %4618 = vmatprep.mubr.bf16.mxu0 %v1175
        %4619 = vmatmul.mubr.bf16.gmra.mrb[0].mxu0 %v1174
        %v4620 = vpop.f32.mrb[0].mxu0
        %v4621 = vadd.f32 %v4581, %v4620
        %v4622 = vpop.f32.mrb[0].mxu0
        %v4623 = vpop.f32.mrb[0].mxu0
        %v4624 = vpop.f32.mrb[0].mxu0
        %4625 = vdwg.mxu0
        %v4626 = vadd.f32 %v225, %v4621
        %vm4627 = vcmask 15360
        %4628 = vst.msk [vmem:[#allocation2] sm:$0xff] %vm4627, %v4626
        %p4629 = scmp.eq.s32.totalorder %s22, 7
        // Predicated region
        $region37: #{tpu_custom_call.1} parent=31 // pred_check
          %p4630 = pneg %p4629
        $region38: #{tpu_custom_call.1} parent=31 // pred_check_branch
          %4632 = sbr.rel (%p4630) target = $region40
        $region39: #{tpu_custom_call.1} parent=31 // pred_region
          %v4633 = vld [vmem:[#allocation2] sm:$0xff]
          %v4634 = vsel %vm4627, %v4633, 0.0
          %v4635 = vrot.slane %v4634, 4
          %v4636 = vadd.f32 %v4634, %v4635
          %v4637 = vrot.slane %v4636, 2
          %v4638 = vadd.f32 %v4636, %v4637
          %v4639 = vrot.slane %v4638, 1
          %v4640 = vadd.f32 %v4638, %v4639
          %v4641 = vrcp.pop 8.0
          %v4642 = vmul.f32 %v4640, %v4641
          %v4643 = vld [vmem:[%s2] sm:$0x1]
          %v4644 = vadd.f32 %v4642, %v4643
          %vm4645 = vcmask 8192
          %4646 = vst.msk [vmem:[%s201] sm:$0x1] %vm4645, %v4644
        $region40: #{tpu_custom_call.1} parent=31 // pred_fallthru
          _
        %s4647 = sand.u32 %s112, 1
        %s4648 = scalar_lea.sflag [#allocation4], %s4647
        %s4649 = sand.u32 %s112, 1
        %s4650 = scalar_lea.vmem [#allocation3], %s4649
        // Predicated region
        $region41: #{tpu_custom_call.1} parent=31 // pred_check
          %p4651 = pneg %p122
        $region42: #{tpu_custom_call.1} parent=31 // pred_check_branch
          %4653 = sbr.rel (%p4651) target = $region44
        $region43: #{tpu_custom_call.1} parent=31 // pred_region
          %s4655 = ssub.s32 16, 16
          %4656 = vsyncadd %s4648, %s4655
          %s4657 = smul.addr %s21, 16
          %s4658 = scalar_lea.hbm %s3, %s4657
          %s4660 = sshll.u32 %s4650, 4
          %s4661 = int_to_ptr.vmem [resolvable:$true] %s4660
          %4663 = dma.vmem_to_hbm [thread:$0]  %s4661, 16, %s4658, %s4648
        $region44: #{tpu_custom_call.1} parent=31 // pred_fallthru
          _
      $region32: #{tpu_custom_call.1} parent=5 // pred_fallthru
        _
      %p4664 = scmp.le.s32.totalorder 2, %s12
      // Predicated region
      $region45: #{tpu_custom_call.1} parent=5 // pred_check
        %p4665 = pneg %p4664
      $region46: #{tpu_custom_call.1} parent=5 // pred_check_branch
        %4667 = sbr.rel (%p4665) target = $region48
      $region47: #{tpu_custom_call.1} parent=5 // pred_region
        %s4668 = ssub.s32 %s12, 2
        // Predicated region
        $region49: #{tpu_custom_call.1} parent=47 // pred_check
          %p4669 = pneg %p128
        $region50: #{tpu_custom_call.1} parent=47 // pred_check_branch
          %4671 = sbr.rel (%p4669) target = $region52
        $region51: #{tpu_custom_call.1} parent=47 // pred_region
          %s4672 = sand.u32 %s113, 1
          %s4673 = scalar_lea.sflag [#allocation4], %s4672
          %s4674 = sand.u32 %s113, 1
          %s4675 = scalar_lea.vmem [#allocation3], %s4674
          %4676 = dma.done %s4673, 16
        $region52: #{tpu_custom_call.1} parent=47 // pred_fallthru
          _
      $region48: #{tpu_custom_call.1} parent=5 // pred_fallthru
        _
    $region6: #{tpu_custom_call.1} parent=1 // loop_footer
      %s16 = sadd.s32 1, %s12
    $region7: #{tpu_custom_call.1} parent=1 // loop_footer_branch
      %11 = sbr.rel target = $region3
    $region8: #{tpu_custom_call.1} parent=1 // loop_exit
      _
    %4677 = vsyncpa [#allocation4], 1
    %s4678 = scalar_lea.sflag [#allocation4], 1
    %4679 = vsyncpa %s4678, 1

</llo_original>
